<compile_context>
chip_gen: v6e
topology: v6e:2x2x1
jax: 0.10.0
libtpu: 0.0.40
codegen_flags: <defaults>
</compile_context>

<pallas_src>
import math
import functools

import jax
import jax.numpy as jnp
from jax.experimental import pallas as pl
from jax.experimental.pallas import tpu as pltpu

_VMEM = pl.BlockSpec(memory_space=pltpu.MemorySpace.VMEM)

_NP = 128          # lane-padded conv output channels (lane-dense stores)
_TM_DEFAULT = 512  # M-row tile; v6e/v5e could sweep up to 1024, v7x keep <=512


def _round_up(n, m):
    return ((n + m - 1) // m) * m


# ----------------------------------------------------------------------------
# Pallas kernel 1: conv-as-matmul (im2col patches @ weights + bias, ReLU).
# Grid = (encoder, M-tile), both parallel.  bf16 operands, f32 accumulate,
# lane-dense bf16 output (N = 128).
# ----------------------------------------------------------------------------
def _conv_mm_kernel(x_ref, w_ref, b_ref, o_ref):
    acc = jnp.dot(x_ref[...], w_ref[...], preferred_element_type=jnp.float32)
    acc = jnp.maximum(acc + b_ref[...], 0.0)
    o_ref[...] = acc.astype(o_ref.dtype)


def _im2col_nhwc(x, k, s):
    # x: (E, B, H, W, C) -> (E, B, Ho, Wo, k*k*C); feature order (ki, kj, c)
    H, W = x.shape[2], x.shape[3]
    Ho = (H - k) // s + 1
    Wo = (W - k) // s + 1
    cols = []
    for ki in range(k):
        for kj in range(k):
            cols.append(x[:, :, ki:ki + s * Ho:s, kj:kj + s * Wo:s, :])
    return jnp.concatenate(cols, axis=-1), Ho, Wo


def conv_layer(x, w, b, k, s, cout, tm=_TM_DEFAULT):
    """One Conv2d+ReLU for both encoders.

    x: (2, B, H, W, Cin) bf16   w: (2, k*k*Cin, 128) bf16   b: (2, 1, 128) f32
    returns (2, B, Ho, Wo, cout) bf16
    """
    E, B = x.shape[0], x.shape[1]
    patches, Ho, Wo = _im2col_nhwc(x, k, s)
    K = patches.shape[-1]
    M = B * Ho * Wo
    patches = patches.reshape(E, M, K)

    TM = min(tm, _round_up(M, 16))          # 16: bf16 sublane packing
    Mp = _round_up(M, TM)
    if Mp != M:
        patches = jnp.pad(patches, ((0, 0), (0, Mp - M), (0, 0)))

    out = pl.pallas_call(
        _conv_mm_kernel,
        out_shape=jax.ShapeDtypeStruct((E, Mp, _NP), jnp.bfloat16),
        grid=(E, Mp // TM),
        in_specs=[
            pl.BlockSpec((None, TM, K), lambda e, m: (e, m, 0)),
            pl.BlockSpec((None, K, _NP), lambda e, m: (e, 0, 0)),
            pl.BlockSpec((None, 1, _NP), lambda e, m: (e, 0, 0)),
        ],
        out_specs=pl.BlockSpec((None, TM, _NP), lambda e, m: (e, m, 0)),
        compiler_params=pltpu.CompilerParams(
            dimension_semantics=("parallel", "parallel"),
            vmem_limit_bytes=32 * 1024 * 1024,
        ),
    )(patches, w, b)

    # Slice off M padding + channel padding (fuses into the next im2col/reshape).
    return out[:, :M, :cout].reshape(E, B, Ho, Wo, cout)


# ----------------------------------------------------------------------------
# Pallas kernel 2: fused tail
#   proj1 + proj2 + MLPBase + token stack + 2x TransformerEncoderLayer + flatten
# ----------------------------------------------------------------------------
def _layernorm(x, g, b, eps=1e-5):
    mu = jnp.mean(x, axis=-1, keepdims=True)
    xc = x - mu
    var = jnp.mean(xc * xc, axis=-1, keepdims=True)
    return xc * jax.lax.rsqrt(var + eps) * g + b


def _tail_kernel(*refs, B, F, n_mlp, n_layers):
    f1_ref, f2_ref, st_ref, p1w, p1b, p2w, p2b = refs[:7]
    pos = 7
    mlp_refs = refs[pos:pos + 2 * n_mlp]
    pos += 2 * n_mlp
    layer_refs = refs[pos:pos + 12 * n_layers]
    pos += 12 * n_layers
    o_ref = refs[pos]

    def lin(z, w_r, b_r):
        return jnp.dot(z, w_r[...], preferred_element_type=jnp.float32) + b_r[...]

    # RLProjection (Linear + ReLU) on each visual stream.
    v1 = jnp.maximum(lin(f1_ref[...], p1w, p1b), 0.0)        # (B, F) f32
    v2 = jnp.maximum(lin(f2_ref[...], p2w, p2b), 0.0)

    # MLPBase on the proprioceptive state.
    s = st_ref[...]
    for i in range(n_mlp):
        s = jnp.maximum(lin(s, mlp_refs[2 * i], mlp_refs[2 * i + 1]), 0.0)

    # Sequence layout (S=3, B, F) flattened to rows: row = t*B + b.
    X = jnp.concatenate([v1, v2, s], axis=0)                 # (3B, F)
    scale = 1.0 / math.sqrt(F)                               # nhead=1 -> head_dim=F

    for l in range(n_layers):
        (wqkv, bqkv, wo, bo, g1, be1, w1, b1f, w2, b2f, g2, be2) = \
            layer_refs[12 * l:12 * (l + 1)]

        # Fused QKV projection: one (F, 3F) matmul.
        qkv = lin(X, wqkv, bqkv)                             # (3B, 3F)
        q, k, v = qkv[:, :F], qkv[:, F:2 * F], qkv[:, 2 * F:]
        qs = [q[t * B:(t + 1) * B, :] for t in range(3)]
        ks = [k[t * B:(t + 1) * B, :] for t in range(3)]
        vs = [v[t * B:(t + 1) * B, :] for t in range(3)]

        # S=3 attention with explicit per-token ops (no batched einsum / 3-D tensors).
        outs = []
        for t in range(3):
            sc = [jnp.sum(qs[t] * ks[u], axis=-1, keepdims=True) * scale
                  for u in range(3)]                          # each (B, 1)
            m = jnp.maximum(jnp.maximum(sc[0], sc[1]), sc[2])
            ex = [jnp.exp(su - m) for su in sc]
            inv = pl.reciprocal(ex[0] + ex[1] + ex[2], approx=True)
            outs.append((ex[0] * inv) * vs[0]
                        + (ex[1] * inv) * vs[1]
                        + (ex[2] * inv) * vs[2])
        A = jnp.concatenate(outs, axis=0)                     # (3B, F)
        A = lin(A, wo, bo)

        # Post-norm transformer block (dropout = 0).
        Y = _layernorm(X + A, g1[...], be1[...])
        H = jnp.maximum(lin(Y, w1, b1f), 0.0)
        X = _layernorm(Y + lin(H, w2, b2f), g2[...], be2[...])

    # permute(1,0,2).reshape(B, 3F): out[b] = [token0[b], token1[b], token2[b]]
    o_ref[...] = jnp.concatenate([X[t * B:(t + 1) * B, :] for t in range(3)],
                                 axis=1)


def tail_forward(f1, f2, state, params, B, F):
    args = [f1, f2, state,
            params['proj1_w'], params['proj1_b'],
            params['proj2_w'], params['proj2_b']]
    for (w, b) in params['mlp']:
        args += [w, b]
    for lp in params['trans']:
        args += [lp['wqkv'], lp['bqkv'], lp['wo'], lp['bo'],
                 lp['ln1_g'], lp['ln1_b'], lp['w1'], lp['b1'],
                 lp['w2'], lp['b2'], lp['ln2_g'], lp['ln2_b']]
    kernel = functools.partial(_tail_kernel, B=B, F=F,
                               n_mlp=len(params['mlp']),
                               n_layers=len(params['trans']))
    return pl.pallas_call(
        kernel,
        out_shape=jax.ShapeDtypeStruct((B, 3 * F), jnp.float32),
        in_specs=[_VMEM] * len(args),
        out_specs=_VMEM,
    )(*args)


# ----------------------------------------------------------------------------
# Full NatureAttEncoder forward
# ----------------------------------------------------------------------------
def nature_att_encoder_forward(x, params, cfg):
    state_dim = cfg['state_dim']
    C = cfg['in_channels']
    F = cfg['hidden_dims'][-1]
    hw = int(math.sqrt(cfg['visual_dim'] // C))

    state_x = x[..., :state_dim]
    visual_x = x[..., state_dim:].reshape(-1, 2 * C, hw, hw)     # NCHW, chunked on C
    B = visual_x.shape[0]

    # Single NCHW->NHWC relayout per stream, then NHWC end-to-end; stack the two
    # visual streams on a leading "encoder" axis so both run in the same kernels.
    v_first = visual_x[:, :C].transpose(0, 2, 3, 1)
    v_second = visual_x[:, C:].transpose(0, 2, 3, 1)
    xe = jnp.stack([v_first, v_second], axis=0).astype(jnp.bfloat16)  # (2,B,H,W,C)

    # NatureEncoder conv stack (shared structure, per-encoder weights).
    y = conv_layer(xe, params['c1_w'], params['c1_b'], k=8, s=4, cout=32)
    y = conv_layer(y, params['c2_w'], params['c2_b'], k=4, s=2, cout=64)
    y = conv_layer(y, params['c3_w'], params['c3_b'], k=3, s=1, cout=64)
    feats = y.reshape(2, B, -1)                                  # (2, B, 1024) bf16

    # Fused tail: projections + state MLP + 2x transformer layer + flatten.
    return tail_forward(feats[0], feats[1],
                        state_x.reshape(B, state_dim).astype(jnp.float32),
                        params, B, F)


# ----------------------------------------------------------------------------
# Deterministic synthetic parameter init (stand-in for orthogonal_init)
# ----------------------------------------------------------------------------
def init_params(key, cfg):
    C = cfg['in_channels']
    F = cfg['hidden_dims'][-1]
    keys = iter(jax.random.split(key, 128))

    def nrm(shape, scale=0.05, dtype=jnp.float32):
        v = scale * jax.random.normal(next(keys), shape, dtype=jnp.float32)
        return v.astype(dtype)

    def conv_wb(k, cin, cout):
        # Both encoders stacked; HWIO-flattened weight, zero-padded to 128 lanes.
        w = nrm((2, k * k * cin, cout), dtype=jnp.bfloat16)
        w = jnp.pad(w, ((0, 0), (0, 0), (0, _NP - cout)))
        b = jnp.pad(nrm((2, 1, cout)), ((0, 0), (0, 0), (0, _NP - cout)))
        return w, b

    params = {}
    params['c1_w'], params['c1_b'] = conv_wb(8, C, 32)
    params['c2_w'], params['c2_b'] = conv_wb(4, 32, 64)
    params['c3_w'], params['c3_b'] = conv_wb(3, 64, 64)

    params['proj1_w'] = nrm((1024, F), dtype=jnp.bfloat16)
    params['proj1_b'] = nrm((1, F))
    params['proj2_w'] = nrm((1024, F), dtype=jnp.bfloat16)
    params['proj2_b'] = nrm((1, F))

    mlp, d = [], cfg['state_dim']
    for hdim in cfg['hidden_dims']:
        mlp.append((nrm((d, hdim)), nrm((1, hdim))))
        d = hdim
    params['mlp'] = mlp

    trans = []
    for _ in range(2):
        trans.append(dict(
            wqkv=nrm((F, 3 * F)), bqkv=nrm((1, 3 * F)),
            wo=nrm((F, F)), bo=nrm((1, F)),
            ln1_g=jnp.ones((1, F), jnp.float32), ln1_b=jnp.zeros((1, F), jnp.float32),
            w1=nrm((F, F)), b1=nrm((1, F)),
            w2=nrm((F, F)), b2=nrm((1, F)),
            ln2_g=jnp.ones((1, F), jnp.float32), ln2_b=jnp.zeros((1, F), jnp.float32)))
    params['trans'] = trans
    return params


if __name__ == "__main__":
    # 64x64 images so the Nature conv stack yields output_dim = 64*4*4 = 1024.
    cfg = dict(in_channels=3, visual_dim=3 * 64 * 64, state_dim=16, hidden_dims=[64])
    B = 2

    key = jax.random.PRNGKey(0)
    k_par, k_in = jax.random.split(key)
    params = init_params(k_par, cfg)

    x = jax.random.normal(
        k_in, (B, cfg['state_dim'] + 2 * cfg['visual_dim']), dtype=jnp.float32)

    fwd = jax.jit(functools.partial(nature_att_encoder_forward, cfg=cfg))
    out = fwd(x, params)
    jax.block_until_ready(out)

    assert out.shape == (B, 3 * cfg['hidden_dims'][-1]), out.shape
    assert bool(jnp.all(jnp.isfinite(out)))
    print("KERNEL_OK")
</pallas_src>

<mosaic_0001>
module attributes {stable_mosaic.version = 11 : i64} {
  func.func @_conv_mm_kernel(%arg0: i32, %arg1: i32, %arg2: memref<1x464x192xbf16, #tpu.memory_space<vmem>>, %arg3: memref<1x192x128xbf16, #tpu.memory_space<vmem>>, %arg4: memref<1x1x128xf32, #tpu.memory_space<vmem>>, %arg5: memref<1x464x128xbf16, #tpu.memory_space<vmem>>) attributes {dimension_semantics = [#tpu.dimension_semantics<parallel>, #tpu.dimension_semantics<parallel>], iteration_bounds = array<i64: 2, 1>, scalar_prefetch = 0 : i64, scratch_operands = 0 : i64, tpu.core_type = #tpu.core_type<tc>, window_params = [{transform_indices = @transform_0, window_bounds = array<i64: 1, 464, 192>}, {transform_indices = @transform_1, window_bounds = array<i64: 1, 192, 128>}, {transform_indices = @transform_2, window_bounds = array<i64: 1, 1, 128>}, {transform_indices = @transform_3, window_bounds = array<i64: 1, 464, 128>}]} {
    %c0 = arith.constant 0 : index
    %c0_0 = arith.constant 0 : index
    %c0_1 = arith.constant 0 : index
    %0 = vector.load %arg2[%c0, %c0_0, %c0_1] : memref<1x464x192xbf16, #tpu.memory_space<vmem>>, vector<1x464x192xbf16>
    %1 = vector.shape_cast %0 : vector<1x464x192xbf16> to vector<464x192xbf16>
    %c0_2 = arith.constant 0 : index
    %c0_3 = arith.constant 0 : index
    %c0_4 = arith.constant 0 : index
    %2 = vector.load %arg3[%c0_2, %c0_3, %c0_4] : memref<1x192x128xbf16, #tpu.memory_space<vmem>>, vector<1x192x128xbf16>
    %3 = vector.shape_cast %2 : vector<1x192x128xbf16> to vector<192x128xbf16>
    %cst = arith.constant dense<0.000000e+00> : vector<464x128xf32>
    %4 = tpu.matmul %1, %3, %cst {dimension_numbers = #tpu.dot_dimension_numbers<[1], [0], [0], [1], [0, 0, 1, 1], [], []>} : vector<464x192xbf16>, vector<192x128xbf16>, vector<464x128xf32> -> vector<464x128xf32>
    %c0_5 = arith.constant 0 : index
    %c0_6 = arith.constant 0 : index
    %c0_7 = arith.constant 0 : index
    %5 = vector.load %arg4[%c0_5, %c0_6, %c0_7] : memref<1x1x128xf32, #tpu.memory_space<vmem>>, vector<1x1x128xf32>
    %6 = vector.shape_cast %5 : vector<1x1x128xf32> to vector<1x128xf32>
    %7 = vector.broadcast %6 : vector<1x128xf32> to vector<464x128xf32>
    %8 = arith.addf %4, %7 : vector<464x128xf32>
    %cst_8 = arith.constant 0.000000e+00 : f32
    %9 = vector.broadcast %cst_8 : f32 to vector<464x128xf32>
    %10 = arith.maximumf %8, %9 : vector<464x128xf32>
    %11 = arith.truncf %10 : vector<464x128xf32> to vector<464x128xbf16>
    %c0_9 = arith.constant 0 : index
    %c0_10 = arith.constant 0 : index
    %c0_11 = arith.constant 0 : index
    %12 = vector.load %arg5[%c0_9, %c0_10, %c0_11] : memref<1x464x128xbf16, #tpu.memory_space<vmem>>, vector<1x464x128xbf16>
    %13 = vector.shape_cast %12 : vector<1x464x128xbf16> to vector<464x128xbf16>
    %14 = vector.shape_cast %11 : vector<464x128xbf16> to vector<1x464x128xbf16>
    tpu.vector_store %arg5[%c0_9, %c0_10, %c0_11], %14 {strides = array<i32>} : memref<1x464x128xbf16, #tpu.memory_space<vmem>>, vector<1x464x128xbf16>,
    return
  }
  func.func @transform_0(%arg0: i32, %arg1: i32) -> (i32, i32, i32) {
    %c0_i32 = arith.constant 0 : i32
    %c0_i32_0 = arith.constant 0 : i32
    return %arg0, %arg1, %c0_i32 : i32, i32, i32
  }
  func.func @transform_1(%arg0: i32, %arg1: i32) -> (i32, i32, i32) {
    %c0_i32 = arith.constant 0 : i32
    %c0_i32_0 = arith.constant 0 : i32
    %c0_i32_1 = arith.constant 0 : i32
    return %arg0, %c0_i32, %c0_i32_0 : i32, i32, i32
  }
  func.func @transform_2(%arg0: i32, %arg1: i32) -> (i32, i32, i32) {
    %c0_i32 = arith.constant 0 : i32
    %c0_i32_0 = arith.constant 0 : i32
    %c0_i32_1 = arith.constant 0 : i32
    return %arg0, %c0_i32, %c0_i32_0 : i32, i32, i32
  }
  func.func @transform_3(%arg0: i32, %arg1: i32) -> (i32, i32, i32) {
    %c0_i32 = arith.constant 0 : i32
    %c0_i32_0 = arith.constant 0 : i32
    return %arg0, %arg1, %c0_i32 : i32, i32, i32
  }
}

module attributes {stable_mosaic.version = 11 : i64} {
  func.func @_conv_mm_kernel(%arg0: i32, %arg1: i32, %arg2: memref<1x80x512xbf16, #tpu.memory_space<vmem>>, %arg3: memref<1x512x128xbf16, #tpu.memory_space<vmem>>, %arg4: memref<1x1x128xf32, #tpu.memory_space<vmem>>, %arg5: memref<1x80x128xbf16, #tpu.memory_space<vmem>>) attributes {dimension_semantics = [#tpu.dimension_semantics<parallel>, #tpu.dimension_semantics<parallel>], iteration_bounds = array<i64: 2, 1>, scalar_prefetch = 0 : i64, scratch_operands = 0 : i64, tpu.core_type = #tpu.core_type<tc>, window_params = [{transform_indices = @transform_0, window_bounds = array<i64: 1, 80, 512>}, {transform_indices = @transform_1, window_bounds = array<i64: 1, 512, 128>}, {transform_indices = @transform_2, window_bounds = array<i64: 1, 1, 128>}, {transform_indices = @transform_3, window_bounds = array<i64: 1, 80, 128>}]} {
    %c0 = arith.constant 0 : index
    %c0_0 = arith.constant 0 : index
    %c0_1 = arith.constant 0 : index
    %0 = vector.load %arg2[%c0, %c0_0, %c0_1] : memref<1x80x512xbf16, #tpu.memory_space<vmem>>, vector<1x80x512xbf16>
    %1 = vector.shape_cast %0 : vector<1x80x512xbf16> to vector<80x512xbf16>
    %c0_2 = arith.constant 0 : index
    %c0_3 = arith.constant 0 : index
    %c0_4 = arith.constant 0 : index
    %2 = vector.load %arg3[%c0_2, %c0_3, %c0_4] : memref<1x512x128xbf16, #tpu.memory_space<vmem>>, vector<1x512x128xbf16>
    %3 = vector.shape_cast %2 : vector<1x512x128xbf16> to vector<512x128xbf16>
    %cst = arith.constant dense<0.000000e+00> : vector<80x128xf32>
    %4 = tpu.matmul %1, %3, %cst {dimension_numbers = #tpu.dot_dimension_numbers<[1], [0], [0], [1], [0, 0, 1, 1], [], []>} : vector<80x512xbf16>, vector<512x128xbf16>, vector<80x128xf32> -> vector<80x128xf32>
    %c0_5 = arith.constant 0 : index
    %c0_6 = arith.constant 0 : index
    %c0_7 = arith.constant 0 : index
    %5 = vector.load %arg4[%c0_5, %c0_6, %c0_7] : memref<1x1x128xf32, #tpu.memory_space<vmem>>, vector<1x1x128xf32>
    %6 = vector.shape_cast %5 : vector<1x1x128xf32> to vector<1x128xf32>
    %7 = vector.broadcast %6 : vector<1x128xf32> to vector<80x128xf32>
    %8 = arith.addf %4, %7 : vector<80x128xf32>
    %cst_8 = arith.constant 0.000000e+00 : f32
    %9 = vector.broadcast %cst_8 : f32 to vector<80x128xf32>
    %10 = arith.maximumf %8, %9 : vector<80x128xf32>
    %11 = arith.truncf %10 : vector<80x128xf32> to vector<80x128xbf16>
    %c0_9 = arith.constant 0 : index
    %c0_10 = arith.constant 0 : index
    %c0_11 = arith.constant 0 : index
    %12 = vector.load %arg5[%c0_9, %c0_10, %c0_11] : memref<1x80x128xbf16, #tpu.memory_space<vmem>>, vector<1x80x128xbf16>
    %13 = vector.shape_cast %12 : vector<1x80x128xbf16> to vector<80x128xbf16>
    %14 = vector.shape_cast %11 : vector<80x128xbf16> to vector<1x80x128xbf16>
    tpu.vector_store %arg5[%c0_9, %c0_10, %c0_11], %14 {strides = array<i32>} : memref<1x80x128xbf16, #tpu.memory_space<vmem>>, vector<1x80x128xbf16>,
    return
  }
  func.func @transform_0(%arg0: i32, %arg1: i32) -> (i32, i32, i32) {
    %c0_i32 = arith.constant 0 : i32
    %c0_i32_0 = arith.constant 0 : i32
    return %arg0, %arg1, %c0_i32 : i32, i32, i32
  }
  func.func @transform_1(%arg0: i32, %arg1: i32) -> (i32, i32, i32) {
    %c0_i32 = arith.constant 0 : i32
    %c0_i32_0 = arith.constant 0 : i32
    %c0_i32_1 = arith.constant 0 : i32
    return %arg0, %c0_i32, %c0_i32_0 : i32, i32, i32
  }
  func.func @transform_2(%arg0: i32, %arg1: i32) -> (i32, i32, i32) {
    %c0_i32 = arith.constant 0 : i32
    %c0_i32_0 = arith.constant 0 : i32
    %c0_i32_1 = arith.constant 0 : i32
    return %arg0, %c0_i32, %c0_i32_0 : i32, i32, i32
  }
  func.func @transform_3(%arg0: i32, %arg1: i32) -> (i32, i32, i32) {
    %c0_i32 = arith.constant 0 : i32
    %c0_i32_0 = arith.constant 0 : i32
    return %arg0, %arg1, %c0_i32 : i32, i32, i32
  }
}

module attributes {stable_mosaic.version = 11 : i64} {
  func.func @_conv_mm_kernel(%arg0: i32, %arg1: i32, %arg2: memref<1x32x576xbf16, #tpu.memory_space<vmem>>, %arg3: memref<1x576x128xbf16, #tpu.memory_space<vmem>>, %arg4: memref<1x1x128xf32, #tpu.memory_space<vmem>>, %arg5: memref<1x32x128xbf16, #tpu.memory_space<vmem>>) attributes {dimension_semantics = [#tpu.dimension_semantics<parallel>, #tpu.dimension_semantics<parallel>], iteration_bounds = array<i64: 2, 1>, scalar_prefetch = 0 : i64, scratch_operands = 0 : i64, tpu.core_type = #tpu.core_type<tc>, window_params = [{transform_indices = @transform_0, window_bounds = array<i64: 1, 32, 576>}, {transform_indices = @transform_1, window_bounds = array<i64: 1, 576, 128>}, {transform_indices = @transform_2, window_bounds = array<i64: 1, 1, 128>}, {transform_indices = @transform_3, window_bounds = array<i64: 1, 32, 128>}]} {
    %c0 = arith.constant 0 : index
    %c0_0 = arith.constant 0 : index
    %c0_1 = arith.constant 0 : index
    %0 = vector.load %arg2[%c0, %c0_0, %c0_1] : memref<1x32x576xbf16, #tpu.memory_space<vmem>>, vector<1x32x576xbf16>
    %1 = vector.shape_cast %0 : vector<1x32x576xbf16> to vector<32x576xbf16>
    %c0_2 = arith.constant 0 : index
    %c0_3 = arith.constant 0 : index
    %c0_4 = arith.constant 0 : index
    %2 = vector.load %arg3[%c0_2, %c0_3, %c0_4] : memref<1x576x128xbf16, #tpu.memory_space<vmem>>, vector<1x576x128xbf16>
    %3 = vector.shape_cast %2 : vector<1x576x128xbf16> to vector<576x128xbf16>
    %cst = arith.constant dense<0.000000e+00> : vector<32x128xf32>
    %4 = tpu.matmul %1, %3, %cst {dimension_numbers = #tpu.dot_dimension_numbers<[1], [0], [0], [1], [0, 0, 1, 1], [], []>} : vector<32x576xbf16>, vector<576x128xbf16>, vector<32x128xf32> -> vector<32x128xf32>
    %c0_5 = arith.constant 0 : index
    %c0_6 = arith.constant 0 : index
    %c0_7 = arith.constant 0 : index
    %5 = vector.load %arg4[%c0_5, %c0_6, %c0_7] : memref<1x1x128xf32, #tpu.memory_space<vmem>>, vector<1x1x128xf32>
    %6 = vector.shape_cast %5 : vector<1x1x128xf32> to vector<1x128xf32>
    %7 = vector.broadcast %6 : vector<1x128xf32> to vector<32x128xf32>
    %8 = arith.addf %4, %7 : vector<32x128xf32>
    %cst_8 = arith.constant 0.000000e+00 : f32
    %9 = vector.broadcast %cst_8 : f32 to vector<32x128xf32>
    %10 = arith.maximumf %8, %9 : vector<32x128xf32>
    %11 = arith.truncf %10 : vector<32x128xf32> to vector<32x128xbf16>
    %c0_9 = arith.constant 0 : index
    %c0_10 = arith.constant 0 : index
    %c0_11 = arith.constant 0 : index
    %12 = vector.load %arg5[%c0_9, %c0_10, %c0_11] : memref<1x32x128xbf16, #tpu.memory_space<vmem>>, vector<1x32x128xbf16>
    %13 = vector.shape_cast %12 : vector<1x32x128xbf16> to vector<32x128xbf16>
    %14 = vector.shape_cast %11 : vector<32x128xbf16> to vector<1x32x128xbf16>
    tpu.vector_store %arg5[%c0_9, %c0_10, %c0_11], %14 {strides = array<i32>} : memref<1x32x128xbf16, #tpu.memory_space<vmem>>, vector<1x32x128xbf16>,
    return
  }
  func.func @transform_0(%arg0: i32, %arg1: i32) -> (i32, i32, i32) {
    %c0_i32 = arith.constant 0 : i32
    %c0_i32_0 = arith.constant 0 : i32
    return %arg0, %arg1, %c0_i32 : i32, i32, i32
  }
  func.func @transform_1(%arg0: i32, %arg1: i32) -> (i32, i32, i32) {
    %c0_i32 = arith.constant 0 : i32
    %c0_i32_0 = arith.constant 0 : i32
    %c0_i32_1 = arith.constant 0 : i32
    return %arg0, %c0_i32, %c0_i32_0 : i32, i32, i32
  }
  func.func @transform_2(%arg0: i32, %arg1: i32) -> (i32, i32, i32) {
    %c0_i32 = arith.constant 0 : i32
    %c0_i32_0 = arith.constant 0 : i32
    %c0_i32_1 = arith.constant 0 : i32
    return %arg0, %c0_i32, %c0_i32_0 : i32, i32, i32
  }
  func.func @transform_3(%arg0: i32, %arg1: i32) -> (i32, i32, i32) {
    %c0_i32 = arith.constant 0 : i32
    %c0_i32_0 = arith.constant 0 : i32
    return %arg0, %arg1, %c0_i32 : i32, i32, i32
  }
}

module attributes {stable_mosaic.version = 11 : i64} {
  func.func @_tail_kernel(%arg0: memref<2x1024xbf16, #tpu.memory_space<vmem>>, %arg1: memref<2x1024xbf16, #tpu.memory_space<vmem>>, %arg2: memref<2x16xf32, #tpu.memory_space<vmem>>, %arg3: memref<1024x64xbf16, #tpu.memory_space<vmem>>, %arg4: memref<1x64xf32, #tpu.memory_space<vmem>>, %arg5: memref<1024x64xbf16, #tpu.memory_space<vmem>>, %arg6: memref<1x64xf32, #tpu.memory_space<vmem>>, %arg7: memref<16x64xf32, #tpu.memory_space<vmem>>, %arg8: memref<1x64xf32, #tpu.memory_space<vmem>>, %arg9: memref<64x192xf32, #tpu.memory_space<vmem>>, %arg10: memref<1x192xf32, #tpu.memory_space<vmem>>, %arg11: memref<64x64xf32, #tpu.memory_space<vmem>>, %arg12: memref<1x64xf32, #tpu.memory_space<vmem>>, %arg13: memref<1x64xf32, #tpu.memory_space<vmem>>, %arg14: memref<1x64xf32, #tpu.memory_space<vmem>>, %arg15: memref<64x64xf32, #tpu.memory_space<vmem>>, %arg16: memref<1x64xf32, #tpu.memory_space<vmem>>, %arg17: memref<64x64xf32, #tpu.memory_space<vmem>>, %arg18: memref<1x64xf32, #tpu.memory_space<vmem>>, %arg19: memref<1x64xf32, #tpu.memory_space<vmem>>, %arg20: memref<1x64xf32, #tpu.memory_space<vmem>>, %arg21: memref<64x192xf32, #tpu.memory_space<vmem>>, %arg22: memref<1x192xf32, #tpu.memory_space<vmem>>, %arg23: memref<64x64xf32, #tpu.memory_space<vmem>>, %arg24: memref<1x64xf32, #tpu.memory_space<vmem>>, %arg25: memref<1x64xf32, #tpu.memory_space<vmem>>, %arg26: memref<1x64xf32, #tpu.memory_space<vmem>>, %arg27: memref<64x64xf32, #tpu.memory_space<vmem>>, %arg28: memref<1x64xf32, #tpu.memory_space<vmem>>, %arg29: memref<64x64xf32, #tpu.memory_space<vmem>>, %arg30: memref<1x64xf32, #tpu.memory_space<vmem>>, %arg31: memref<1x64xf32, #tpu.memory_space<vmem>>, %arg32: memref<1x64xf32, #tpu.memory_space<vmem>>, %arg33: memref<2x192xf32, #tpu.memory_space<vmem>>) attributes {dimension_semantics = [], scalar_prefetch = 0 : i64, scratch_operands = 0 : i64, tpu.core_type = #tpu.core_type<tc>} {
    %c0 = arith.constant 0 : index
    %c0_0 = arith.constant 0 : index
    %0 = vector.load %arg0[%c0, %c0_0] : memref<2x1024xbf16, #tpu.memory_space<vmem>>, vector<2x1024xbf16>
    %c0_1 = arith.constant 0 : index
    %c0_2 = arith.constant 0 : index
    %1 = vector.load %arg3[%c0_1, %c0_2] : memref<1024x64xbf16, #tpu.memory_space<vmem>>, vector<1024x64xbf16>
    %cst = arith.constant dense<0.000000e+00> : vector<2x64xf32>
    %2 = tpu.matmul %0, %1, %cst {dimension_numbers = #tpu.dot_dimension_numbers<[1], [0], [0], [1], [0, 0, 1, 1], [], []>} : vector<2x1024xbf16>, vector<1024x64xbf16>, vector<2x64xf32> -> vector<2x64xf32>
    %c0_3 = arith.constant 0 : index
    %c0_4 = arith.constant 0 : index
    %3 = vector.load %arg4[%c0_3, %c0_4] : memref<1x64xf32, #tpu.memory_space<vmem>>, vector<1x64xf32>
    %4 = vector.broadcast %3 : vector<1x64xf32> to vector<2x64xf32>
    %5 = arith.addf %2, %4 : vector<2x64xf32>
    %cst_5 = arith.constant 0.000000e+00 : f32
    %6 = vector.broadcast %cst_5 : f32 to vector<2x64xf32>
    %7 = arith.maximumf %5, %6 : vector<2x64xf32>
    %c0_6 = arith.constant 0 : index
    %c0_7 = arith.constant 0 : index
    %8 = vector.load %arg1[%c0_6, %c0_7] : memref<2x1024xbf16, #tpu.memory_space<vmem>>, vector<2x1024xbf16>
    %c0_8 = arith.constant 0 : index
    %c0_9 = arith.constant 0 : index
    %9 = vector.load %arg5[%c0_8, %c0_9] : memref<1024x64xbf16, #tpu.memory_space<vmem>>, vector<1024x64xbf16>
    %cst_10 = arith.constant dense<0.000000e+00> : vector<2x64xf32>
    %10 = tpu.matmul %8, %9, %cst_10 {dimension_numbers = #tpu.dot_dimension_numbers<[1], [0], [0], [1], [0, 0, 1, 1], [], []>} : vector<2x1024xbf16>, vector<1024x64xbf16>, vector<2x64xf32> -> vector<2x64xf32>
    %c0_11 = arith.constant 0 : index
    %c0_12 = arith.constant 0 : index
    %11 = vector.load %arg6[%c0_11, %c0_12] : memref<1x64xf32, #tpu.memory_space<vmem>>, vector<1x64xf32>
    %12 = vector.broadcast %11 : vector<1x64xf32> to vector<2x64xf32>
    %13 = arith.addf %10, %12 : vector<2x64xf32>
    %cst_13 = arith.constant 0.000000e+00 : f32
    %14 = vector.broadcast %cst_13 : f32 to vector<2x64xf32>
    %15 = arith.maximumf %13, %14 : vector<2x64xf32>
    %c0_14 = arith.constant 0 : index
    %c0_15 = arith.constant 0 : index
    %16 = vector.load %arg2[%c0_14, %c0_15] : memref<2x16xf32, #tpu.memory_space<vmem>>, vector<2x16xf32>
    %c0_16 = arith.constant 0 : index
    %c0_17 = arith.constant 0 : index
    %17 = vector.load %arg7[%c0_16, %c0_17] : memref<16x64xf32, #tpu.memory_space<vmem>>, vector<16x64xf32>
    %cst_18 = arith.constant dense<0.000000e+00> : vector<2x64xf32>
    %18 = tpu.matmul %16, %17, %cst_18 {dimension_numbers = #tpu.dot_dimension_numbers<[1], [0], [0], [1], [0, 0, 1, 1], [], []>} : vector<2x16xf32>, vector<16x64xf32>, vector<2x64xf32> -> vector<2x64xf32>
    %c0_19 = arith.constant 0 : index
    %c0_20 = arith.constant 0 : index
    %19 = vector.load %arg8[%c0_19, %c0_20] : memref<1x64xf32, #tpu.memory_space<vmem>>, vector<1x64xf32>
    %20 = vector.broadcast %19 : vector<1x64xf32> to vector<2x64xf32>
    %21 = arith.addf %18, %20 : vector<2x64xf32>
    %cst_21 = arith.constant 0.000000e+00 : f32
    %22 = vector.broadcast %cst_21 : f32 to vector<2x64xf32>
    %23 = arith.maximumf %21, %22 : vector<2x64xf32>
    %24 = tpu.concatenate %7, %15, %23 in 0 : vector<2x64xf32>, vector<2x64xf32>, vector<2x64xf32> -> vector<6x64xf32>
    %c0_22 = arith.constant 0 : index
    %c0_23 = arith.constant 0 : index
    %25 = vector.load %arg9[%c0_22, %c0_23] : memref<64x192xf32, #tpu.memory_space<vmem>>, vector<64x192xf32>
    %cst_24 = arith.constant dense<0.000000e+00> : vector<6x192xf32>
    %26 = tpu.matmul %24, %25, %cst_24 {dimension_numbers = #tpu.dot_dimension_numbers<[1], [0], [0], [1], [0, 0, 1, 1], [], []>} : vector<6x64xf32>, vector<64x192xf32>, vector<6x192xf32> -> vector<6x192xf32>
    %c0_25 = arith.constant 0 : index
    %c0_26 = arith.constant 0 : index
    %27 = vector.load %arg10[%c0_25, %c0_26] : memref<1x192xf32, #tpu.memory_space<vmem>>, vector<1x192xf32>
    %28 = vector.broadcast %27 : vector<1x192xf32> to vector<6x192xf32>
    %29 = arith.addf %26, %28 : vector<6x192xf32>
    %30 = vector.extract_strided_slice %29 {offsets = [0, 0], sizes = [6, 64], strides = [1, 1]} : vector<6x192xf32> to vector<6x64xf32>
    %31 = vector.extract_strided_slice %29 {offsets = [0, 64], sizes = [6, 64], strides = [1, 1]} : vector<6x192xf32> to vector<6x64xf32>
    %32 = vector.extract_strided_slice %29 {offsets = [0, 128], sizes = [6, 64], strides = [1, 1]} : vector<6x192xf32> to vector<6x64xf32>
    %33 = vector.extract_strided_slice %30 {offsets = [0, 0], sizes = [2, 64], strides = [1, 1]} : vector<6x64xf32> to vector<2x64xf32>
    %34 = vector.extract_strided_slice %30 {offsets = [2, 0], sizes = [2, 64], strides = [1, 1]} : vector<6x64xf32> to vector<2x64xf32>
    %35 = vector.extract_strided_slice %30 {offsets = [4, 0], sizes = [2, 64], strides = [1, 1]} : vector<6x64xf32> to vector<2x64xf32>
    %36 = vector.extract_strided_slice %31 {offsets = [0, 0], sizes = [2, 64], strides = [1, 1]} : vector<6x64xf32> to vector<2x64xf32>
    %37 = vector.extract_strided_slice %31 {offsets = [2, 0], sizes = [2, 64], strides = [1, 1]} : vector<6x64xf32> to vector<2x64xf32>
    %38 = vector.extract_strided_slice %31 {offsets = [4, 0], sizes = [2, 64], strides = [1, 1]} : vector<6x64xf32> to vector<2x64xf32>
    %39 = vector.extract_strided_slice %32 {offsets = [0, 0], sizes = [2, 64], strides = [1, 1]} : vector<6x64xf32> to vector<2x64xf32>
    %40 = vector.extract_strided_slice %32 {offsets = [2, 0], sizes = [2, 64], strides = [1, 1]} : vector<6x64xf32> to vector<2x64xf32>
    %41 = vector.extract_strided_slice %32 {offsets = [4, 0], sizes = [2, 64], strides = [1, 1]} : vector<6x64xf32> to vector<2x64xf32>
    %42 = arith.mulf %33, %36 : vector<2x64xf32>
    %cst_27 = arith.constant dense<0.000000e+00> : vector<2xf32>
    %43 = vector.multi_reduction <add>, %42, %cst_27 [1] : vector<2x64xf32> to vector<2xf32>
    %44 = vector.shape_cast %43 : vector<2xf32> to vector<2x1xf32>
    %cst_28 = arith.constant 1.250000e-01 : f32
    %45 = vector.broadcast %cst_28 : f32 to vector<2x1xf32>
    %46 = arith.mulf %44, %45 : vector<2x1xf32>
    %47 = arith.mulf %33, %37 : vector<2x64xf32>
    %cst_29 = arith.constant dense<0.000000e+00> : vector<2xf32>
    %48 = vector.multi_reduction <add>, %47, %cst_29 [1] : vector<2x64xf32> to vector<2xf32>
    %49 = vector.shape_cast %48 : vector<2xf32> to vector<2x1xf32>
    %cst_30 = arith.constant 1.250000e-01 : f32
    %50 = vector.broadcast %cst_30 : f32 to vector<2x1xf32>
    %51 = arith.mulf %49, %50 : vector<2x1xf32>
    %52 = arith.mulf %33, %38 : vector<2x64xf32>
    %cst_31 = arith.constant dense<0.000000e+00> : vector<2xf32>
    %53 = vector.multi_reduction <add>, %52, %cst_31 [1] : vector<2x64xf32> to vector<2xf32>
    %54 = vector.shape_cast %53 : vector<2xf32> to vector<2x1xf32>
    %cst_32 = arith.constant 1.250000e-01 : f32
    %55 = vector.broadcast %cst_32 : f32 to vector<2x1xf32>
    %56 = arith.mulf %54, %55 : vector<2x1xf32>
    %57 = arith.maximumf %46, %51 : vector<2x1xf32>
    %58 = arith.maximumf %57, %56 : vector<2x1xf32>
    %59 = arith.subf %46, %58 : vector<2x1xf32>
    %60 = math.exp %59 : vector<2x1xf32>
    %61 = arith.subf %51, %58 : vector<2x1xf32>
    %62 = math.exp %61 : vector<2x1xf32>
    %63 = arith.subf %56, %58 : vector<2x1xf32>
    %64 = math.exp %63 : vector<2x1xf32>
    %65 = arith.addf %60, %62 : vector<2x1xf32>
    %66 = arith.addf %65, %64 : vector<2x1xf32>
    %67 = tpu.reciprocal %66 {approx = true} : vector<2x1xf32> -> vector<2x1xf32>
    %68 = arith.mulf %60, %67 : vector<2x1xf32>
    %69 = vector.broadcast %68 : vector<2x1xf32> to vector<2x64xf32>
    %70 = arith.mulf %69, %39 : vector<2x64xf32>
    %71 = arith.mulf %62, %67 : vector<2x1xf32>
    %72 = vector.broadcast %71 : vector<2x1xf32> to vector<2x64xf32>
    %73 = arith.mulf %72, %40 : vector<2x64xf32>
    %74 = arith.addf %70, %73 : vector<2x64xf32>
    %75 = arith.mulf %64, %67 : vector<2x1xf32>
    %76 = vector.broadcast %75 : vector<2x1xf32> to vector<2x64xf32>
    %77 = arith.mulf %76, %41 : vector<2x64xf32>
    %78 = arith.addf %74, %77 : vector<2x64xf32>
    %79 = arith.mulf %34, %36 : vector<2x64xf32>
    %cst_33 = arith.constant dense<0.000000e+00> : vector<2xf32>
    %80 = vector.multi_reduction <add>, %79, %cst_33 [1] : vector<2x64xf32> to vector<2xf32>
    %81 = vector.shape_cast %80 : vector<2xf32> to vector<2x1xf32>
    %cst_34 = arith.constant 1.250000e-01 : f32
    %82 = vector.broadcast %cst_34 : f32 to vector<2x1xf32>
    %83 = arith.mulf %81, %82 : vector<2x1xf32>
    %84 = arith.mulf %34, %37 : vector<2x64xf32>
    %cst_35 = arith.constant dense<0.000000e+00> : vector<2xf32>
    %85 = vector.multi_reduction <add>, %84, %cst_35 [1] : vector<2x64xf32> to vector<2xf32>
    %86 = vector.shape_cast %85 : vector<2xf32> to vector<2x1xf32>
    %cst_36 = arith.constant 1.250000e-01 : f32
    %87 = vector.broadcast %cst_36 : f32 to vector<2x1xf32>
    %88 = arith.mulf %86, %87 : vector<2x1xf32>
    %89 = arith.mulf %34, %38 : vector<2x64xf32>
    %cst_37 = arith.constant dense<0.000000e+00> : vector<2xf32>
    %90 = vector.multi_reduction <add>, %89, %cst_37 [1] : vector<2x64xf32> to vector<2xf32>
    %91 = vector.shape_cast %90 : vector<2xf32> to vector<2x1xf32>
    %cst_38 = arith.constant 1.250000e-01 : f32
    %92 = vector.broadcast %cst_38 : f32 to vector<2x1xf32>
    %93 = arith.mulf %91, %92 : vector<2x1xf32>
    %94 = arith.maximumf %83, %88 : vector<2x1xf32>
    %95 = arith.maximumf %94, %93 : vector<2x1xf32>
    %96 = arith.subf %83, %95 : vector<2x1xf32>
    %97 = math.exp %96 : vector<2x1xf32>
    %98 = arith.subf %88, %95 : vector<2x1xf32>
    %99 = math.exp %98 : vector<2x1xf32>
    %100 = arith.subf %93, %95 : vector<2x1xf32>
    %101 = math.exp %100 : vector<2x1xf32>
    %102 = arith.addf %97, %99 : vector<2x1xf32>
    %103 = arith.addf %102, %101 : vector<2x1xf32>
    %104 = tpu.reciprocal %103 {approx = true} : vector<2x1xf32> -> vector<2x1xf32>
    %105 = arith.mulf %97, %104 : vector<2x1xf32>
    %106 = vector.broadcast %105 : vector<2x1xf32> to vector<2x64xf32>
    %107 = arith.mulf %106, %39 : vector<2x64xf32>
    %108 = arith.mulf %99, %104 : vector<2x1xf32>
    %109 = vector.broadcast %108 : vector<2x1xf32> to vector<2x64xf32>
    %110 = arith.mulf %109, %40 : vector<2x64xf32>
    %111 = arith.addf %107, %110 : vector<2x64xf32>
    %112 = arith.mulf %101, %104 : vector<2x1xf32>
    %113 = vector.broadcast %112 : vector<2x1xf32> to vector<2x64xf32>
    %114 = arith.mulf %113, %41 : vector<2x64xf32>
    %115 = arith.addf %111, %114 : vector<2x64xf32>
    %116 = arith.mulf %35, %36 : vector<2x64xf32>
    %cst_39 = arith.constant dense<0.000000e+00> : vector<2xf32>
    %117 = vector.multi_reduction <add>, %116, %cst_39 [1] : vector<2x64xf32> to vector<2xf32>
    %118 = vector.shape_cast %117 : vector<2xf32> to vector<2x1xf32>
    %cst_40 = arith.constant 1.250000e-01 : f32
    %119 = vector.broadcast %cst_40 : f32 to vector<2x1xf32>
    %120 = arith.mulf %118, %119 : vector<2x1xf32>
    %121 = arith.mulf %35, %37 : vector<2x64xf32>
    %cst_41 = arith.constant dense<0.000000e+00> : vector<2xf32>
    %122 = vector.multi_reduction <add>, %121, %cst_41 [1] : vector<2x64xf32> to vector<2xf32>
    %123 = vector.shape_cast %122 : vector<2xf32> to vector<2x1xf32>
    %cst_42 = arith.constant 1.250000e-01 : f32
    %124 = vector.broadcast %cst_42 : f32 to vector<2x1xf32>
    %125 = arith.mulf %123, %124 : vector<2x1xf32>
    %126 = arith.mulf %35, %38 : vector<2x64xf32>
    %cst_43 = arith.constant dense<0.000000e+00> : vector<2xf32>
    %127 = vector.multi_reduction <add>, %126, %cst_43 [1] : vector<2x64xf32> to vector<2xf32>
    %128 = vector.shape_cast %127 : vector<2xf32> to vector<2x1xf32>
    %cst_44 = arith.constant 1.250000e-01 : f32
    %129 = vector.broadcast %cst_44 : f32 to vector<2x1xf32>
    %130 = arith.mulf %128, %129 : vector<2x1xf32>
    %131 = arith.maximumf %120, %125 : vector<2x1xf32>
    %132 = arith.maximumf %131, %130 : vector<2x1xf32>
    %133 = arith.subf %120, %132 : vector<2x1xf32>
    %134 = math.exp %133 : vector<2x1xf32>
    %135 = arith.subf %125, %132 : vector<2x1xf32>
    %136 = math.exp %135 : vector<2x1xf32>
    %137 = arith.subf %130, %132 : vector<2x1xf32>
    %138 = math.exp %137 : vector<2x1xf32>
    %139 = arith.addf %134, %136 : vector<2x1xf32>
    %140 = arith.addf %139, %138 : vector<2x1xf32>
    %141 = tpu.reciprocal %140 {approx = true} : vector<2x1xf32> -> vector<2x1xf32>
    %142 = arith.mulf %134, %141 : vector<2x1xf32>
    %143 = vector.broadcast %142 : vector<2x1xf32> to vector<2x64xf32>
    %144 = arith.mulf %143, %39 : vector<2x64xf32>
    %145 = arith.mulf %136, %141 : vector<2x1xf32>
    %146 = vector.broadcast %145 : vector<2x1xf32> to vector<2x64xf32>
    %147 = arith.mulf %146, %40 : vector<2x64xf32>
    %148 = arith.addf %144, %147 : vector<2x64xf32>
    %149 = arith.mulf %138, %141 : vector<2x1xf32>
    %150 = vector.broadcast %149 : vector<2x1xf32> to vector<2x64xf32>
    %151 = arith.mulf %150, %41 : vector<2x64xf32>
    %152 = arith.addf %148, %151 : vector<2x64xf32>
    %153 = tpu.concatenate %78, %115, %152 in 0 : vector<2x64xf32>, vector<2x64xf32>, vector<2x64xf32> -> vector<6x64xf32>
    %c0_45 = arith.constant 0 : index
    %c0_46 = arith.constant 0 : index
    %154 = vector.load %arg11[%c0_45, %c0_46] : memref<64x64xf32, #tpu.memory_space<vmem>>, vector<64x64xf32>
    %cst_47 = arith.constant dense<0.000000e+00> : vector<6x64xf32>
    %155 = tpu.matmul %153, %154, %cst_47 {dimension_numbers = #tpu.dot_dimension_numbers<[1], [0], [0], [1], [0, 0, 1, 1], [], []>} : vector<6x64xf32>, vector<64x64xf32>, vector<6x64xf32> -> vector<6x64xf32>
    %c0_48 = arith.constant 0 : index
    %c0_49 = arith.constant 0 : index
    %156 = vector.load %arg12[%c0_48, %c0_49] : memref<1x64xf32, #tpu.memory_space<vmem>>, vector<1x64xf32>
    %157 = vector.broadcast %156 : vector<1x64xf32> to vector<6x64xf32>
    %158 = arith.addf %155, %157 : vector<6x64xf32>
    %159 = arith.addf %24, %158 : vector<6x64xf32>
    %c0_50 = arith.constant 0 : index
    %c0_51 = arith.constant 0 : index
    %160 = vector.load %arg13[%c0_50, %c0_51] : memref<1x64xf32, #tpu.memory_space<vmem>>, vector<1x64xf32>
    %c0_52 = arith.constant 0 : index
    %c0_53 = arith.constant 0 : index
    %161 = vector.load %arg14[%c0_52, %c0_53] : memref<1x64xf32, #tpu.memory_space<vmem>>, vector<1x64xf32>
    %cst_54 = arith.constant dense<0.000000e+00> : vector<6xf32>
    %162 = vector.multi_reduction <add>, %159, %cst_54 [1] : vector<6x64xf32> to vector<6xf32>
    %163 = vector.shape_cast %162 : vector<6xf32> to vector<6x1xf32>
    %cst_55 = arith.constant 6.400000e+01 : f32
    %164 = vector.broadcast %cst_55 : f32 to vector<6x1xf32>
    %165 = arith.divf %163, %164 : vector<6x1xf32>
    %166 = vector.broadcast %165 : vector<6x1xf32> to vector<6x64xf32>
    %167 = arith.subf %159, %166 : vector<6x64xf32>
    %168 = arith.mulf %167, %167 : vector<6x64xf32>
    %cst_56 = arith.constant dense<0.000000e+00> : vector<6xf32>
    %169 = vector.multi_reduction <add>, %168, %cst_56 [1] : vector<6x64xf32> to vector<6xf32>
    %170 = vector.shape_cast %169 : vector<6xf32> to vector<6x1xf32>
    %cst_57 = arith.constant 6.400000e+01 : f32
    %171 = vector.broadcast %cst_57 : f32 to vector<6x1xf32>
    %172 = arith.divf %170, %171 : vector<6x1xf32>
    %cst_58 = arith.constant 9.99999974E-6 : f32
    %173 = vector.broadcast %cst_58 : f32 to vector<6x1xf32>
    %174 = arith.addf %172, %173 : vector<6x1xf32>
    %175 = math.rsqrt %174 : vector<6x1xf32>
    %176 = vector.broadcast %175 : vector<6x1xf32> to vector<6x64xf32>
    %177 = arith.mulf %167, %176 : vector<6x64xf32>
    %178 = vector.broadcast %160 : vector<1x64xf32> to vector<6x64xf32>
    %179 = arith.mulf %177, %178 : vector<6x64xf32>
    %180 = vector.broadcast %161 : vector<1x64xf32> to vector<6x64xf32>
    %181 = arith.addf %179, %180 : vector<6x64xf32>
    %c0_59 = arith.constant 0 : index
    %c0_60 = arith.constant 0 : index
    %182 = vector.load %arg15[%c0_59, %c0_60] : memref<64x64xf32, #tpu.memory_space<vmem>>, vector<64x64xf32>
    %cst_61 = arith.constant dense<0.000000e+00> : vector<6x64xf32>
    %183 = tpu.matmul %181, %182, %cst_61 {dimension_numbers = #tpu.dot_dimension_numbers<[1], [0], [0], [1], [0, 0, 1, 1], [], []>} : vector<6x64xf32>, vector<64x64xf32>, vector<6x64xf32> -> vector<6x64xf32>
    %c0_62 = arith.constant 0 : index
    %c0_63 = arith.constant 0 : index
    %184 = vector.load %arg16[%c0_62, %c0_63] : memref<1x64xf32, #tpu.memory_space<vmem>>, vector<1x64xf32>
    %185 = vector.broadcast %184 : vector<1x64xf32> to vector<6x64xf32>
    %186 = arith.addf %183, %185 : vector<6x64xf32>
    %cst_64 = arith.constant 0.000000e+00 : f32
    %187 = vector.broadcast %cst_64 : f32 to vector<6x64xf32>
    %188 = arith.maximumf %186, %187 : vector<6x64xf32>
    %c0_65 = arith.constant 0 : index
    %c0_66 = arith.constant 0 : index
    %189 = vector.load %arg17[%c0_65, %c0_66] : memref<64x64xf32, #tpu.memory_space<vmem>>, vector<64x64xf32>
    %cst_67 = arith.constant dense<0.000000e+00> : vector<6x64xf32>
    %190 = tpu.matmul %188, %189, %cst_67 {dimension_numbers = #tpu.dot_dimension_numbers<[1], [0], [0], [1], [0, 0, 1, 1], [], []>} : vector<6x64xf32>, vector<64x64xf32>, vector<6x64xf32> -> vector<6x64xf32>
    %c0_68 = arith.constant 0 : index
    %c0_69 = arith.constant 0 : index
    %191 = vector.load %arg18[%c0_68, %c0_69] : memref<1x64xf32, #tpu.memory_space<vmem>>, vector<1x64xf32>
    %192 = vector.broadcast %191 : vector<1x64xf32> to vector<6x64xf32>
    %193 = arith.addf %190, %192 : vector<6x64xf32>
    %194 = arith.addf %181, %193 : vector<6x64xf32>
    %c0_70 = arith.constant 0 : index
    %c0_71 = arith.constant 0 : index
    %195 = vector.load %arg19[%c0_70, %c0_71] : memref<1x64xf32, #tpu.memory_space<vmem>>, vector<1x64xf32>
    %c0_72 = arith.constant 0 : index
    %c0_73 = arith.constant 0 : index
    %196 = vector.load %arg20[%c0_72, %c0_73] : memref<1x64xf32, #tpu.memory_space<vmem>>, vector<1x64xf32>
    %cst_74 = arith.constant dense<0.000000e+00> : vector<6xf32>
    %197 = vector.multi_reduction <add>, %194, %cst_74 [1] : vector<6x64xf32> to vector<6xf32>
    %198 = vector.shape_cast %197 : vector<6xf32> to vector<6x1xf32>
    %cst_75 = arith.constant 6.400000e+01 : f32
    %199 = vector.broadcast %cst_75 : f32 to vector<6x1xf32>
    %200 = arith.divf %198, %199 : vector<6x1xf32>
    %201 = vector.broadcast %200 : vector<6x1xf32> to vector<6x64xf32>
    %202 = arith.subf %194, %201 : vector<6x64xf32>
    %203 = arith.mulf %202, %202 : vector<6x64xf32>
    %cst_76 = arith.constant dense<0.000000e+00> : vector<6xf32>
    %204 = vector.multi_reduction <add>, %203, %cst_76 [1] : vector<6x64xf32> to vector<6xf32>
    %205 = vector.shape_cast %204 : vector<6xf32> to vector<6x1xf32>
    %cst_77 = arith.constant 6.400000e+01 : f32
    %206 = vector.broadcast %cst_77 : f32 to vector<6x1xf32>
    %207 = arith.divf %205, %206 : vector<6x1xf32>
    %cst_78 = arith.constant 9.99999974E-6 : f32
    %208 = vector.broadcast %cst_78 : f32 to vector<6x1xf32>
    %209 = arith.addf %207, %208 : vector<6x1xf32>
    %210 = math.rsqrt %209 : vector<6x1xf32>
    %211 = vector.broadcast %210 : vector<6x1xf32> to vector<6x64xf32>
    %212 = arith.mulf %202, %211 : vector<6x64xf32>
    %213 = vector.broadcast %195 : vector<1x64xf32> to vector<6x64xf32>
    %214 = arith.mulf %212, %213 : vector<6x64xf32>
    %215 = vector.broadcast %196 : vector<1x64xf32> to vector<6x64xf32>
    %216 = arith.addf %214, %215 : vector<6x64xf32>
    %c0_79 = arith.constant 0 : index
    %c0_80 = arith.constant 0 : index
    %217 = vector.load %arg21[%c0_79, %c0_80] : memref<64x192xf32, #tpu.memory_space<vmem>>, vector<64x192xf32>
    %cst_81 = arith.constant dense<0.000000e+00> : vector<6x192xf32>
    %218 = tpu.matmul %216, %217, %cst_81 {dimension_numbers = #tpu.dot_dimension_numbers<[1], [0], [0], [1], [0, 0, 1, 1], [], []>} : vector<6x64xf32>, vector<64x192xf32>, vector<6x192xf32> -> vector<6x192xf32>
    %c0_82 = arith.constant 0 : index
    %c0_83 = arith.constant 0 : index
    %219 = vector.load %arg22[%c0_82, %c0_83] : memref<1x192xf32, #tpu.memory_space<vmem>>, vector<1x192xf32>
    %220 = vector.broadcast %219 : vector<1x192xf32> to vector<6x192xf32>
    %221 = arith.addf %218, %220 : vector<6x192xf32>
    %222 = vector.extract_strided_slice %221 {offsets = [0, 0], sizes = [6, 64], strides = [1, 1]} : vector<6x192xf32> to vector<6x64xf32>
    %223 = vector.extract_strided_slice %221 {offsets = [0, 64], sizes = [6, 64], strides = [1, 1]} : vector<6x192xf32> to vector<6x64xf32>
    %224 = vector.extract_strided_slice %221 {offsets = [0, 128], sizes = [6, 64], strides = [1, 1]} : vector<6x192xf32> to vector<6x64xf32>
    %225 = vector.extract_strided_slice %222 {offsets = [0, 0], sizes = [2, 64], strides = [1, 1]} : vector<6x64xf32> to vector<2x64xf32>
    %226 = vector.extract_strided_slice %222 {offsets = [2, 0], sizes = [2, 64], strides = [1, 1]} : vector<6x64xf32> to vector<2x64xf32>
    %227 = vector.extract_strided_slice %222 {offsets = [4, 0], sizes = [2, 64], strides = [1, 1]} : vector<6x64xf32> to vector<2x64xf32>
    %228 = vector.extract_strided_slice %223 {offsets = [0, 0], sizes = [2, 64], strides = [1, 1]} : vector<6x64xf32> to vector<2x64xf32>
    %229 = vector.extract_strided_slice %223 {offsets = [2, 0], sizes = [2, 64], strides = [1, 1]} : vector<6x64xf32> to vector<2x64xf32>
    %230 = vector.extract_strided_slice %223 {offsets = [4, 0], sizes = [2, 64], strides = [1, 1]} : vector<6x64xf32> to vector<2x64xf32>
    %231 = vector.extract_strided_slice %224 {offsets = [0, 0], sizes = [2, 64], strides = [1, 1]} : vector<6x64xf32> to vector<2x64xf32>
    %232 = vector.extract_strided_slice %224 {offsets = [2, 0], sizes = [2, 64], strides = [1, 1]} : vector<6x64xf32> to vector<2x64xf32>
    %233 = vector.extract_strided_slice %224 {offsets = [4, 0], sizes = [2, 64], strides = [1, 1]} : vector<6x64xf32> to vector<2x64xf32>
    %234 = arith.mulf %225, %228 : vector<2x64xf32>
    %cst_84 = arith.constant dense<0.000000e+00> : vector<2xf32>
    %235 = vector.multi_reduction <add>, %234, %cst_84 [1] : vector<2x64xf32> to vector<2xf32>
    %236 = vector.shape_cast %235 : vector<2xf32> to vector<2x1xf32>
    %cst_85 = arith.constant 1.250000e-01 : f32
    %237 = vector.broadcast %cst_85 : f32 to vector<2x1xf32>
    %238 = arith.mulf %236, %237 : vector<2x1xf32>
    %239 = arith.mulf %225, %229 : vector<2x64xf32>
    %cst_86 = arith.constant dense<0.000000e+00> : vector<2xf32>
    %240 = vector.multi_reduction <add>, %239, %cst_86 [1] : vector<2x64xf32> to vector<2xf32>
    %241 = vector.shape_cast %240 : vector<2xf32> to vector<2x1xf32>
    %cst_87 = arith.constant 1.250000e-01 : f32
    %242 = vector.broadcast %cst_87 : f32 to vector<2x1xf32>
    %243 = arith.mulf %241, %242 : vector<2x1xf32>
    %244 = arith.mulf %225, %230 : vector<2x64xf32>
    %cst_88 = arith.constant dense<0.000000e+00> : vector<2xf32>
    %245 = vector.multi_reduction <add>, %244, %cst_88 [1] : vector<2x64xf32> to vector<2xf32>
    %246 = vector.shape_cast %245 : vector<2xf32> to vector<2x1xf32>
    %cst_89 = arith.constant 1.250000e-01 : f32
    %247 = vector.broadcast %cst_89 : f32 to vector<2x1xf32>
    %248 = arith.mulf %246, %247 : vector<2x1xf32>
    %249 = arith.maximumf %238, %243 : vector<2x1xf32>
    %250 = arith.maximumf %249, %248 : vector<2x1xf32>
    %251 = arith.subf %238, %250 : vector<2x1xf32>
    %252 = math.exp %251 : vector<2x1xf32>
    %253 = arith.subf %243, %250 : vector<2x1xf32>
    %254 = math.exp %253 : vector<2x1xf32>
    %255 = arith.subf %248, %250 : vector<2x1xf32>
    %256 = math.exp %255 : vector<2x1xf32>
    %257 = arith.addf %252, %254 : vector<2x1xf32>
    %258 = arith.addf %257, %256 : vector<2x1xf32>
    %259 = tpu.reciprocal %258 {approx = true} : vector<2x1xf32> -> vector<2x1xf32>
    %260 = arith.mulf %252, %259 : vector<2x1xf32>
    %261 = vector.broadcast %260 : vector<2x1xf32> to vector<2x64xf32>
    %262 = arith.mulf %261, %231 : vector<2x64xf32>
    %263 = arith.mulf %254, %259 : vector<2x1xf32>
    %264 = vector.broadcast %263 : vector<2x1xf32> to vector<2x64xf32>
    %265 = arith.mulf %264, %232 : vector<2x64xf32>
    %266 = arith.addf %262, %265 : vector<2x64xf32>
    %267 = arith.mulf %256, %259 : vector<2x1xf32>
    %268 = vector.broadcast %267 : vector<2x1xf32> to vector<2x64xf32>
    %269 = arith.mulf %268, %233 : vector<2x64xf32>
    %270 = arith.addf %266, %269 : vector<2x64xf32>
    %271 = arith.mulf %226, %228 : vector<2x64xf32>
    %cst_90 = arith.constant dense<0.000000e+00> : vector<2xf32>
    %272 = vector.multi_reduction <add>, %271, %cst_90 [1] : vector<2x64xf32> to vector<2xf32>
    %273 = vector.shape_cast %272 : vector<2xf32> to vector<2x1xf32>
    %cst_91 = arith.constant 1.250000e-01 : f32
    %274 = vector.broadcast %cst_91 : f32 to vector<2x1xf32>
    %275 = arith.mulf %273, %274 : vector<2x1xf32>
    %276 = arith.mulf %226, %229 : vector<2x64xf32>
    %cst_92 = arith.constant dense<0.000000e+00> : vector<2xf32>
    %277 = vector.multi_reduction <add>, %276, %cst_92 [1] : vector<2x64xf32> to vector<2xf32>
    %278 = vector.shape_cast %277 : vector<2xf32> to vector<2x1xf32>
    %cst_93 = arith.constant 1.250000e-01 : f32
    %279 = vector.broadcast %cst_93 : f32 to vector<2x1xf32>
    %280 = arith.mulf %278, %279 : vector<2x1xf32>
    %281 = arith.mulf %226, %230 : vector<2x64xf32>
    %cst_94 = arith.constant dense<0.000000e+00> : vector<2xf32>
    %282 = vector.multi_reduction <add>, %281, %cst_94 [1] : vector<2x64xf32> to vector<2xf32>
    %283 = vector.shape_cast %282 : vector<2xf32> to vector<2x1xf32>
    %cst_95 = arith.constant 1.250000e-01 : f32
    %284 = vector.broadcast %cst_95 : f32 to vector<2x1xf32>
    %285 = arith.mulf %283, %284 : vector<2x1xf32>
    %286 = arith.maximumf %275, %280 : vector<2x1xf32>
    %287 = arith.maximumf %286, %285 : vector<2x1xf32>
    %288 = arith.subf %275, %287 : vector<2x1xf32>
    %289 = math.exp %288 : vector<2x1xf32>
    %290 = arith.subf %280, %287 : vector<2x1xf32>
    %291 = math.exp %290 : vector<2x1xf32>
    %292 = arith.subf %285, %287 : vector<2x1xf32>
    %293 = math.exp %292 : vector<2x1xf32>
    %294 = arith.addf %289, %291 : vector<2x1xf32>
    %295 = arith.addf %294, %293 : vector<2x1xf32>
    %296 = tpu.reciprocal %295 {approx = true} : vector<2x1xf32> -> vector<2x1xf32>
    %297 = arith.mulf %289, %296 : vector<2x1xf32>
    %298 = vector.broadcast %297 : vector<2x1xf32> to vector<2x64xf32>
    %299 = arith.mulf %298, %231 : vector<2x64xf32>
    %300 = arith.mulf %291, %296 : vector<2x1xf32>
    %301 = vector.broadcast %300 : vector<2x1xf32> to vector<2x64xf32>
    %302 = arith.mulf %301, %232 : vector<2x64xf32>
    %303 = arith.addf %299, %302 : vector<2x64xf32>
    %304 = arith.mulf %293, %296 : vector<2x1xf32>
    %305 = vector.broadcast %304 : vector<2x1xf32> to vector<2x64xf32>
    %306 = arith.mulf %305, %233 : vector<2x64xf32>
    %307 = arith.addf %303, %306 : vector<2x64xf32>
    %308 = arith.mulf %227, %228 : vector<2x64xf32>
    %cst_96 = arith.constant dense<0.000000e+00> : vector<2xf32>
    %309 = vector.multi_reduction <add>, %308, %cst_96 [1] : vector<2x64xf32> to vector<2xf32>
    %310 = vector.shape_cast %309 : vector<2xf32> to vector<2x1xf32>
    %cst_97 = arith.constant 1.250000e-01 : f32
    %311 = vector.broadcast %cst_97 : f32 to vector<2x1xf32>
    %312 = arith.mulf %310, %311 : vector<2x1xf32>
    %313 = arith.mulf %227, %229 : vector<2x64xf32>
    %cst_98 = arith.constant dense<0.000000e+00> : vector<2xf32>
    %314 = vector.multi_reduction <add>, %313, %cst_98 [1] : vector<2x64xf32> to vector<2xf32>
    %315 = vector.shape_cast %314 : vector<2xf32> to vector<2x1xf32>
    %cst_99 = arith.constant 1.250000e-01 : f32
    %316 = vector.broadcast %cst_99 : f32 to vector<2x1xf32>
    %317 = arith.mulf %315, %316 : vector<2x1xf32>
    %318 = arith.mulf %227, %230 : vector<2x64xf32>
    %cst_100 = arith.constant dense<0.000000e+00> : vector<2xf32>
    %319 = vector.multi_reduction <add>, %318, %cst_100 [1] : vector<2x64xf32> to vector<2xf32>
    %320 = vector.shape_cast %319 : vector<2xf32> to vector<2x1xf32>
    %cst_101 = arith.constant 1.250000e-01 : f32
    %321 = vector.broadcast %cst_101 : f32 to vector<2x1xf32>
    %322 = arith.mulf %320, %321 : vector<2x1xf32>
    %323 = arith.maximumf %312, %317 : vector<2x1xf32>
    %324 = arith.maximumf %323, %322 : vector<2x1xf32>
    %325 = arith.subf %312, %324 : vector<2x1xf32>
    %326 = math.exp %325 : vector<2x1xf32>
    %327 = arith.subf %317, %324 : vector<2x1xf32>
    %328 = math.exp %327 : vector<2x1xf32>
    %329 = arith.subf %322, %324 : vector<2x1xf32>
    %330 = math.exp %329 : vector<2x1xf32>
    %331 = arith.addf %326, %328 : vector<2x1xf32>
    %332 = arith.addf %331, %330 : vector<2x1xf32>
    %333 = tpu.reciprocal %332 {approx = true} : vector<2x1xf32> -> vector<2x1xf32>
    %334 = arith.mulf %326, %333 : vector<2x1xf32>
    %335 = vector.broadcast %334 : vector<2x1xf32> to vector<2x64xf32>
    %336 = arith.mulf %335, %231 : vector<2x64xf32>
    %337 = arith.mulf %328, %333 : vector<2x1xf32>
    %338 = vector.broadcast %337 : vector<2x1xf32> to vector<2x64xf32>
    %339 = arith.mulf %338, %232 : vector<2x64xf32>
    %340 = arith.addf %336, %339 : vector<2x64xf32>
    %341 = arith.mulf %330, %333 : vector<2x1xf32>
    %342 = vector.broadcast %341 : vector<2x1xf32> to vector<2x64xf32>
    %343 = arith.mulf %342, %233 : vector<2x64xf32>
    %344 = arith.addf %340, %343 : vector<2x64xf32>
    %345 = tpu.concatenate %270, %307, %344 in 0 : vector<2x64xf32>, vector<2x64xf32>, vector<2x64xf32> -> vector<6x64xf32>
    %c0_102 = arith.constant 0 : index
    %c0_103 = arith.constant 0 : index
    %346 = vector.load %arg23[%c0_102, %c0_103] : memref<64x64xf32, #tpu.memory_space<vmem>>, vector<64x64xf32>
    %cst_104 = arith.constant dense<0.000000e+00> : vector<6x64xf32>
    %347 = tpu.matmul %345, %346, %cst_104 {dimension_numbers = #tpu.dot_dimension_numbers<[1], [0], [0], [1], [0, 0, 1, 1], [], []>} : vector<6x64xf32>, vector<64x64xf32>, vector<6x64xf32> -> vector<6x64xf32>
    %c0_105 = arith.constant 0 : index
    %c0_106 = arith.constant 0 : index
    %348 = vector.load %arg24[%c0_105, %c0_106] : memref<1x64xf32, #tpu.memory_space<vmem>>, vector<1x64xf32>
    %349 = vector.broadcast %348 : vector<1x64xf32> to vector<6x64xf32>
    %350 = arith.addf %347, %349 : vector<6x64xf32>
    %351 = arith.addf %216, %350 : vector<6x64xf32>
    %c0_107 = arith.constant 0 : index
    %c0_108 = arith.constant 0 : index
    %352 = vector.load %arg25[%c0_107, %c0_108] : memref<1x64xf32, #tpu.memory_space<vmem>>, vector<1x64xf32>
    %c0_109 = arith.constant 0 : index
    %c0_110 = arith.constant 0 : index
    %353 = vector.load %arg26[%c0_109, %c0_110] : memref<1x64xf32, #tpu.memory_space<vmem>>, vector<1x64xf32>
    %cst_111 = arith.constant dense<0.000000e+00> : vector<6xf32>
    %354 = vector.multi_reduction <add>, %351, %cst_111 [1] : vector<6x64xf32> to vector<6xf32>
    %355 = vector.shape_cast %354 : vector<6xf32> to vector<6x1xf32>
    %cst_112 = arith.constant 6.400000e+01 : f32
    %356 = vector.broadcast %cst_112 : f32 to vector<6x1xf32>
    %357 = arith.divf %355, %356 : vector<6x1xf32>
    %358 = vector.broadcast %357 : vector<6x1xf32> to vector<6x64xf32>
    %359 = arith.subf %351, %358 : vector<6x64xf32>
    %360 = arith.mulf %359, %359 : vector<6x64xf32>
    %cst_113 = arith.constant dense<0.000000e+00> : vector<6xf32>
    %361 = vector.multi_reduction <add>, %360, %cst_113 [1] : vector<6x64xf32> to vector<6xf32>
    %362 = vector.shape_cast %361 : vector<6xf32> to vector<6x1xf32>
    %cst_114 = arith.constant 6.400000e+01 : f32
    %363 = vector.broadcast %cst_114 : f32 to vector<6x1xf32>
    %364 = arith.divf %362, %363 : vector<6x1xf32>
    %cst_115 = arith.constant 9.99999974E-6 : f32
    %365 = vector.broadcast %cst_115 : f32 to vector<6x1xf32>
    %366 = arith.addf %364, %365 : vector<6x1xf32>
    %367 = math.rsqrt %366 : vector<6x1xf32>
    %368 = vector.broadcast %367 : vector<6x1xf32> to vector<6x64xf32>
    %369 = arith.mulf %359, %368 : vector<6x64xf32>
    %370 = vector.broadcast %352 : vector<1x64xf32> to vector<6x64xf32>
    %371 = arith.mulf %369, %370 : vector<6x64xf32>
    %372 = vector.broadcast %353 : vector<1x64xf32> to vector<6x64xf32>
    %373 = arith.addf %371, %372 : vector<6x64xf32>
    %c0_116 = arith.constant 0 : index
    %c0_117 = arith.constant 0 : index
    %374 = vector.load %arg27[%c0_116, %c0_117] : memref<64x64xf32, #tpu.memory_space<vmem>>, vector<64x64xf32>
    %cst_118 = arith.constant dense<0.000000e+00> : vector<6x64xf32>
    %375 = tpu.matmul %373, %374, %cst_118 {dimension_numbers = #tpu.dot_dimension_numbers<[1], [0], [0], [1], [0, 0, 1, 1], [], []>} : vector<6x64xf32>, vector<64x64xf32>, vector<6x64xf32> -> vector<6x64xf32>
    %c0_119 = arith.constant 0 : index
    %c0_120 = arith.constant 0 : index
    %376 = vector.load %arg28[%c0_119, %c0_120] : memref<1x64xf32, #tpu.memory_space<vmem>>, vector<1x64xf32>
    %377 = vector.broadcast %376 : vector<1x64xf32> to vector<6x64xf32>
    %378 = arith.addf %375, %377 : vector<6x64xf32>
    %cst_121 = arith.constant 0.000000e+00 : f32
    %379 = vector.broadcast %cst_121 : f32 to vector<6x64xf32>
    %380 = arith.maximumf %378, %379 : vector<6x64xf32>
    %c0_122 = arith.constant 0 : index
    %c0_123 = arith.constant 0 : index
    %381 = vector.load %arg29[%c0_122, %c0_123] : memref<64x64xf32, #tpu.memory_space<vmem>>, vector<64x64xf32>
    %cst_124 = arith.constant dense<0.000000e+00> : vector<6x64xf32>
    %382 = tpu.matmul %380, %381, %cst_124 {dimension_numbers = #tpu.dot_dimension_numbers<[1], [0], [0], [1], [0, 0, 1, 1], [], []>} : vector<6x64xf32>, vector<64x64xf32>, vector<6x64xf32> -> vector<6x64xf32>
    %c0_125 = arith.constant 0 : index
    %c0_126 = arith.constant 0 : index
    %383 = vector.load %arg30[%c0_125, %c0_126] : memref<1x64xf32, #tpu.memory_space<vmem>>, vector<1x64xf32>
    %384 = vector.broadcast %383 : vector<1x64xf32> to vector<6x64xf32>
    %385 = arith.addf %382, %384 : vector<6x64xf32>
    %386 = arith.addf %373, %385 : vector<6x64xf32>
    %c0_127 = arith.constant 0 : index
    %c0_128 = arith.constant 0 : index
    %387 = vector.load %arg31[%c0_127, %c0_128] : memref<1x64xf32, #tpu.memory_space<vmem>>, vector<1x64xf32>
    %c0_129 = arith.constant 0 : index
    %c0_130 = arith.constant 0 : index
    %388 = vector.load %arg32[%c0_129, %c0_130] : memref<1x64xf32, #tpu.memory_space<vmem>>, vector<1x64xf32>
    %cst_131 = arith.constant dense<0.000000e+00> : vector<6xf32>
    %389 = vector.multi_reduction <add>, %386, %cst_131 [1] : vector<6x64xf32> to vector<6xf32>
    %390 = vector.shape_cast %389 : vector<6xf32> to vector<6x1xf32>
    %cst_132 = arith.constant 6.400000e+01 : f32
    %391 = vector.broadcast %cst_132 : f32 to vector<6x1xf32>
    %392 = arith.divf %390, %391 : vector<6x1xf32>
    %393 = vector.broadcast %392 : vector<6x1xf32> to vector<6x64xf32>
    %394 = arith.subf %386, %393 : vector<6x64xf32>
    %395 = arith.mulf %394, %394 : vector<6x64xf32>
    %cst_133 = arith.constant dense<0.000000e+00> : vector<6xf32>
    %396 = vector.multi_reduction <add>, %395, %cst_133 [1] : vector<6x64xf32> to vector<6xf32>
    %397 = vector.shape_cast %396 : vector<6xf32> to vector<6x1xf32>
    %cst_134 = arith.constant 6.400000e+01 : f32
    %398 = vector.broadcast %cst_134 : f32 to vector<6x1xf32>
    %399 = arith.divf %397, %398 : vector<6x1xf32>
    %cst_135 = arith.constant 9.99999974E-6 : f32
    %400 = vector.broadcast %cst_135 : f32 to vector<6x1xf32>
    %401 = arith.addf %399, %400 : vector<6x1xf32>
    %402 = math.rsqrt %401 : vector<6x1xf32>
    %403 = vector.broadcast %402 : vector<6x1xf32> to vector<6x64xf32>
    %404 = arith.mulf %394, %403 : vector<6x64xf32>
    %405 = vector.broadcast %387 : vector<1x64xf32> to vector<6x64xf32>
    %406 = arith.mulf %404, %405 : vector<6x64xf32>
    %407 = vector.broadcast %388 : vector<1x64xf32> to vector<6x64xf32>
    %408 = arith.addf %406, %407 : vector<6x64xf32>
    %409 = vector.extract_strided_slice %408 {offsets = [0, 0], sizes = [2, 64], strides = [1, 1]} : vector<6x64xf32> to vector<2x64xf32>
    %410 = vector.extract_strided_slice %408 {offsets = [2, 0], sizes = [2, 64], strides = [1, 1]} : vector<6x64xf32> to vector<2x64xf32>
    %411 = vector.extract_strided_slice %408 {offsets = [4, 0], sizes = [2, 64], strides = [1, 1]} : vector<6x64xf32> to vector<2x64xf32>
    %412 = tpu.concatenate %409, %410, %411 in 1 : vector<2x64xf32>, vector<2x64xf32>, vector<2x64xf32> -> vector<2x192xf32>
    %c0_136 = arith.constant 0 : index
    %c0_137 = arith.constant 0 : index
    %413 = vector.load %arg33[%c0_136, %c0_137] : memref<2x192xf32, #tpu.memory_space<vmem>>, vector<2x192xf32>
    tpu.vector_store %arg33[%c0_136, %c0_137], %412 {strides = array<i32>} : memref<2x192xf32, #tpu.memory_space<vmem>>, vector<2x192xf32>,
    return
  }
}

</mosaic_0001>

<llo_original>
// kernel: nature_att_encoder_forward.4
$region0: #{nature_att_encoder_forward.4}
  #allocation0 [shape = 'u32[]', space=smem, size = 0x4, offset = 0x4, fixed_abs, tag = 'smem constant byte address 0x4 - core index']
  #allocation1 [shape = 'u32[144,128]{1,0:T(1,128)}', space=vmem, size = 0x12000, scoped, tag = 'internal scratch']
  %s0 = inlined_call_operand.vmem [shape: bf16[2,464,192], index: 0, kind: input, shape index: {}]
  %s1 = inlined_call_operand.vmem [shape: bf16[2,192,128], index: 1, kind: input, shape index: {}]
  %s2 = inlined_call_operand.vmem [shape: f32[2,1,128], index: 2, kind: input, shape index: {}]
  %s3 = inlined_call_operand.vmem [shape: bf16[2,464,128], index: 3, kind: output, shape index: {}]
  %s4 = sld [smem:[#allocation0]]
  $region45: #{nature_att_encoder_forward.4} parent=0
    _
  %s6 = ssub.s32 1, %s4
  %s7 = scalar_select 0, %s6, %s4
  loop: start=0, step=1, limit=4
  $region2: #{nature_att_encoder_forward.4} parent=0 // loop_pre_header
    _
  $region3: #{nature_att_encoder_forward.4} parent=0 // loop_header
    %s9 = sphi 0, %s13
    %p10 = scmp.ge.s32.totalorder %s9, 4
    %s16 = sphi 0, %s28
    %s17 = sphi 0, %s24
    %s18 = sphi 0, %s16
    %s19 = sphi 0, %s17
    %s20 = sphi 0, %s18
    %s21 = sphi 0, %s19
    %s33 = sphi 0, %s35
    %s36 = sphi 0, %s33
    %s37 = sphi 0, %s36
    %s53 = sphi 0, %s37
    %s59 = sphi 0, %s61
    %s62 = sphi 0, %s59
    %s63 = sphi 0, %s62
    %s79 = sphi 0, %s63
    %s85 = sphi 0, %s87
    %s88 = sphi 0, %s85
    %s89 = sphi 0, %s88
    %s105 = sphi 0, %s89
    %s113 = sphi 0, %s115
    %s116 = sphi 0, %s113
    %s117 = sphi 0, %s116
    %s133 = sphi 0, %s117
  $region4: #{nature_att_encoder_forward.4} parent=0 // loop_header_branch
    %12 = sbr.rel (%p10) target = $region8
  $region5: #{nature_att_encoder_forward.4} parent=0 // loop_body
    %s14 = ssub.s32 %s9, 1
    %s15 = ssub.s32 %s9, 2
    %s22 = sadd.s32 1, %s17
    %p23 = scmp.ge.s32.totalorder %s22, 1
    %s24 = scalar_select %p23, 0, %s22
    %s25 = sadd.s32 1, %s16
    %s26 = scalar_select %p23, %s25, %s16
    %p27 = scmp.ge.s32.totalorder %s26, 2
    %s28 = scalar_select %p27, 0, %s26
    %s29 = ssub.s32 %s16, %s28
    %s30 = ssub.s32 %s17, %s24
    %s31 = sor.u32 %s29, %s30
    %p32 = scmp.eq.s32.totalorder %s31, 0
    %s34 = sadd.s32 %s33, 1
    %s35 = scalar_select %p32, %s33, %s34
    %p38 = pneg %p32
    %p39 = scmp.eq.s32.totalorder %s9, 1
    %p40 = por %p38, %p39
    %p41 = scmp.ne.s32.totalorder %s33, %s36
    %p42 = scmp.eq.s32.totalorder %s9, 0
    %p43 = por %p41, %p42
    %p44 = scmp.ne.s32.totalorder %s33, %s36
    %p45 = scmp.eq.s32.totalorder %s14, 1
    %p46 = por %p44, %p45
    %p47 = scmp.ne.s32.totalorder %s36, %s37
    %p48 = scmp.eq.s32.totalorder %s14, 0
    %p49 = por %p47, %p48
    %p50 = scmp.ne.s32.totalorder %s36, %s37
    %p51 = scmp.eq.s32.totalorder %s15, 1
    %p52 = por %p50, %p51
    %p54 = scmp.ne.s32.totalorder %s37, %s53
    %p55 = scmp.eq.s32.totalorder %s15, 0
    %p56 = por %p54, %p55
    %s57 = ssub.s32 %s16, %s28
    %p58 = scmp.eq.s32.totalorder %s57, 0
    %s60 = sadd.s32 %s59, 1
    %s61 = scalar_select %p58, %s59, %s60
    %p64 = pneg %p58
    %p65 = scmp.eq.s32.totalorder %s9, 1
    %p66 = por %p64, %p65
    %p67 = scmp.ne.s32.totalorder %s59, %s62
    %p68 = scmp.eq.s32.totalorder %s9, 0
    %p69 = por %p67, %p68
    %p70 = scmp.ne.s32.totalorder %s59, %s62
    %p71 = scmp.eq.s32.totalorder %s14, 1
    %p72 = por %p70, %p71
    %p73 = scmp.ne.s32.totalorder %s62, %s63
    %p74 = scmp.eq.s32.totalorder %s14, 0
    %p75 = por %p73, %p74
    %p76 = scmp.ne.s32.totalorder %s62, %s63
    %p77 = scmp.eq.s32.totalorder %s15, 1
    %p78 = por %p76, %p77
    %p80 = scmp.ne.s32.totalorder %s63, %s79
    %p81 = scmp.eq.s32.totalorder %s15, 0
    %p82 = por %p80, %p81
    %s83 = ssub.s32 %s16, %s28
    %p84 = scmp.eq.s32.totalorder %s83, 0
    %s86 = sadd.s32 %s85, 1
    %s87 = scalar_select %p84, %s85, %s86
    %p90 = pneg %p84
    %p91 = scmp.eq.s32.totalorder %s9, 1
    %p92 = por %p90, %p91
    %p93 = scmp.ne.s32.totalorder %s85, %s88
    %p94 = scmp.eq.s32.totalorder %s9, 0
    %p95 = por %p93, %p94
    %p96 = scmp.ne.s32.totalorder %s85, %s88
    %p97 = scmp.eq.s32.totalorder %s14, 1
    %p98 = por %p96, %p97
    %p99 = scmp.ne.s32.totalorder %s88, %s89
    %p100 = scmp.eq.s32.totalorder %s14, 0
    %p101 = por %p99, %p100
    %p102 = scmp.ne.s32.totalorder %s88, %s89
    %p103 = scmp.eq.s32.totalorder %s15, 1
    %p104 = por %p102, %p103
    %p106 = scmp.ne.s32.totalorder %s89, %s105
    %p107 = scmp.eq.s32.totalorder %s15, 0
    %p108 = por %p106, %p107
    %s109 = ssub.s32 %s16, %s28
    %s110 = ssub.s32 %s17, %s24
    %s111 = sor.u32 %s109, %s110
    %p112 = scmp.eq.s32.totalorder %s111, 0
    %s114 = sadd.s32 %s113, 1
    %s115 = scalar_select %p112, %s113, %s114
    %p118 = pneg %p112
    %p119 = scmp.eq.s32.totalorder %s9, 1
    %p120 = por %p118, %p119
    %p121 = scmp.ne.s32.totalorder %s113, %s116
    %p122 = scmp.eq.s32.totalorder %s9, 0
    %p123 = por %p121, %p122
    %p124 = scmp.ne.s32.totalorder %s113, %s116
    %p125 = scmp.eq.s32.totalorder %s14, 1
    %p126 = por %p124, %p125
    %p127 = scmp.ne.s32.totalorder %s116, %s117
    %p128 = scmp.eq.s32.totalorder %s14, 0
    %p129 = por %p127, %p128
    %p130 = scmp.ne.s32.totalorder %s116, %s117
    %p131 = scmp.eq.s32.totalorder %s15, 1
    %p132 = por %p130, %p131
    %p134 = scmp.ne.s32.totalorder %s117, %s133
    %p135 = scmp.eq.s32.totalorder %s15, 0
    %p136 = por %p134, %p135
    %p137 = scmp.le.s32.totalorder 1, %s9
    %p138 = scmp.lt.s32.totalorder %s9, 3
    %p139 = pnand %p137, %p138
    %p140 = pneg %p139
    // Predicated region
    $region9: #{nature_att_encoder_forward.4} parent=5 // pred_check
      _
    $region10: #{nature_att_encoder_forward.4} parent=5 // pred_check_branch
      %142 = sbr.rel (%p139) target = $region12
    $region11: #{nature_att_encoder_forward.4} parent=5 // pred_region
      %s143 = ssub.s32 %s9, 1
    $region12: #{nature_att_encoder_forward.4} parent=5 // pred_fallthru
      _
    %p144 = scmp.lt.s32.totalorder %s9, 2
    // Predicated region
    $region13: #{nature_att_encoder_forward.4} parent=5 // pred_check
      %p145 = pneg %p144
    $region14: #{nature_att_encoder_forward.4} parent=5 // pred_check_branch
      %147 = sbr.rel (%p145) target = $region16
    $region15: #{nature_att_encoder_forward.4} parent=5 // pred_region
      // Predicated region
      $region17: #{nature_att_encoder_forward.4} parent=15 // pred_check
        %p148 = pneg %p43
      $region18: #{nature_att_encoder_forward.4} parent=15 // pred_check_branch
        %150 = sbr.rel (%p148) target = $region20
      $region19: #{nature_att_encoder_forward.4} parent=15 // pred_region
        %s151 = smul.u32 58, %s17
        %p152 = scmp.lt.s32.totalorder %s16, 1
        %s153 = scalar_select %p152, %s16, 1
        %p154 = scmp.lt.s32.totalorder %s151, 57
        %s155 = scalar_select %p154, %s151, 57
        %s156 = smul.addr %s155, 2
        %s157 = smul.addr %s153, 116
        %s158 = sadd.s32 %s156, %s157
        %s159 = smul.addr %s158, 4
        %s160 = scalar_lea.vmem %s0, %s159
        %s161 = smul.u32 58, %s17
      $region20: #{nature_att_encoder_forward.4} parent=15 // pred_fallthru
        _
      // Predicated region
      $region21: #{nature_att_encoder_forward.4} parent=15 // pred_check
        %p162 = pneg %p69
      $region22: #{nature_att_encoder_forward.4} parent=15 // pred_check_branch
        %164 = sbr.rel (%p162) target = $region24
      $region23: #{nature_att_encoder_forward.4} parent=15 // pred_region
        %p165 = scmp.lt.s32.totalorder %s16, 1
        %s166 = scalar_select %p165, %s16, 1
        %s167 = smul.addr %s166, 24
        %s168 = smul.addr %s167, 4
        %s169 = scalar_lea.vmem %s1, %s168
      $region24: #{nature_att_encoder_forward.4} parent=15 // pred_fallthru
        _
      // Predicated region
      $region25: #{nature_att_encoder_forward.4} parent=15 // pred_check
        %p170 = pneg %p95
      $region26: #{nature_att_encoder_forward.4} parent=15 // pred_check_branch
        %172 = sbr.rel (%p170) target = $region28
      $region27: #{nature_att_encoder_forward.4} parent=15 // pred_region
        %p173 = scmp.lt.s32.totalorder %s16, 1
        %s174 = scalar_select %p173, %s16, 1
        %s175 = scalar_lea.vmem %s2, %s174
      $region28: #{nature_att_encoder_forward.4} parent=15 // pred_fallthru
        _
    $region16: #{nature_att_encoder_forward.4} parent=5 // pred_fallthru
      _
    %p176 = scmp.le.s32.totalorder 1, %s9
    %p177 = scmp.lt.s32.totalorder %s9, 3
    %p178 = pnand %p176, %p177
    %p179 = pneg %p178
    // Predicated region
    $region29: #{nature_att_encoder_forward.4} parent=5 // pred_check
      _
    $region30: #{nature_att_encoder_forward.4} parent=5 // pred_check_branch
      %181 = sbr.rel (%p178) target = $region32
    $region31: #{nature_att_encoder_forward.4} parent=5 // pred_region
      %s182 = ssub.s32 %s9, 1
      %s183 = smul.u32 58, %s19
      %p184 = scmp.lt.s32.totalorder %s18, 1
      %s185 = scalar_select %p184, %s18, 1
      %p186 = scmp.lt.s32.totalorder %s183, 57
      %s187 = scalar_select %p186, %s183, 57
      %s188 = smul.addr %s187, 2
      %s189 = smul.addr %s185, 116
      %s190 = sadd.s32 %s188, %s189
      %s191 = smul.addr %s190, 4
      %s192 = scalar_lea.vmem %s0, %s191
      %p193 = pneg %p49
      %p194 = pneg %p46
      %p195 = scmp.lt.s32.totalorder %s18, 1
      %s196 = scalar_select %p195, %s18, 1
      %s197 = smul.addr %s196, 24
      %s198 = smul.addr %s197, 4
      %s199 = scalar_lea.vmem %s1, %s198
      %p200 = pneg %p75
      %p201 = pneg %p72
      %p202 = scmp.lt.s32.totalorder %s18, 1
      %s203 = scalar_select %p202, %s18, 1
      %s204 = scalar_lea.vmem %s2, %s203
      %p205 = pneg %p101
      %p206 = pneg %p98
      %p207 = pneg %p129
      %p208 = pneg %p126
      %s209 = smul.u32 58, %s19
      %p210 = scmp.lt.s32.totalorder %s18, 1
      %s211 = scalar_select %p210, %s18, 1
      %p212 = scmp.lt.s32.totalorder %s209, 57
      %s213 = scalar_select %p212, %s209, 57
      %s214 = smul.addr %s211, 58
      %s215 = sadd.s32 %s213, %s214
      %s216 = smul.addr %s215, 4
      %s217 = scalar_lea.vmem %s3, %s216
      %s218 = smul.u32 58, %s19
      %p219 = scmp.lt.s32.totalorder %s18, 1
      %s220 = scalar_select %p219, %s18, 1
      %p221 = scmp.lt.s32.totalorder %s218, 57
      %s222 = scalar_select %p221, %s218, 57
      %s223 = smul.addr %s222, 2
      %s224 = smul.addr %s220, 116
      %s225 = sadd.s32 %s223, %s224
      %s226 = smul.addr %s225, 4
      %s227 = scalar_lea.vmem %s0, %s226
      %s228 = smul.u32 58, %s19
      %p229 = scmp.lt.s32.totalorder %s18, 1
      %s230 = scalar_select %p229, %s18, 1
      %s231 = smul.addr %s230, 24
      %s232 = smul.addr %s231, 4
      %s233 = scalar_lea.vmem %s1, %s232
      %p234 = scmp.lt.s32.totalorder %s18, 1
      %s235 = scalar_select %p234, %s18, 1
      %s236 = scalar_lea.vmem %s2, %s235
      %s237 = smul.u32 58, %s19
      %p238 = scmp.lt.s32.totalorder %s18, 1
      %s239 = scalar_select %p238, %s18, 1
      %p240 = scmp.lt.s32.totalorder %s237, 57
      %s241 = scalar_select %p240, %s237, 57
      %s242 = smul.addr %s239, 58
      %s243 = sadd.s32 %s241, %s242
      %s244 = smul.addr %s243, 4
      %s245 = scalar_lea.vmem %s3, %s244
      %s246 = smul.u32 58, %s19
      %v248 = vld [vmem:[%s227] sm:$0xff]
      %v249 = vld [vmem:[%s227 + $0x8] sm:$0xff]
      %v250 = vld [vmem:[%s227 + $0x10] sm:$0xff]
      %v251 = vld [vmem:[%s227 + $0x18] sm:$0xff]
      %v252 = vld [vmem:[%s227 + $0x20] sm:$0xff]
      %v253 = vld [vmem:[%s227 + $0x28] sm:$0xff]
      %v254 = vld [vmem:[%s227 + $0x30] sm:$0xff]
      %v255 = vld [vmem:[%s227 + $0x38] sm:$0xff]
      %v256 = vld [vmem:[%s227 + $0x40] sm:$0xff]
      %v257 = vld [vmem:[%s227 + $0x48] sm:$0xff]
      %v258 = vld [vmem:[%s227 + $0x50] sm:$0xff]
      %v259 = vld [vmem:[%s227 + $0x58] sm:$0xff]
      %v260 = vld [vmem:[%s227 + $0x60] sm:$0xff]
      %v261 = vld [vmem:[%s227 + $0x68] sm:$0xff]
      %v262 = vld [vmem:[%s227 + $0x70] sm:$0xff]
      %v263 = vld [vmem:[%s227 + $0x78] sm:$0xff]
      %v264 = vld [vmem:[%s227 + $0x80] sm:$0xff]
      %v265 = vld [vmem:[%s227 + $0x88] sm:$0xff]
      %v266 = vld [vmem:[%s227 + $0x90] sm:$0xff]
      %v267 = vld [vmem:[%s227 + $0x98] sm:$0xff]
      %v268 = vld [vmem:[%s227 + $0xa0] sm:$0xff]
      %v269 = vld [vmem:[%s227 + $0xa8] sm:$0xff]
      %v270 = vld [vmem:[%s227 + $0xb0] sm:$0xff]
      %v271 = vld [vmem:[%s227 + $0xb8] sm:$0xff]
      %v272 = vld [vmem:[%s227 + $0xc0] sm:$0xff]
      %v273 = vld [vmem:[%s227 + $0xc8] sm:$0xff]
      %v274 = vld [vmem:[%s227 + $0xd0] sm:$0xff]
      %v275 = vld [vmem:[%s227 + $0xd8] sm:$0xff]
      %v276 = vld [vmem:[%s227 + $0xe0] sm:$0xff]
      %v277 = vld [vmem:[%s227 + $0xe8] sm:$0xff]
      %v278 = vld [vmem:[%s227 + $0xf0] sm:$0xff]
      %v279 = vld [vmem:[%s227 + $0xf8] sm:$0xff]
      %v280 = vld [vmem:[%s227 + $0x100] sm:$0xff]
      %v281 = vld [vmem:[%s227 + $0x108] sm:$0xff]
      %v282 = vld [vmem:[%s227 + $0x110] sm:$0xff]
      %v283 = vld [vmem:[%s227 + $0x118] sm:$0xff]
      %v284 = vld [vmem:[%s227 + $0x120] sm:$0xff]
      %v285 = vld [vmem:[%s227 + $0x128] sm:$0xff]
      %v286 = vld [vmem:[%s227 + $0x130] sm:$0xff]
      %v287 = vld [vmem:[%s227 + $0x138] sm:$0xff]
      %v288 = vld [vmem:[%s227 + $0x140] sm:$0xff]
      %v289 = vld [vmem:[%s227 + $0x148] sm:$0xff]
      %v290 = vld [vmem:[%s227 + $0x150] sm:$0xff]
      %v291 = vld [vmem:[%s227 + $0x158] sm:$0xff]
      %v292 = vld [vmem:[%s227 + $0x160] sm:$0xff]
      %v293 = vld [vmem:[%s227 + $0x168] sm:$0xff]
      %v294 = vld [vmem:[%s227 + $0x170] sm:$0xff]
      %v295 = vld [vmem:[%s227 + $0x178] sm:$0xff]
      %v296 = vld [vmem:[%s227 + $0x180] sm:$0xff]
      %v297 = vld [vmem:[%s227 + $0x188] sm:$0xff]
      %v298 = vld [vmem:[%s227 + $0x190] sm:$0xff]
      %v299 = vld [vmem:[%s227 + $0x198] sm:$0xff]
      %v300 = vld [vmem:[%s227 + $0x1a0] sm:$0xff]
      %v301 = vld [vmem:[%s227 + $0x1a8] sm:$0xff]
      %v302 = vld [vmem:[%s227 + $0x1b0] sm:$0xff]
      %v303 = vld [vmem:[%s227 + $0x1b8] sm:$0xff]
      %v304 = vld [vmem:[%s227 + $0x1c0] sm:$0xff]
      %v305 = vld [vmem:[%s227 + $0x1c8] sm:$0xff]
      %v306 = vld [vmem:[%s233] sm:$0xf]
      %v307 = vld [vmem:[%s233 + $0x4] sm:$0xf]
      %v308 = vld [vmem:[%s233 + $0x8] sm:$0xf]
      %v309 = vld [vmem:[%s233 + $0xc] sm:$0xf]
      %v310 = vld [vmem:[%s233 + $0x10] sm:$0xf]
      %v311 = vld [vmem:[%s233 + $0x14] sm:$0xf]
      %v312 = vld [vmem:[%s233 + $0x18] sm:$0xf]
      %v313 = vld [vmem:[%s233 + $0x1c] sm:$0xf]
      %v314 = vld [vmem:[%s233 + $0x20] sm:$0xf]
      %v315 = vld [vmem:[%s233 + $0x24] sm:$0xf]
      %v316 = vld [vmem:[%s233 + $0x28] sm:$0xf]
      %v317 = vld [vmem:[%s233 + $0x2c] sm:$0xf]
      %v318 = vld [vmem:[%s233 + $0x30] sm:$0xf]
      %v319 = vld [vmem:[%s233 + $0x34] sm:$0xf]
      %v320 = vld [vmem:[%s233 + $0x38] sm:$0xf]
      %v321 = vld [vmem:[%s233 + $0x3c] sm:$0xf]
      %v322 = vld [vmem:[%s233 + $0x40] sm:$0xf]
      %v323 = vld [vmem:[%s233 + $0x44] sm:$0xf]
      %v324 = vld [vmem:[%s233 + $0x48] sm:$0xf]
      %v325 = vld [vmem:[%s233 + $0x4c] sm:$0xf]
      %v326 = vld [vmem:[%s233 + $0x50] sm:$0xf]
      %v327 = vld [vmem:[%s233 + $0x54] sm:$0xf]
      %v328 = vld [vmem:[%s233 + $0x58] sm:$0xf]
      %v329 = vld [vmem:[%s233 + $0x5c] sm:$0xf]
      %v330 = vld [vmem:[%s236] sm:$0x1]
      %v332 = vlaneseq
      %v333 = vshrl.u32 %v332, 7
      %v334 = vsub.s32 0, %v333
      %v335 = vrot.slane %v330, %v334
      %v395 = vunpack.c.l.b16 %v248
      %v396 = vunpack.c.h.b16 %v248
      %v397 = vunpack.c.l.b16 %v249
      %v398 = vunpack.c.h.b16 %v249
      %v399 = vunpack.c.l.b16 %v250
      %v400 = vunpack.c.h.b16 %v250
      %v401 = vunpack.c.l.b16 %v251
      %v402 = vunpack.c.h.b16 %v251
      %v403 = vunpack.c.l.b16 %v252
      %v404 = vunpack.c.h.b16 %v252
      %v405 = vunpack.c.l.b16 %v253
      %v406 = vunpack.c.h.b16 %v253
      %v407 = vunpack.c.l.b16 %v254
      %v408 = vunpack.c.h.b16 %v254
      %v409 = vunpack.c.l.b16 %v255
      %v410 = vunpack.c.h.b16 %v255
      %v411 = vunpack.c.l.b16 %v256
      %v412 = vunpack.c.h.b16 %v256
      %v413 = vunpack.c.l.b16 %v257
      %v414 = vunpack.c.h.b16 %v257
      %v415 = vunpack.c.l.b16 %v258
      %v416 = vunpack.c.h.b16 %v258
      %v417 = vunpack.c.l.b16 %v259
      %v418 = vunpack.c.h.b16 %v259
      %v419 = vunpack.c.l.b16 %v260
      %v420 = vunpack.c.h.b16 %v260
      %v421 = vunpack.c.l.b16 %v261
      %v422 = vunpack.c.h.b16 %v261
      %v423 = vunpack.c.l.b16 %v262
      %v424 = vunpack.c.h.b16 %v262
      %v425 = vunpack.c.l.b16 %v263
      %v426 = vunpack.c.h.b16 %v263
      %v427 = vunpack.c.l.b16 %v264
      %v428 = vunpack.c.h.b16 %v264
      %v429 = vunpack.c.l.b16 %v265
      %v430 = vunpack.c.h.b16 %v265
      %v431 = vunpack.c.l.b16 %v266
      %v432 = vunpack.c.h.b16 %v266
      %v433 = vunpack.c.l.b16 %v267
      %v434 = vunpack.c.h.b16 %v267
      %v435 = vunpack.c.l.b16 %v268
      %v436 = vunpack.c.h.b16 %v268
      %v437 = vunpack.c.l.b16 %v269
      %v438 = vunpack.c.h.b16 %v269
      %v439 = vunpack.c.l.b16 %v270
      %v440 = vunpack.c.h.b16 %v270
      %v441 = vunpack.c.l.b16 %v271
      %v442 = vunpack.c.h.b16 %v271
      %v443 = vunpack.c.l.b16 %v272
      %v444 = vunpack.c.h.b16 %v272
      %v445 = vunpack.c.l.b16 %v273
      %v446 = vunpack.c.h.b16 %v273
      %v447 = vunpack.c.l.b16 %v274
      %v448 = vunpack.c.h.b16 %v274
      %v449 = vunpack.c.l.b16 %v275
      %v450 = vunpack.c.h.b16 %v275
      %v451 = vunpack.c.l.b16 %v276
      %v452 = vunpack.c.h.b16 %v276
      %v453 = vunpack.c.l.b16 %v277
      %v454 = vunpack.c.h.b16 %v277
      %v455 = vunpack.c.l.b16 %v278
      %v456 = vunpack.c.h.b16 %v278
      %v457 = vunpack.c.l.b16 %v279
      %v458 = vunpack.c.h.b16 %v279
      %v459 = vunpack.c.l.b16 %v280
      %v460 = vunpack.c.h.b16 %v280
      %v461 = vunpack.c.l.b16 %v281
      %v462 = vunpack.c.h.b16 %v281
      %v463 = vunpack.c.l.b16 %v282
      %v464 = vunpack.c.h.b16 %v282
      %v465 = vunpack.c.l.b16 %v283
      %v466 = vunpack.c.h.b16 %v283
      %v467 = vunpack.c.l.b16 %v284
      %v468 = vunpack.c.h.b16 %v284
      %v469 = vunpack.c.l.b16 %v285
      %v470 = vunpack.c.h.b16 %v285
      %v471 = vunpack.c.l.b16 %v286
      %v472 = vunpack.c.h.b16 %v286
      %v473 = vunpack.c.l.b16 %v287
      %v474 = vunpack.c.h.b16 %v287
      %v475 = vunpack.c.l.b16 %v288
      %v476 = vunpack.c.h.b16 %v288
      %v477 = vunpack.c.l.b16 %v289
      %v478 = vunpack.c.h.b16 %v289
      %v479 = vunpack.c.l.b16 %v290
      %v480 = vunpack.c.h.b16 %v290
      %v481 = vunpack.c.l.b16 %v291
      %v482 = vunpack.c.h.b16 %v291
      %v483 = vunpack.c.l.b16 %v292
      %v484 = vunpack.c.h.b16 %v292
      %v485 = vunpack.c.l.b16 %v293
      %v486 = vunpack.c.h.b16 %v293
      %v487 = vunpack.c.l.b16 %v294
      %v488 = vunpack.c.h.b16 %v294
      %v489 = vunpack.c.l.b16 %v295
      %v490 = vunpack.c.h.b16 %v295
      %v491 = vunpack.c.l.b16 %v296
      %v492 = vunpack.c.h.b16 %v296
      %v493 = vunpack.c.l.b16 %v297
      %v494 = vunpack.c.h.b16 %v297
      %v495 = vunpack.c.l.b16 %v298
      %v496 = vunpack.c.h.b16 %v298
      %v497 = vunpack.c.l.b16 %v299
      %v498 = vunpack.c.h.b16 %v299
      %v499 = vunpack.c.l.b16 %v300
      %v500 = vunpack.c.h.b16 %v300
      %v501 = vunpack.c.l.b16 %v301
      %v502 = vunpack.c.h.b16 %v301
      %v503 = vunpack.c.l.b16 %v302
      %v504 = vunpack.c.h.b16 %v302
      %v505 = vunpack.c.l.b16 %v303
      %v506 = vunpack.c.h.b16 %v303
      %v507 = vunpack.c.l.b16 %v304
      %v508 = vunpack.c.h.b16 %v304
      %v509 = vunpack.c.l.b16 %v305
      %v510 = vunpack.c.h.b16 %v305
      %v511 = vpack.c.b16 %v397, %v395
      %v512 = vpack.c.b16 %v398, %v396
      %v513 = vpack.c.b16 %v401, %v399
      %v514 = vpack.c.b16 %v402, %v400
      %v515 = vpack.c.b16 %v405, %v403
      %v516 = vpack.c.b16 %v406, %v404
      %v517 = vpack.c.b16 %v409, %v407
      %v518 = vpack.c.b16 %v410, %v408
      %v519 = vpack.c.b16 %v413, %v411
      %v520 = vpack.c.b16 %v414, %v412
      %v521 = vpack.c.b16 %v417, %v415
      %v522 = vpack.c.b16 %v418, %v416
      %v523 = vpack.c.b16 %v421, %v419
      %v524 = vpack.c.b16 %v422, %v420
      %v525 = vpack.c.b16 %v425, %v423
      %v526 = vpack.c.b16 %v426, %v424
      %v527 = vpack.c.b16 %v429, %v427
      %v528 = vpack.c.b16 %v430, %v428
      %v529 = vpack.c.b16 %v433, %v431
      %v530 = vpack.c.b16 %v434, %v432
      %v531 = vpack.c.b16 %v437, %v435
      %v532 = vpack.c.b16 %v438, %v436
      %v533 = vpack.c.b16 %v441, %v439
      %v534 = vpack.c.b16 %v442, %v440
      %v535 = vpack.c.b16 %v445, %v443
      %v536 = vpack.c.b16 %v446, %v444
      %v537 = vpack.c.b16 %v449, %v447
      %v538 = vpack.c.b16 %v450, %v448
      %v539 = vpack.c.b16 %v453, %v451
      %v540 = vpack.c.b16 %v454, %v452
      %v541 = vpack.c.b16 %v457, %v455
      %v542 = vpack.c.b16 %v458, %v456
      %v543 = vpack.c.b16 %v461, %v459
      %v544 = vpack.c.b16 %v462, %v460
      %v545 = vpack.c.b16 %v465, %v463
      %v546 = vpack.c.b16 %v466, %v464
      %v547 = vpack.c.b16 %v469, %v467
      %v548 = vpack.c.b16 %v470, %v468
      %v549 = vpack.c.b16 %v473, %v471
      %v550 = vpack.c.b16 %v474, %v472
      %v551 = vpack.c.b16 %v477, %v475
      %v552 = vpack.c.b16 %v478, %v476
      %v553 = vpack.c.b16 %v481, %v479
      %v554 = vpack.c.b16 %v482, %v480
      %v555 = vpack.c.b16 %v485, %v483
      %v556 = vpack.c.b16 %v486, %v484
      %v557 = vpack.c.b16 %v489, %v487
      %v558 = vpack.c.b16 %v490, %v488
      %v559 = vpack.c.b16 %v493, %v491
      %v560 = vpack.c.b16 %v494, %v492
      %v561 = vpack.c.b16 %v497, %v495
      %v562 = vpack.c.b16 %v498, %v496
      %v563 = vpack.c.b16 %v501, %v499
      %v564 = vpack.c.b16 %v502, %v500
      %v565 = vpack.c.b16 %v505, %v503
      %v566 = vpack.c.b16 %v506, %v504
      %v567 = vpack.c.b16 %v509, %v507
      %v568 = vpack.c.b16 %v510, %v508
      %v622 = vunpack.c.l.b16 %v306
      %v623 = vunpack.c.l.b16 %v307
      %v624 = vunpack.c.l.b16 %v308
      %v625 = vunpack.c.l.b16 %v309
      %v626 = vunpack.c.l.b16 %v310
      %v627 = vunpack.c.l.b16 %v311
      %v628 = vunpack.c.l.b16 %v312
      %v629 = vunpack.c.l.b16 %v313
      %v630 = vunpack.c.l.b16 %v314
      %v631 = vunpack.c.l.b16 %v315
      %v632 = vunpack.c.l.b16 %v316
      %v633 = vunpack.c.l.b16 %v317
      %v634 = vunpack.c.l.b16 %v318
      %v635 = vunpack.c.l.b16 %v319
      %v636 = vunpack.c.l.b16 %v320
      %v637 = vunpack.c.l.b16 %v321
      %v638 = vunpack.c.l.b16 %v322
      %v639 = vunpack.c.l.b16 %v323
      %v640 = vunpack.c.l.b16 %v324
      %v641 = vunpack.c.l.b16 %v325
      %v642 = vunpack.c.l.b16 %v326
      %v643 = vunpack.c.l.b16 %v327
      %v644 = vunpack.c.l.b16 %v328
      %v645 = vunpack.c.l.b16 %v329
      %v646 = vpack.c.b16 %v623, %v622
      %v647 = vpack.c.b16 %v625, %v624
      %v648 = vpack.c.b16 %v627, %v626
      %v649 = vpack.c.b16 %v629, %v628
      %v650 = vpack.c.b16 %v631, %v630
      %v651 = vpack.c.b16 %v633, %v632
      %v652 = vpack.c.b16 %v635, %v634
      %v653 = vpack.c.b16 %v637, %v636
      %v654 = vpack.c.b16 %v639, %v638
      %v655 = vpack.c.b16 %v641, %v640
      %v656 = vpack.c.b16 %v643, %v642
      %v657 = vpack.c.b16 %v645, %v644
      %vm670 = vcmask 523264
      %v672 = vsel %vm670, %v512, 0
      %v675 = vsel %vm670, %v514, 0
      %v678 = vsel %vm670, %v516, 0
      %v681 = vsel %vm670, %v518, 0
      %v684 = vsel %vm670, %v520, 0
      %v687 = vsel %vm670, %v522, 0
      %v690 = vsel %vm670, %v524, 0
      %v693 = vsel %vm670, %v526, 0
      %v696 = vsel %vm670, %v528, 0
      %v699 = vsel %vm670, %v530, 0
      %v702 = vsel %vm670, %v532, 0
      %v705 = vsel %vm670, %v534, 0
      %v708 = vsel %vm670, %v536, 0
      %v711 = vsel %vm670, %v538, 0
      %v714 = vsel %vm670, %v540, 0
      %v717 = vsel %vm670, %v542, 0
      %v720 = vsel %vm670, %v544, 0
      %v723 = vsel %vm670, %v546, 0
      %v726 = vsel %vm670, %v548, 0
      %v729 = vsel %vm670, %v550, 0
      %v732 = vsel %vm670, %v552, 0
      %v735 = vsel %vm670, %v554, 0
      %v738 = vsel %vm670, %v556, 0
      %v741 = vsel %vm670, %v558, 0
      %v744 = vsel %vm670, %v560, 0
      %v747 = vsel %vm670, %v562, 0
      %v750 = vsel %vm670, %v564, 0
      %v753 = vsel %vm670, %v566, 0
      %v756 = vsel %vm670, %v568, 0
      %758 = vmatprep.subr.bf16.mxu0 0
      %759 = vmatpush1.bf16.msra.mxu0 %v653
      %760 = vmatprep.subr.bf16.mxu0 0
      %761 = vmatpush1.bf16.msra.mxu0 %v652
      %762 = vmatprep.subr.bf16.mxu0 0
      %763 = vmatpush1.bf16.msra.mxu0 %v651
      %764 = vmatprep.subr.bf16.mxu0 0
      %765 = vmatpush1.bf16.msra.mxu0 %v650
      %766 = vmatprep.subr.bf16.mxu0 0
      %767 = vmatpush1.bf16.msra.mxu0 %v649
      %768 = vmatprep.subr.bf16.mxu0 0
      %769 = vmatpush1.bf16.msra.mxu0 %v648
      %770 = vmatprep.subr.bf16.mxu0 0
      %771 = vmatpush1.bf16.msra.mxu0 %v647
      %772 = vmatprep.subr.bf16.mxu0 0
      %773 = vmatpush1.bf16.msra.mxu0 %v646
      %774 = vmatprep.subr.bf16.mxu0 0
      %775 = vmatpush2.bf16.msra.mxu0 0
      %776 = vmatprep.subr.bf16.mxu0 0
      %777 = vmatpush2.bf16.msra.mxu0 0
      %778 = vmatprep.subr.bf16.mxu0 0
      %779 = vmatpush2.bf16.msra.mxu0 0
      %780 = vmatprep.subr.bf16.mxu0 0
      %781 = vmatpush2.bf16.msra.mxu0 0
      %782 = vmatprep.subr.bf16.mxu0 0
      %783 = vmatpush2.bf16.msra.mxu0 %v657
      %784 = vmatprep.subr.bf16.mxu0 0
      %785 = vmatpush2.bf16.msra.mxu0 %v656
      %786 = vmatprep.subr.bf16.mxu0 0
      %787 = vmatpush2.bf16.msra.mxu0 %v655
      %788 = vmatprep.subr.bf16.mxu0 0
      %789 = vmatpush2.bf16.msra.mxu0 %v654
      %790 = vmatprep.mubr.bf16.mxu0 %v672
      %791 = vmatmul.mubr.bf16.gmra.mxu0 %v511
      %v792 = vpop.f32.mrf.mxu0
      %v793 = vadd.f32 %v335, %v792
      %v794 = vpop.f32.mrf.mxu0
      %v795 = vpop.f32.mrf.mxu0
      %v796 = vadd.f32 %v335, %v795
      %v797 = vpop.f32.mrf.mxu0
      %798 = vmatprep.mubr.bf16.mxu0 %v675
      %799 = vmatmul.mubr.bf16.gmra.mxu0 %v513
      %v800 = vpop.f32.mrf.mxu0
      %v801 = vadd.f32 %v335, %v800
      %v802 = vpop.f32.mrf.mxu0
      %v803 = vpop.f32.mrf.mxu0
      %v804 = vadd.f32 %v335, %v803
      %v805 = vpop.f32.mrf.mxu0
      %806 = vmatprep.mubr.bf16.mxu0 %v678
      %807 = vmatmul.mubr.bf16.gmra.mxu0 %v515
      %v808 = vpop.f32.mrf.mxu0
      %v809 = vadd.f32 %v335, %v808
      %v810 = vpop.f32.mrf.mxu0
      %v811 = vpop.f32.mrf.mxu0
      %v812 = vadd.f32 %v335, %v811
      %v813 = vpop.f32.mrf.mxu0
      %814 = vmatprep.mubr.bf16.mxu0 %v681
      %815 = vmatmul.mubr.bf16.gmra.mxu0 %v517
      %v816 = vpop.f32.mrf.mxu0
      %v817 = vadd.f32 %v335, %v816
      %v818 = vpop.f32.mrf.mxu0
      %v819 = vpop.f32.mrf.mxu0
      %v820 = vadd.f32 %v335, %v819
      %v821 = vpop.f32.mrf.mxu0
      %822 = vmatprep.mubr.bf16.mxu0 %v684
      %823 = vmatmul.mubr.bf16.gmra.mxu0 %v519
      %v824 = vpop.f32.mrf.mxu0
      %v825 = vadd.f32 %v335, %v824
      %v826 = vpop.f32.mrf.mxu0
      %v827 = vpop.f32.mrf.mxu0
      %v828 = vadd.f32 %v335, %v827
      %v829 = vpop.f32.mrf.mxu0
      %830 = vmatprep.mubr.bf16.mxu0 %v687
      %831 = vmatmul.mubr.bf16.gmra.mxu0 %v521
      %v832 = vpop.f32.mrf.mxu0
      %v833 = vadd.f32 %v335, %v832
      %v834 = vpop.f32.mrf.mxu0
      %v835 = vpop.f32.mrf.mxu0
      %v836 = vadd.f32 %v335, %v835
      %v837 = vpop.f32.mrf.mxu0
      %838 = vmatprep.mubr.bf16.mxu0 %v690
      %839 = vmatmul.mubr.bf16.gmra.mxu0 %v523
      %v840 = vpop.f32.mrf.mxu0
      %v841 = vadd.f32 %v335, %v840
      %v842 = vpop.f32.mrf.mxu0
      %v843 = vpop.f32.mrf.mxu0
      %v844 = vadd.f32 %v335, %v843
      %v845 = vpop.f32.mrf.mxu0
      %846 = vmatprep.mubr.bf16.mxu0 %v693
      %847 = vmatmul.mubr.bf16.gmra.mxu0 %v525
      %v848 = vpop.f32.mrf.mxu0
      %v849 = vadd.f32 %v335, %v848
      %v850 = vpop.f32.mrf.mxu0
      %v851 = vpop.f32.mrf.mxu0
      %v852 = vadd.f32 %v335, %v851
      %v853 = vpop.f32.mrf.mxu0
      %854 = vmatprep.mubr.bf16.mxu0 %v696
      %855 = vmatmul.mubr.bf16.gmra.mxu0 %v527
      %v856 = vpop.f32.mrf.mxu0
      %v857 = vadd.f32 %v335, %v856
      %v858 = vpop.f32.mrf.mxu0
      %v859 = vpop.f32.mrf.mxu0
      %v860 = vadd.f32 %v335, %v859
      %v861 = vpop.f32.mrf.mxu0
      %862 = vmatprep.mubr.bf16.mxu0 %v699
      %863 = vmatmul.mubr.bf16.gmra.mxu0 %v529
      %v864 = vpop.f32.mrf.mxu0
      %v865 = vadd.f32 %v335, %v864
      %v866 = vpop.f32.mrf.mxu0
      %v867 = vpop.f32.mrf.mxu0
      %v868 = vadd.f32 %v335, %v867
      %v869 = vpop.f32.mrf.mxu0
      %870 = vmatprep.mubr.bf16.mxu0 %v702
      %871 = vmatmul.mubr.bf16.gmra.mxu0 %v531
      %v872 = vpop.f32.mrf.mxu0
      %v873 = vadd.f32 %v335, %v872
      %v874 = vpop.f32.mrf.mxu0
      %v875 = vpop.f32.mrf.mxu0
      %v876 = vadd.f32 %v335, %v875
      %v877 = vpop.f32.mrf.mxu0
      %878 = vmatprep.mubr.bf16.mxu0 %v705
      %879 = vmatmul.mubr.bf16.gmra.mxu0 %v533
      %v880 = vpop.f32.mrf.mxu0
      %v881 = vadd.f32 %v335, %v880
      %v882 = vpop.f32.mrf.mxu0
      %v883 = vpop.f32.mrf.mxu0
      %v884 = vadd.f32 %v335, %v883
      %v885 = vpop.f32.mrf.mxu0
      %886 = vmatprep.mubr.bf16.mxu0 %v708
      %887 = vmatmul.mubr.bf16.gmra.mxu0 %v535
      %v888 = vpop.f32.mrf.mxu0
      %v889 = vadd.f32 %v335, %v888
      %v890 = vpop.f32.mrf.mxu0
      %v891 = vpop.f32.mrf.mxu0
      %v892 = vadd.f32 %v335, %v891
      %v893 = vpop.f32.mrf.mxu0
      %894 = vmatprep.mubr.bf16.mxu0 %v711
      %895 = vmatmul.mubr.bf16.gmra.mxu0 %v537
      %v896 = vpop.f32.mrf.mxu0
      %v897 = vadd.f32 %v335, %v896
      %v898 = vpop.f32.mrf.mxu0
      %v899 = vpop.f32.mrf.mxu0
      %v900 = vadd.f32 %v335, %v899
      %v901 = vpop.f32.mrf.mxu0
      %902 = vmatprep.mubr.bf16.mxu0 %v714
      %903 = vmatmul.mubr.bf16.gmra.mxu0 %v539
      %v904 = vpop.f32.mrf.mxu0
      %v905 = vadd.f32 %v335, %v904
      %v906 = vpop.f32.mrf.mxu0
      %v907 = vpop.f32.mrf.mxu0
      %v908 = vadd.f32 %v335, %v907
      %v909 = vpop.f32.mrf.mxu0
      %910 = vmatprep.mubr.bf16.mxu0 %v717
      %911 = vmatmul.mubr.bf16.gmra.mxu0 %v541
      %v912 = vpop.f32.mrf.mxu0
      %v913 = vadd.f32 %v335, %v912
      %v914 = vpop.f32.mrf.mxu0
      %v915 = vpop.f32.mrf.mxu0
      %v916 = vadd.f32 %v335, %v915
      %v917 = vpop.f32.mrf.mxu0
      %918 = vmatprep.mubr.bf16.mxu0 %v720
      %919 = vmatmul.mubr.bf16.gmra.mxu0 %v543
      %v920 = vpop.f32.mrf.mxu0
      %v921 = vadd.f32 %v335, %v920
      %v922 = vpop.f32.mrf.mxu0
      %v923 = vpop.f32.mrf.mxu0
      %v924 = vadd.f32 %v335, %v923
      %v925 = vpop.f32.mrf.mxu0
      %926 = vmatprep.mubr.bf16.mxu0 %v723
      %927 = vmatmul.mubr.bf16.gmra.mxu0 %v545
      %v928 = vpop.f32.mrf.mxu0
      %v929 = vadd.f32 %v335, %v928
      %v930 = vpop.f32.mrf.mxu0
      %v931 = vpop.f32.mrf.mxu0
      %v932 = vadd.f32 %v335, %v931
      %v933 = vpop.f32.mrf.mxu0
      %934 = vmatprep.mubr.bf16.mxu0 %v726
      %935 = vmatmul.mubr.bf16.gmra.mxu0 %v547
      %v936 = vpop.f32.mrf.mxu0
      %v937 = vadd.f32 %v335, %v936
      %v938 = vpop.f32.mrf.mxu0
      %v939 = vpop.f32.mrf.mxu0
      %v940 = vadd.f32 %v335, %v939
      %v941 = vpop.f32.mrf.mxu0
      %942 = vmatprep.mubr.bf16.mxu0 %v729
      %943 = vmatmul.mubr.bf16.gmra.mxu0 %v549
      %v944 = vpop.f32.mrf.mxu0
      %v945 = vadd.f32 %v335, %v944
      %v946 = vpop.f32.mrf.mxu0
      %v947 = vpop.f32.mrf.mxu0
      %v948 = vadd.f32 %v335, %v947
      %v949 = vpop.f32.mrf.mxu0
      %950 = vmatprep.mubr.bf16.mxu0 %v732
      %951 = vmatmul.mubr.bf16.gmra.mxu0 %v551
      %v952 = vpop.f32.mrf.mxu0
      %v953 = vadd.f32 %v335, %v952
      %v954 = vpop.f32.mrf.mxu0
      %v955 = vpop.f32.mrf.mxu0
      %v956 = vadd.f32 %v335, %v955
      %v957 = vpop.f32.mrf.mxu0
      %958 = vmatprep.mubr.bf16.mxu0 %v735
      %959 = vmatmul.mubr.bf16.gmra.mxu0 %v553
      %v960 = vpop.f32.mrf.mxu0
      %v961 = vadd.f32 %v335, %v960
      %v962 = vpop.f32.mrf.mxu0
      %v963 = vpop.f32.mrf.mxu0
      %v964 = vadd.f32 %v335, %v963
      %v965 = vpop.f32.mrf.mxu0
      %966 = vmatprep.mubr.bf16.mxu0 %v738
      %967 = vmatmul.mubr.bf16.gmra.mxu0 %v555
      %v968 = vpop.f32.mrf.mxu0
      %v969 = vadd.f32 %v335, %v968
      %v970 = vpop.f32.mrf.mxu0
      %v971 = vpop.f32.mrf.mxu0
      %v972 = vadd.f32 %v335, %v971
      %v973 = vpop.f32.mrf.mxu0
      %974 = vmatprep.mubr.bf16.mxu0 %v741
      %975 = vmatmul.mubr.bf16.gmra.mxu0 %v557
      %v976 = vpop.f32.mrf.mxu0
      %v977 = vadd.f32 %v335, %v976
      %v978 = vpop.f32.mrf.mxu0
      %v979 = vpop.f32.mrf.mxu0
      %v980 = vadd.f32 %v335, %v979
      %v981 = vpop.f32.mrf.mxu0
      %982 = vmatprep.mubr.bf16.mxu0 %v744
      %983 = vmatmul.mubr.bf16.gmra.mxu0 %v559
      %v984 = vpop.f32.mrf.mxu0
      %v985 = vadd.f32 %v335, %v984
      %v986 = vpop.f32.mrf.mxu0
      %v987 = vpop.f32.mrf.mxu0
      %v988 = vadd.f32 %v335, %v987
      %v989 = vpop.f32.mrf.mxu0
      %990 = vmatprep.mubr.bf16.mxu0 %v747
      %991 = vmatmul.mubr.bf16.gmra.mxu0 %v561
      %v992 = vpop.f32.mrf.mxu0
      %v993 = vadd.f32 %v335, %v992
      %v994 = vpop.f32.mrf.mxu0
      %v995 = vpop.f32.mrf.mxu0
      %v996 = vadd.f32 %v335, %v995
      %v997 = vpop.f32.mrf.mxu0
      %998 = vmatprep.mubr.bf16.mxu0 %v750
      %999 = vmatmul.mubr.bf16.gmra.mxu0 %v563
      %v1000 = vpop.f32.mrf.mxu0
      %v1001 = vadd.f32 %v335, %v1000
      %v1002 = vpop.f32.mrf.mxu0
      %v1003 = vpop.f32.mrf.mxu0
      %v1004 = vadd.f32 %v335, %v1003
      %v1005 = vpop.f32.mrf.mxu0
      %1006 = vmatprep.mubr.bf16.mxu0 %v753
      %1007 = vmatmul.mubr.bf16.gmra.mxu0 %v565
      %v1008 = vpop.f32.mrf.mxu0
      %v1009 = vadd.f32 %v335, %v1008
      %v1010 = vpop.f32.mrf.mxu0
      %v1011 = vpop.f32.mrf.mxu0
      %v1012 = vadd.f32 %v335, %v1011
      %v1013 = vpop.f32.mrf.mxu0
      %1014 = vmatprep.mubr.bf16.mxu0 %v756
      %1015 = vmatmul.mubr.bf16.gmra.mxu0 %v567
      %v1016 = vpop.f32.mrf.mxu0
      %v1017 = vadd.f32 %v335, %v1016
      %v1018 = vpop.f32.mrf.mxu0
      %v1019 = vpop.f32.mrf.mxu0
      %v1020 = vadd.f32 %v335, %v1019
      %v1021 = vpop.f32.mrf.mxu0
      %1022 = vdwg.mxu0
      %v1023 = vmax.f32 %v793, 0.0
      %v1024 = vmax.f32 %v796, 0.0
      %v1025 = vmax.f32 %v801, 0.0
      %v1026 = vmax.f32 %v804, 0.0
      %v1027 = vmax.f32 %v809, 0.0
      %v1028 = vmax.f32 %v812, 0.0
      %v1029 = vmax.f32 %v817, 0.0
      %v1030 = vmax.f32 %v820, 0.0
      %v1031 = vmax.f32 %v825, 0.0
      %v1032 = vmax.f32 %v828, 0.0
      %v1033 = vmax.f32 %v833, 0.0
      %v1034 = vmax.f32 %v836, 0.0
      %v1035 = vmax.f32 %v841, 0.0
      %v1036 = vmax.f32 %v844, 0.0
      %v1037 = vmax.f32 %v849, 0.0
      %v1038 = vmax.f32 %v852, 0.0
      %v1039 = vmax.f32 %v857, 0.0
      %v1040 = vmax.f32 %v860, 0.0
      %v1041 = vmax.f32 %v865, 0.0
      %v1042 = vmax.f32 %v868, 0.0
      %v1043 = vmax.f32 %v873, 0.0
      %v1044 = vmax.f32 %v876, 0.0
      %v1045 = vmax.f32 %v881, 0.0
      %v1046 = vmax.f32 %v884, 0.0
      %v1047 = vmax.f32 %v889, 0.0
      %v1048 = vmax.f32 %v892, 0.0
      %v1049 = vmax.f32 %v897, 0.0
      %v1050 = vmax.f32 %v900, 0.0
      %v1051 = vmax.f32 %v905, 0.0
      %v1052 = vmax.f32 %v908, 0.0
      %v1053 = vmax.f32 %v913, 0.0
      %v1054 = vmax.f32 %v916, 0.0
      %v1055 = vmax.f32 %v921, 0.0
      %v1056 = vmax.f32 %v924, 0.0
      %v1057 = vmax.f32 %v929, 0.0
      %v1058 = vmax.f32 %v932, 0.0
      %v1059 = vmax.f32 %v937, 0.0
      %v1060 = vmax.f32 %v940, 0.0
      %v1061 = vmax.f32 %v945, 0.0
      %v1062 = vmax.f32 %v948, 0.0
      %v1063 = vmax.f32 %v953, 0.0
      %v1064 = vmax.f32 %v956, 0.0
      %v1065 = vmax.f32 %v961, 0.0
      %v1066 = vmax.f32 %v964, 0.0
      %v1067 = vmax.f32 %v969, 0.0
      %v1068 = vmax.f32 %v972, 0.0
      %v1069 = vmax.f32 %v977, 0.0
      %v1070 = vmax.f32 %v980, 0.0
      %v1071 = vmax.f32 %v985, 0.0
      %v1072 = vmax.f32 %v988, 0.0
      %v1073 = vmax.f32 %v993, 0.0
      %v1074 = vmax.f32 %v996, 0.0
      %v1075 = vmax.f32 %v1001, 0.0
      %v1076 = vmax.f32 %v1004, 0.0
      %v1077 = vmax.f32 %v1009, 0.0
      %v1078 = vmax.f32 %v1012, 0.0
      %v1079 = vmax.f32 %v1017, 0.0
      %v1080 = vmax.f32 %v1020, 0.0
      %v1081 = vpack.c.bf16 %v1024, %v1023
      %v1082 = vpack.c.bf16 %v1026, %v1025
      %v1083 = vpack.c.bf16 %v1028, %v1027
      %v1084 = vpack.c.bf16 %v1030, %v1029
      %v1085 = vpack.c.bf16 %v1032, %v1031
      %v1086 = vpack.c.bf16 %v1034, %v1033
      %v1087 = vpack.c.bf16 %v1036, %v1035
      %v1088 = vpack.c.bf16 %v1038, %v1037
      %v1089 = vpack.c.bf16 %v1040, %v1039
      %v1090 = vpack.c.bf16 %v1042, %v1041
      %v1091 = vpack.c.bf16 %v1044, %v1043
      %v1092 = vpack.c.bf16 %v1046, %v1045
      %v1093 = vpack.c.bf16 %v1048, %v1047
      %v1094 = vpack.c.bf16 %v1050, %v1049
      %v1095 = vpack.c.bf16 %v1052, %v1051
      %v1096 = vpack.c.bf16 %v1054, %v1053
      %v1097 = vpack.c.bf16 %v1056, %v1055
      %v1098 = vpack.c.bf16 %v1058, %v1057
      %v1099 = vpack.c.bf16 %v1060, %v1059
      %v1100 = vpack.c.bf16 %v1062, %v1061
      %v1101 = vpack.c.bf16 %v1064, %v1063
      %v1102 = vpack.c.bf16 %v1066, %v1065
      %v1103 = vpack.c.bf16 %v1068, %v1067
      %v1104 = vpack.c.bf16 %v1070, %v1069
      %v1105 = vpack.c.bf16 %v1072, %v1071
      %v1106 = vpack.c.bf16 %v1074, %v1073
      %v1107 = vpack.c.bf16 %v1076, %v1075
      %v1108 = vpack.c.bf16 %v1078, %v1077
      %v1109 = vpack.c.bf16 %v1080, %v1079
      %v1139 = vunpack.c.l.b16 %v1081
      %v1140 = vunpack.c.h.b16 %v1081
      %v1141 = vunpack.c.l.b16 %v1082
      %v1142 = vunpack.c.h.b16 %v1082
      %v1143 = vunpack.c.l.b16 %v1083
      %v1144 = vunpack.c.h.b16 %v1083
      %v1145 = vunpack.c.l.b16 %v1084
      %v1146 = vunpack.c.h.b16 %v1084
      %v1147 = vunpack.c.l.b16 %v1085
      %v1148 = vunpack.c.h.b16 %v1085
      %v1149 = vunpack.c.l.b16 %v1086
      %v1150 = vunpack.c.h.b16 %v1086
      %v1151 = vunpack.c.l.b16 %v1087
      %v1152 = vunpack.c.h.b16 %v1087
      %v1153 = vunpack.c.l.b16 %v1088
      %v1154 = vunpack.c.h.b16 %v1088
      %v1155 = vunpack.c.l.b16 %v1089
      %v1156 = vunpack.c.h.b16 %v1089
      %v1157 = vunpack.c.l.b16 %v1090
      %v1158 = vunpack.c.h.b16 %v1090
      %v1159 = vunpack.c.l.b16 %v1091
      %v1160 = vunpack.c.h.b16 %v1091
      %v1161 = vunpack.c.l.b16 %v1092
      %v1162 = vunpack.c.h.b16 %v1092
      %v1163 = vunpack.c.l.b16 %v1093
      %v1164 = vunpack.c.h.b16 %v1093
      %v1165 = vunpack.c.l.b16 %v1094
      %v1166 = vunpack.c.h.b16 %v1094
      %v1167 = vunpack.c.l.b16 %v1095
      %v1168 = vunpack.c.h.b16 %v1095
      %v1169 = vunpack.c.l.b16 %v1096
      %v1170 = vunpack.c.h.b16 %v1096
      %v1171 = vunpack.c.l.b16 %v1097
      %v1172 = vunpack.c.h.b16 %v1097
      %v1173 = vunpack.c.l.b16 %v1098
      %v1174 = vunpack.c.h.b16 %v1098
      %v1175 = vunpack.c.l.b16 %v1099
      %v1176 = vunpack.c.h.b16 %v1099
      %v1177 = vunpack.c.l.b16 %v1100
      %v1178 = vunpack.c.h.b16 %v1100
      %v1179 = vunpack.c.l.b16 %v1101
      %v1180 = vunpack.c.h.b16 %v1101
      %v1181 = vunpack.c.l.b16 %v1102
      %v1182 = vunpack.c.h.b16 %v1102
      %v1183 = vunpack.c.l.b16 %v1103
      %v1184 = vunpack.c.h.b16 %v1103
      %v1185 = vunpack.c.l.b16 %v1104
      %v1186 = vunpack.c.h.b16 %v1104
      %v1187 = vunpack.c.l.b16 %v1105
      %v1188 = vunpack.c.h.b16 %v1105
      %v1189 = vunpack.c.l.b16 %v1106
      %v1190 = vunpack.c.h.b16 %v1106
      %v1191 = vunpack.c.l.b16 %v1107
      %v1192 = vunpack.c.h.b16 %v1107
      %v1193 = vunpack.c.l.b16 %v1108
      %v1194 = vunpack.c.h.b16 %v1108
      %v1195 = vunpack.c.l.b16 %v1109
      %v1196 = vunpack.c.h.b16 %v1109
      %v1197 = vpack.c.b16 %v1139, %v1139
      %v1198 = vpack.c.b16 %v1140, %v1140
      %v1199 = vpack.c.b16 %v1141, %v1141
      %v1200 = vpack.c.b16 %v1142, %v1142
      %v1201 = vpack.c.b16 %v1143, %v1143
      %v1202 = vpack.c.b16 %v1144, %v1144
      %v1203 = vpack.c.b16 %v1145, %v1145
      %v1204 = vpack.c.b16 %v1146, %v1146
      %v1205 = vpack.c.b16 %v1147, %v1147
      %v1206 = vpack.c.b16 %v1148, %v1148
      %v1207 = vpack.c.b16 %v1149, %v1149
      %v1208 = vpack.c.b16 %v1150, %v1150
      %v1209 = vpack.c.b16 %v1151, %v1151
      %v1210 = vpack.c.b16 %v1152, %v1152
      %v1211 = vpack.c.b16 %v1153, %v1153
      %v1212 = vpack.c.b16 %v1154, %v1154
      %v1213 = vpack.c.b16 %v1155, %v1155
      %v1214 = vpack.c.b16 %v1156, %v1156
      %v1215 = vpack.c.b16 %v1157, %v1157
      %v1216 = vpack.c.b16 %v1158, %v1158
      %v1217 = vpack.c.b16 %v1159, %v1159
      %v1218 = vpack.c.b16 %v1160, %v1160
      %v1219 = vpack.c.b16 %v1161, %v1161
      %v1220 = vpack.c.b16 %v1162, %v1162
      %v1221 = vpack.c.b16 %v1163, %v1163
      %v1222 = vpack.c.b16 %v1164, %v1164
      %v1223 = vpack.c.b16 %v1165, %v1165
      %v1224 = vpack.c.b16 %v1166, %v1166
      %v1225 = vpack.c.b16 %v1167, %v1167
      %v1226 = vpack.c.b16 %v1168, %v1168
      %v1227 = vpack.c.b16 %v1169, %v1169
      %v1228 = vpack.c.b16 %v1170, %v1170
      %v1229 = vpack.c.b16 %v1171, %v1171
      %v1230 = vpack.c.b16 %v1172, %v1172
      %v1231 = vpack.c.b16 %v1173, %v1173
      %v1232 = vpack.c.b16 %v1174, %v1174
      %v1233 = vpack.c.b16 %v1175, %v1175
      %v1234 = vpack.c.b16 %v1176, %v1176
      %v1235 = vpack.c.b16 %v1177, %v1177
      %v1236 = vpack.c.b16 %v1178, %v1178
      %v1237 = vpack.c.b16 %v1179, %v1179
      %v1238 = vpack.c.b16 %v1180, %v1180
      %v1239 = vpack.c.b16 %v1181, %v1181
      %v1240 = vpack.c.b16 %v1182, %v1182
      %v1241 = vpack.c.b16 %v1183, %v1183
      %v1242 = vpack.c.b16 %v1184, %v1184
      %v1243 = vpack.c.b16 %v1185, %v1185
      %v1244 = vpack.c.b16 %v1186, %v1186
      %v1245 = vpack.c.b16 %v1187, %v1187
      %v1246 = vpack.c.b16 %v1188, %v1188
      %v1247 = vpack.c.b16 %v1189, %v1189
      %v1248 = vpack.c.b16 %v1190, %v1190
      %v1249 = vpack.c.b16 %v1191, %v1191
      %v1250 = vpack.c.b16 %v1192, %v1192
      %v1251 = vpack.c.b16 %v1193, %v1193
      %v1252 = vpack.c.b16 %v1194, %v1194
      %v1253 = vpack.c.b16 %v1195, %v1195
      %v1254 = vpack.c.b16 %v1196, %v1196
      %1313 = vst [vmem:[%s245] sm:$0xf] %v1197
      %1314 = vst [vmem:[%s245 + $0x4] sm:$0xf] %v1198
      %1315 = vst [vmem:[%s245 + $0x8] sm:$0xf] %v1199
      %1316 = vst [vmem:[%s245 + $0xc] sm:$0xf] %v1200
      %1317 = vst [vmem:[%s245 + $0x10] sm:$0xf] %v1201
      %1318 = vst [vmem:[%s245 + $0x14] sm:$0xf] %v1202
      %1319 = vst [vmem:[%s245 + $0x18] sm:$0xf] %v1203
      %1320 = vst [vmem:[%s245 + $0x1c] sm:$0xf] %v1204
      %1321 = vst [vmem:[%s245 + $0x20] sm:$0xf] %v1205
      %1322 = vst [vmem:[%s245 + $0x24] sm:$0xf] %v1206
      %1323 = vst [vmem:[%s245 + $0x28] sm:$0xf] %v1207
      %1324 = vst [vmem:[%s245 + $0x2c] sm:$0xf] %v1208
      %1325 = vst [vmem:[%s245 + $0x30] sm:$0xf] %v1209
      %1326 = vst [vmem:[%s245 + $0x34] sm:$0xf] %v1210
      %1327 = vst [vmem:[%s245 + $0x38] sm:$0xf] %v1211
      %1328 = vst [vmem:[%s245 + $0x3c] sm:$0xf] %v1212
      %1329 = vst [vmem:[%s245 + $0x40] sm:$0xf] %v1213
      %1330 = vst [vmem:[%s245 + $0x44] sm:$0xf] %v1214
      %1331 = vst [vmem:[%s245 + $0x48] sm:$0xf] %v1215
      %1332 = vst [vmem:[%s245 + $0x4c] sm:$0xf] %v1216
      %1333 = vst [vmem:[%s245 + $0x50] sm:$0xf] %v1217
      %1334 = vst [vmem:[%s245 + $0x54] sm:$0xf] %v1218
      %1335 = vst [vmem:[%s245 + $0x58] sm:$0xf] %v1219
      %1336 = vst [vmem:[%s245 + $0x5c] sm:$0xf] %v1220
      %1337 = vst [vmem:[%s245 + $0x60] sm:$0xf] %v1221
      %1338 = vst [vmem:[%s245 + $0x64] sm:$0xf] %v1222
      %1339 = vst [vmem:[%s245 + $0x68] sm:$0xf] %v1223
      %1340 = vst [vmem:[%s245 + $0x6c] sm:$0xf] %v1224
      %1341 = vst [vmem:[%s245 + $0x70] sm:$0xf] %v1225
      %1342 = vst [vmem:[%s245 + $0x74] sm:$0xf] %v1226
      %1343 = vst [vmem:[%s245 + $0x78] sm:$0xf] %v1227
      %1344 = vst [vmem:[%s245 + $0x7c] sm:$0xf] %v1228
      %1345 = vst [vmem:[%s245 + $0x80] sm:$0xf] %v1229
      %1346 = vst [vmem:[%s245 + $0x84] sm:$0xf] %v1230
      %1347 = vst [vmem:[%s245 + $0x88] sm:$0xf] %v1231
      %1348 = vst [vmem:[%s245 + $0x8c] sm:$0xf] %v1232
      %1349 = vst [vmem:[%s245 + $0x90] sm:$0xf] %v1233
      %1350 = vst [vmem:[%s245 + $0x94] sm:$0xf] %v1234
      %1351 = vst [vmem:[%s245 + $0x98] sm:$0xf] %v1235
      %1352 = vst [vmem:[%s245 + $0x9c] sm:$0xf] %v1236
      %1353 = vst [vmem:[%s245 + $0xa0] sm:$0xf] %v1237
      %1354 = vst [vmem:[%s245 + $0xa4] sm:$0xf] %v1238
      %1355 = vst [vmem:[%s245 + $0xa8] sm:$0xf] %v1239
      %1356 = vst [vmem:[%s245 + $0xac] sm:$0xf] %v1240
      %1357 = vst [vmem:[%s245 + $0xb0] sm:$0xf] %v1241
      %1358 = vst [vmem:[%s245 + $0xb4] sm:$0xf] %v1242
      %1359 = vst [vmem:[%s245 + $0xb8] sm:$0xf] %v1243
      %1360 = vst [vmem:[%s245 + $0xbc] sm:$0xf] %v1244
      %1361 = vst [vmem:[%s245 + $0xc0] sm:$0xf] %v1245
      %1362 = vst [vmem:[%s245 + $0xc4] sm:$0xf] %v1246
      %1363 = vst [vmem:[%s245 + $0xc8] sm:$0xf] %v1247
      %1364 = vst [vmem:[%s245 + $0xcc] sm:$0xf] %v1248
      %1365 = vst [vmem:[%s245 + $0xd0] sm:$0xf] %v1249
      %1366 = vst [vmem:[%s245 + $0xd4] sm:$0xf] %v1250
      %1367 = vst [vmem:[%s245 + $0xd8] sm:$0xf] %v1251
      %1368 = vst [vmem:[%s245 + $0xdc] sm:$0xf] %v1252
      %1369 = vst [vmem:[%s245 + $0xe0] sm:$0xf] %v1253
      %1370 = vst [vmem:[%s245 + $0xe4] sm:$0xf] %v1254
      %s1371 = smul.u32 58, %s19
      %p1372 = scmp.lt.s32.totalorder %s18, 1
      %s1373 = scalar_select %p1372, %s18, 1
      %p1374 = scmp.lt.s32.totalorder %s1371, 57
      %s1375 = scalar_select %p1374, %s1371, 57
      %s1376 = smul.addr %s1373, 58
      %s1377 = sadd.s32 %s1375, %s1376
      %s1378 = smul.addr %s1377, 4
      %s1379 = scalar_lea.vmem %s3, %s1378
      // Predicated region
      $region33: #{nature_att_encoder_forward.4} parent=31 // pred_check
        %p1380 = pneg %p126
      $region34: #{nature_att_encoder_forward.4} parent=31 // pred_check_branch
        %1382 = sbr.rel (%p1380) target = $region36
      $region35: #{nature_att_encoder_forward.4} parent=31 // pred_region
        %s1383 = smul.u32 58, %s19
      $region36: #{nature_att_encoder_forward.4} parent=31 // pred_fallthru
        _
    $region32: #{nature_att_encoder_forward.4} parent=5 // pred_fallthru
      _
    %p1384 = scmp.le.s32.totalorder 2, %s9
    // Predicated region
    $region37: #{nature_att_encoder_forward.4} parent=5 // pred_check
      %p1385 = pneg %p1384
    $region38: #{nature_att_encoder_forward.4} parent=5 // pred_check_branch
      %1387 = sbr.rel (%p1385) target = $region40
    $region39: #{nature_att_encoder_forward.4} parent=5 // pred_region
      %s1388 = ssub.s32 %s9, 2
      // Predicated region
      $region41: #{nature_att_encoder_forward.4} parent=39 // pred_check
        %p1389 = pneg %p132
      $region42: #{nature_att_encoder_forward.4} parent=39 // pred_check_branch
        %1391 = sbr.rel (%p1389) target = $region44
      $region43: #{nature_att_encoder_forward.4} parent=39 // pred_region
        %s1392 = smul.u32 58, %s21
        %p1393 = scmp.lt.s32.totalorder %s20, 1
        %s1394 = scalar_select %p1393, %s20, 1
        %p1395 = scmp.lt.s32.totalorder %s1392, 57
        %s1396 = scalar_select %p1395, %s1392, 57
        %s1397 = smul.addr %s1394, 58
        %s1398 = sadd.s32 %s1396, %s1397
        %s1399 = smul.addr %s1398, 4
        %s1400 = scalar_lea.vmem %s3, %s1399
      $region44: #{nature_att_encoder_forward.4} parent=39 // pred_fallthru
        _
    $region40: #{nature_att_encoder_forward.4} parent=5 // pred_fallthru
      _
  $region6: #{nature_att_encoder_forward.4} parent=0 // loop_footer
    %s13 = sadd.s32 1, %s9
  $region7: #{nature_att_encoder_forward.4} parent=0 // loop_footer_branch
    %8 = sbr.rel target = $region3
  $region8: #{nature_att_encoder_forward.4} parent=0 // loop_exit
    _

// kernel: nature_att_encoder_forward.5
$region0: #{nature_att_encoder_forward.5}
  #allocation0 [shape = 'u32[]', space=smem, size = 0x4, offset = 0x4, fixed_abs, tag = 'smem constant byte address 0x4 - core index']
  #allocation1 [shape = 'u32[144,128]{1,0:T(1,128)}', space=vmem, size = 0x12000, scoped, tag = 'internal scratch']
  %s0 = inlined_call_operand.vmem [shape: bf16[2,80,512], index: 0, kind: input, shape index: {}]
  %s1 = inlined_call_operand.vmem [shape: bf16[2,512,128], index: 1, kind: input, shape index: {}]
  %s2 = inlined_call_operand.vmem [shape: f32[2,1,128], index: 2, kind: input, shape index: {}]
  %s3 = inlined_call_operand.vmem [shape: bf16[2,80,128], index: 3, kind: output, shape index: {}]
  %s4 = sld [smem:[#allocation0]]
  $region45: #{nature_att_encoder_forward.5} parent=0
    _
  %s6 = ssub.s32 1, %s4
  %s7 = scalar_select 0, %s6, %s4
  loop: start=0, step=1, limit=4
  $region2: #{nature_att_encoder_forward.5} parent=0 // loop_pre_header
    _
  $region3: #{nature_att_encoder_forward.5} parent=0 // loop_header
    %s9 = sphi 0, %s13
    %p10 = scmp.ge.s32.totalorder %s9, 4
    %s16 = sphi 0, %s28
    %s17 = sphi 0, %s24
    %s18 = sphi 0, %s16
    %s19 = sphi 0, %s17
    %s20 = sphi 0, %s18
    %s21 = sphi 0, %s19
    %s33 = sphi 0, %s35
    %s36 = sphi 0, %s33
    %s37 = sphi 0, %s36
    %s53 = sphi 0, %s37
    %s59 = sphi 0, %s61
    %s62 = sphi 0, %s59
    %s63 = sphi 0, %s62
    %s79 = sphi 0, %s63
    %s85 = sphi 0, %s87
    %s88 = sphi 0, %s85
    %s89 = sphi 0, %s88
    %s105 = sphi 0, %s89
    %s113 = sphi 0, %s115
    %s116 = sphi 0, %s113
    %s117 = sphi 0, %s116
    %s133 = sphi 0, %s117
  $region4: #{nature_att_encoder_forward.5} parent=0 // loop_header_branch
    %12 = sbr.rel (%p10) target = $region8
  $region5: #{nature_att_encoder_forward.5} parent=0 // loop_body
    %s14 = ssub.s32 %s9, 1
    %s15 = ssub.s32 %s9, 2
    %s22 = sadd.s32 1, %s17
    %p23 = scmp.ge.s32.totalorder %s22, 1
    %s24 = scalar_select %p23, 0, %s22
    %s25 = sadd.s32 1, %s16
    %s26 = scalar_select %p23, %s25, %s16
    %p27 = scmp.ge.s32.totalorder %s26, 2
    %s28 = scalar_select %p27, 0, %s26
    %s29 = ssub.s32 %s16, %s28
    %s30 = ssub.s32 %s17, %s24
    %s31 = sor.u32 %s29, %s30
    %p32 = scmp.eq.s32.totalorder %s31, 0
    %s34 = sadd.s32 %s33, 1
    %s35 = scalar_select %p32, %s33, %s34
    %p38 = pneg %p32
    %p39 = scmp.eq.s32.totalorder %s9, 1
    %p40 = por %p38, %p39
    %p41 = scmp.ne.s32.totalorder %s33, %s36
    %p42 = scmp.eq.s32.totalorder %s9, 0
    %p43 = por %p41, %p42
    %p44 = scmp.ne.s32.totalorder %s33, %s36
    %p45 = scmp.eq.s32.totalorder %s14, 1
    %p46 = por %p44, %p45
    %p47 = scmp.ne.s32.totalorder %s36, %s37
    %p48 = scmp.eq.s32.totalorder %s14, 0
    %p49 = por %p47, %p48
    %p50 = scmp.ne.s32.totalorder %s36, %s37
    %p51 = scmp.eq.s32.totalorder %s15, 1
    %p52 = por %p50, %p51
    %p54 = scmp.ne.s32.totalorder %s37, %s53
    %p55 = scmp.eq.s32.totalorder %s15, 0
    %p56 = por %p54, %p55
    %s57 = ssub.s32 %s16, %s28
    %p58 = scmp.eq.s32.totalorder %s57, 0
    %s60 = sadd.s32 %s59, 1
    %s61 = scalar_select %p58, %s59, %s60
    %p64 = pneg %p58
    %p65 = scmp.eq.s32.totalorder %s9, 1
    %p66 = por %p64, %p65
    %p67 = scmp.ne.s32.totalorder %s59, %s62
    %p68 = scmp.eq.s32.totalorder %s9, 0
    %p69 = por %p67, %p68
    %p70 = scmp.ne.s32.totalorder %s59, %s62
    %p71 = scmp.eq.s32.totalorder %s14, 1
    %p72 = por %p70, %p71
    %p73 = scmp.ne.s32.totalorder %s62, %s63
    %p74 = scmp.eq.s32.totalorder %s14, 0
    %p75 = por %p73, %p74
    %p76 = scmp.ne.s32.totalorder %s62, %s63
    %p77 = scmp.eq.s32.totalorder %s15, 1
    %p78 = por %p76, %p77
    %p80 = scmp.ne.s32.totalorder %s63, %s79
    %p81 = scmp.eq.s32.totalorder %s15, 0
    %p82 = por %p80, %p81
    %s83 = ssub.s32 %s16, %s28
    %p84 = scmp.eq.s32.totalorder %s83, 0
    %s86 = sadd.s32 %s85, 1
    %s87 = scalar_select %p84, %s85, %s86
    %p90 = pneg %p84
    %p91 = scmp.eq.s32.totalorder %s9, 1
    %p92 = por %p90, %p91
    %p93 = scmp.ne.s32.totalorder %s85, %s88
    %p94 = scmp.eq.s32.totalorder %s9, 0
    %p95 = por %p93, %p94
    %p96 = scmp.ne.s32.totalorder %s85, %s88
    %p97 = scmp.eq.s32.totalorder %s14, 1
    %p98 = por %p96, %p97
    %p99 = scmp.ne.s32.totalorder %s88, %s89
    %p100 = scmp.eq.s32.totalorder %s14, 0
    %p101 = por %p99, %p100
    %p102 = scmp.ne.s32.totalorder %s88, %s89
    %p103 = scmp.eq.s32.totalorder %s15, 1
    %p104 = por %p102, %p103
    %p106 = scmp.ne.s32.totalorder %s89, %s105
    %p107 = scmp.eq.s32.totalorder %s15, 0
    %p108 = por %p106, %p107
    %s109 = ssub.s32 %s16, %s28
    %s110 = ssub.s32 %s17, %s24
    %s111 = sor.u32 %s109, %s110
    %p112 = scmp.eq.s32.totalorder %s111, 0
    %s114 = sadd.s32 %s113, 1
    %s115 = scalar_select %p112, %s113, %s114
    %p118 = pneg %p112
    %p119 = scmp.eq.s32.totalorder %s9, 1
    %p120 = por %p118, %p119
    %p121 = scmp.ne.s32.totalorder %s113, %s116
    %p122 = scmp.eq.s32.totalorder %s9, 0
    %p123 = por %p121, %p122
    %p124 = scmp.ne.s32.totalorder %s113, %s116
    %p125 = scmp.eq.s32.totalorder %s14, 1
    %p126 = por %p124, %p125
    %p127 = scmp.ne.s32.totalorder %s116, %s117
    %p128 = scmp.eq.s32.totalorder %s14, 0
    %p129 = por %p127, %p128
    %p130 = scmp.ne.s32.totalorder %s116, %s117
    %p131 = scmp.eq.s32.totalorder %s15, 1
    %p132 = por %p130, %p131
    %p134 = scmp.ne.s32.totalorder %s117, %s133
    %p135 = scmp.eq.s32.totalorder %s15, 0
    %p136 = por %p134, %p135
    %p137 = scmp.le.s32.totalorder 1, %s9
    %p138 = scmp.lt.s32.totalorder %s9, 3
    %p139 = pnand %p137, %p138
    %p140 = pneg %p139
    // Predicated region
    $region9: #{nature_att_encoder_forward.5} parent=5 // pred_check
      _
    $region10: #{nature_att_encoder_forward.5} parent=5 // pred_check_branch
      %142 = sbr.rel (%p139) target = $region12
    $region11: #{nature_att_encoder_forward.5} parent=5 // pred_region
      %s143 = ssub.s32 %s9, 1
    $region12: #{nature_att_encoder_forward.5} parent=5 // pred_fallthru
      _
    %p144 = scmp.lt.s32.totalorder %s9, 2
    // Predicated region
    $region13: #{nature_att_encoder_forward.5} parent=5 // pred_check
      %p145 = pneg %p144
    $region14: #{nature_att_encoder_forward.5} parent=5 // pred_check_branch
      %147 = sbr.rel (%p145) target = $region16
    $region15: #{nature_att_encoder_forward.5} parent=5 // pred_region
      // Predicated region
      $region17: #{nature_att_encoder_forward.5} parent=15 // pred_check
        %p148 = pneg %p43
      $region18: #{nature_att_encoder_forward.5} parent=15 // pred_check_branch
        %150 = sbr.rel (%p148) target = $region20
      $region19: #{nature_att_encoder_forward.5} parent=15 // pred_region
        %s151 = smul.u32 10, %s17
        %p152 = scmp.lt.s32.totalorder %s16, 1
        %s153 = scalar_select %p152, %s16, 1
        %p154 = scmp.lt.s32.totalorder %s151, 9
        %s155 = scalar_select %p154, %s151, 9
        %s156 = smul.addr %s155, 4
        %s157 = smul.addr %s153, 40
        %s158 = sadd.s32 %s156, %s157
        %s159 = smul.addr %s158, 4
        %s160 = scalar_lea.vmem %s0, %s159
        %s161 = smul.u32 10, %s17
      $region20: #{nature_att_encoder_forward.5} parent=15 // pred_fallthru
        _
      // Predicated region
      $region21: #{nature_att_encoder_forward.5} parent=15 // pred_check
        %p162 = pneg %p69
      $region22: #{nature_att_encoder_forward.5} parent=15 // pred_check_branch
        %164 = sbr.rel (%p162) target = $region24
      $region23: #{nature_att_encoder_forward.5} parent=15 // pred_region
        %p165 = scmp.lt.s32.totalorder %s16, 1
        %s166 = scalar_select %p165, %s16, 1
        %s167 = smul.addr %s166, 64
        %s168 = smul.addr %s167, 4
        %s169 = scalar_lea.vmem %s1, %s168
      $region24: #{nature_att_encoder_forward.5} parent=15 // pred_fallthru
        _
      // Predicated region
      $region25: #{nature_att_encoder_forward.5} parent=15 // pred_check
        %p170 = pneg %p95
      $region26: #{nature_att_encoder_forward.5} parent=15 // pred_check_branch
        %172 = sbr.rel (%p170) target = $region28
      $region27: #{nature_att_encoder_forward.5} parent=15 // pred_region
        %p173 = scmp.lt.s32.totalorder %s16, 1
        %s174 = scalar_select %p173, %s16, 1
        %s175 = scalar_lea.vmem %s2, %s174
      $region28: #{nature_att_encoder_forward.5} parent=15 // pred_fallthru
        _
    $region16: #{nature_att_encoder_forward.5} parent=5 // pred_fallthru
      _
    %p176 = scmp.le.s32.totalorder 1, %s9
    %p177 = scmp.lt.s32.totalorder %s9, 3
    %p178 = pnand %p176, %p177
    %p179 = pneg %p178
    // Predicated region
    $region29: #{nature_att_encoder_forward.5} parent=5 // pred_check
      _
    $region30: #{nature_att_encoder_forward.5} parent=5 // pred_check_branch
      %181 = sbr.rel (%p178) target = $region32
    $region31: #{nature_att_encoder_forward.5} parent=5 // pred_region
      %s182 = ssub.s32 %s9, 1
      %s183 = smul.u32 10, %s19
      %p184 = scmp.lt.s32.totalorder %s18, 1
      %s185 = scalar_select %p184, %s18, 1
      %p186 = scmp.lt.s32.totalorder %s183, 9
      %s187 = scalar_select %p186, %s183, 9
      %s188 = smul.addr %s187, 4
      %s189 = smul.addr %s185, 40
      %s190 = sadd.s32 %s188, %s189
      %s191 = smul.addr %s190, 4
      %s192 = scalar_lea.vmem %s0, %s191
      %p193 = pneg %p49
      %p194 = pneg %p46
      %p195 = scmp.lt.s32.totalorder %s18, 1
      %s196 = scalar_select %p195, %s18, 1
      %s197 = smul.addr %s196, 64
      %s198 = smul.addr %s197, 4
      %s199 = scalar_lea.vmem %s1, %s198
      %p200 = pneg %p75
      %p201 = pneg %p72
      %p202 = scmp.lt.s32.totalorder %s18, 1
      %s203 = scalar_select %p202, %s18, 1
      %s204 = scalar_lea.vmem %s2, %s203
      %p205 = pneg %p101
      %p206 = pneg %p98
      %p207 = pneg %p129
      %p208 = pneg %p126
      %s209 = smul.u32 10, %s19
      %p210 = scmp.lt.s32.totalorder %s18, 1
      %s211 = scalar_select %p210, %s18, 1
      %p212 = scmp.lt.s32.totalorder %s209, 9
      %s213 = scalar_select %p212, %s209, 9
      %s214 = smul.addr %s211, 10
      %s215 = sadd.s32 %s213, %s214
      %s216 = smul.addr %s215, 4
      %s217 = scalar_lea.vmem %s3, %s216
      %s218 = smul.u32 10, %s19
      %p219 = scmp.lt.s32.totalorder %s18, 1
      %s220 = scalar_select %p219, %s18, 1
      %p221 = scmp.lt.s32.totalorder %s218, 9
      %s222 = scalar_select %p221, %s218, 9
      %s223 = smul.addr %s222, 4
      %s224 = smul.addr %s220, 40
      %s225 = sadd.s32 %s223, %s224
      %s226 = smul.addr %s225, 4
      %s227 = scalar_lea.vmem %s0, %s226
      %s228 = smul.u32 10, %s19
      %p229 = scmp.lt.s32.totalorder %s18, 1
      %s230 = scalar_select %p229, %s18, 1
      %s231 = smul.addr %s230, 64
      %s232 = smul.addr %s231, 4
      %s233 = scalar_lea.vmem %s1, %s232
      %p234 = scmp.lt.s32.totalorder %s18, 1
      %s235 = scalar_select %p234, %s18, 1
      %s236 = scalar_lea.vmem %s2, %s235
      %s237 = smul.u32 10, %s19
      %p238 = scmp.lt.s32.totalorder %s18, 1
      %s239 = scalar_select %p238, %s18, 1
      %p240 = scmp.lt.s32.totalorder %s237, 9
      %s241 = scalar_select %p240, %s237, 9
      %s242 = smul.addr %s239, 10
      %s243 = sadd.s32 %s241, %s242
      %s244 = smul.addr %s243, 4
      %s245 = scalar_lea.vmem %s3, %s244
      %s246 = smul.u32 10, %s19
      %v248 = vld [vmem:[%s227] sm:$0xff]
      %v249 = vld [vmem:[%s227 + $0x8] sm:$0xff]
      %v250 = vld [vmem:[%s227 + $0x10] sm:$0xff]
      %v251 = vld [vmem:[%s227 + $0x18] sm:$0xff]
      %v252 = vld [vmem:[%s227 + $0x20] sm:$0xff]
      %v253 = vld [vmem:[%s227 + $0x28] sm:$0xff]
      %v254 = vld [vmem:[%s227 + $0x30] sm:$0xff]
      %v255 = vld [vmem:[%s227 + $0x38] sm:$0xff]
      %v256 = vld [vmem:[%s227 + $0x40] sm:$0xff]
      %v257 = vld [vmem:[%s227 + $0x48] sm:$0xff]
      %v258 = vld [vmem:[%s227 + $0x50] sm:$0xff]
      %v259 = vld [vmem:[%s227 + $0x58] sm:$0xff]
      %v260 = vld [vmem:[%s227 + $0x60] sm:$0xff]
      %v261 = vld [vmem:[%s227 + $0x68] sm:$0xff]
      %v262 = vld [vmem:[%s227 + $0x70] sm:$0xff]
      %v263 = vld [vmem:[%s227 + $0x78] sm:$0xff]
      %v264 = vld [vmem:[%s227 + $0x80] sm:$0xff]
      %v265 = vld [vmem:[%s227 + $0x88] sm:$0xff]
      %v266 = vld [vmem:[%s227 + $0x90] sm:$0xff]
      %v267 = vld [vmem:[%s227 + $0x98] sm:$0xff]
      %v268 = vld [vmem:[%s233] sm:$0xf]
      %v269 = vld [vmem:[%s233 + $0x4] sm:$0xf]
      %v270 = vld [vmem:[%s233 + $0x8] sm:$0xf]
      %v271 = vld [vmem:[%s233 + $0xc] sm:$0xf]
      %v272 = vld [vmem:[%s233 + $0x10] sm:$0xf]
      %v273 = vld [vmem:[%s233 + $0x14] sm:$0xf]
      %v274 = vld [vmem:[%s233 + $0x18] sm:$0xf]
      %v275 = vld [vmem:[%s233 + $0x1c] sm:$0xf]
      %v276 = vld [vmem:[%s233 + $0x20] sm:$0xf]
      %v277 = vld [vmem:[%s233 + $0x24] sm:$0xf]
      %v278 = vld [vmem:[%s233 + $0x28] sm:$0xf]
      %v279 = vld [vmem:[%s233 + $0x2c] sm:$0xf]
      %v280 = vld [vmem:[%s233 + $0x30] sm:$0xf]
      %v281 = vld [vmem:[%s233 + $0x34] sm:$0xf]
      %v282 = vld [vmem:[%s233 + $0x38] sm:$0xf]
      %v283 = vld [vmem:[%s233 + $0x3c] sm:$0xf]
      %v284 = vld [vmem:[%s233 + $0x40] sm:$0xf]
      %v285 = vld [vmem:[%s233 + $0x44] sm:$0xf]
      %v286 = vld [vmem:[%s233 + $0x48] sm:$0xf]
      %v287 = vld [vmem:[%s233 + $0x4c] sm:$0xf]
      %v288 = vld [vmem:[%s233 + $0x50] sm:$0xf]
      %v289 = vld [vmem:[%s233 + $0x54] sm:$0xf]
      %v290 = vld [vmem:[%s233 + $0x58] sm:$0xf]
      %v291 = vld [vmem:[%s233 + $0x5c] sm:$0xf]
      %v292 = vld [vmem:[%s233 + $0x60] sm:$0xf]
      %v293 = vld [vmem:[%s233 + $0x64] sm:$0xf]
      %v294 = vld [vmem:[%s233 + $0x68] sm:$0xf]
      %v295 = vld [vmem:[%s233 + $0x6c] sm:$0xf]
      %v296 = vld [vmem:[%s233 + $0x70] sm:$0xf]
      %v297 = vld [vmem:[%s233 + $0x74] sm:$0xf]
      %v298 = vld [vmem:[%s233 + $0x78] sm:$0xf]
      %v299 = vld [vmem:[%s233 + $0x7c] sm:$0xf]
      %v300 = vld [vmem:[%s233 + $0x80] sm:$0xf]
      %v301 = vld [vmem:[%s233 + $0x84] sm:$0xf]
      %v302 = vld [vmem:[%s233 + $0x88] sm:$0xf]
      %v303 = vld [vmem:[%s233 + $0x8c] sm:$0xf]
      %v304 = vld [vmem:[%s233 + $0x90] sm:$0xf]
      %v305 = vld [vmem:[%s233 + $0x94] sm:$0xf]
      %v306 = vld [vmem:[%s233 + $0x98] sm:$0xf]
      %v307 = vld [vmem:[%s233 + $0x9c] sm:$0xf]
      %v308 = vld [vmem:[%s233 + $0xa0] sm:$0xf]
      %v309 = vld [vmem:[%s233 + $0xa4] sm:$0xf]
      %v310 = vld [vmem:[%s233 + $0xa8] sm:$0xf]
      %v311 = vld [vmem:[%s233 + $0xac] sm:$0xf]
      %v312 = vld [vmem:[%s233 + $0xb0] sm:$0xf]
      %v313 = vld [vmem:[%s233 + $0xb4] sm:$0xf]
      %v314 = vld [vmem:[%s233 + $0xb8] sm:$0xf]
      %v315 = vld [vmem:[%s233 + $0xbc] sm:$0xf]
      %v316 = vld [vmem:[%s233 + $0xc0] sm:$0xf]
      %v317 = vld [vmem:[%s233 + $0xc4] sm:$0xf]
      %v318 = vld [vmem:[%s233 + $0xc8] sm:$0xf]
      %v319 = vld [vmem:[%s233 + $0xcc] sm:$0xf]
      %v320 = vld [vmem:[%s233 + $0xd0] sm:$0xf]
      %v321 = vld [vmem:[%s233 + $0xd4] sm:$0xf]
      %v322 = vld [vmem:[%s233 + $0xd8] sm:$0xf]
      %v323 = vld [vmem:[%s233 + $0xdc] sm:$0xf]
      %v324 = vld [vmem:[%s233 + $0xe0] sm:$0xf]
      %v325 = vld [vmem:[%s233 + $0xe4] sm:$0xf]
      %v326 = vld [vmem:[%s233 + $0xe8] sm:$0xf]
      %v327 = vld [vmem:[%s233 + $0xec] sm:$0xf]
      %v328 = vld [vmem:[%s233 + $0xf0] sm:$0xf]
      %v329 = vld [vmem:[%s233 + $0xf4] sm:$0xf]
      %v330 = vld [vmem:[%s233 + $0xf8] sm:$0xf]
      %v331 = vld [vmem:[%s233 + $0xfc] sm:$0xf]
      %v332 = vld [vmem:[%s236] sm:$0x1]
      %v334 = vlaneseq
      %v335 = vshrl.u32 %v334, 7
      %v336 = vsub.s32 0, %v335
      %v337 = vrot.slane %v332, %v336
      %v359 = vunpack.c.l.b16 %v248
      %v360 = vunpack.c.h.b16 %v248
      %v361 = vunpack.c.l.b16 %v249
      %v362 = vunpack.c.h.b16 %v249
      %v363 = vunpack.c.l.b16 %v250
      %v364 = vunpack.c.h.b16 %v250
      %v365 = vunpack.c.l.b16 %v251
      %v366 = vunpack.c.h.b16 %v251
      %v367 = vunpack.c.l.b16 %v252
      %v368 = vunpack.c.h.b16 %v252
      %v369 = vunpack.c.l.b16 %v253
      %v370 = vunpack.c.h.b16 %v253
      %v371 = vunpack.c.l.b16 %v254
      %v372 = vunpack.c.h.b16 %v254
      %v373 = vunpack.c.l.b16 %v255
      %v374 = vunpack.c.h.b16 %v255
      %v375 = vunpack.c.l.b16 %v256
      %v376 = vunpack.c.h.b16 %v256
      %v377 = vunpack.c.l.b16 %v257
      %v378 = vunpack.c.h.b16 %v257
      %v379 = vunpack.c.l.b16 %v258
      %v380 = vunpack.c.h.b16 %v258
      %v381 = vunpack.c.l.b16 %v259
      %v382 = vunpack.c.h.b16 %v259
      %v383 = vunpack.c.l.b16 %v260
      %v384 = vunpack.c.h.b16 %v260
      %v385 = vunpack.c.l.b16 %v261
      %v386 = vunpack.c.h.b16 %v261
      %v387 = vunpack.c.l.b16 %v262
      %v388 = vunpack.c.h.b16 %v262
      %v389 = vunpack.c.l.b16 %v263
      %v390 = vunpack.c.h.b16 %v263
      %v391 = vunpack.c.l.b16 %v264
      %v392 = vunpack.c.h.b16 %v264
      %v393 = vunpack.c.l.b16 %v265
      %v394 = vunpack.c.h.b16 %v265
      %v395 = vunpack.c.l.b16 %v266
      %v396 = vunpack.c.h.b16 %v266
      %v397 = vunpack.c.l.b16 %v267
      %v398 = vunpack.c.h.b16 %v267
      %v399 = vpack.c.b16 %v363, %v359
      %v400 = vpack.c.b16 %v364, %v360
      %v401 = vpack.c.b16 %v365, %v361
      %v402 = vpack.c.b16 %v366, %v362
      %v403 = vpack.c.b16 %v371, %v367
      %v404 = vpack.c.b16 %v372, %v368
      %v405 = vpack.c.b16 %v373, %v369
      %v406 = vpack.c.b16 %v374, %v370
      %v407 = vpack.c.b16 %v379, %v375
      %v408 = vpack.c.b16 %v380, %v376
      %v409 = vpack.c.b16 %v381, %v377
      %v410 = vpack.c.b16 %v382, %v378
      %v411 = vpack.c.b16 %v387, %v383
      %v412 = vpack.c.b16 %v388, %v384
      %v413 = vpack.c.b16 %v389, %v385
      %v414 = vpack.c.b16 %v390, %v386
      %v415 = vpack.c.b16 %v395, %v391
      %v416 = vpack.c.b16 %v396, %v392
      %v417 = vpack.c.b16 %v397, %v393
      %v418 = vpack.c.b16 %v398, %v394
      %v503 = vunpack.c.l.b16 %v268
      %v504 = vunpack.c.l.b16 %v269
      %v505 = vunpack.c.l.b16 %v270
      %v506 = vunpack.c.l.b16 %v271
      %v507 = vunpack.c.l.b16 %v272
      %v508 = vunpack.c.l.b16 %v273
      %v509 = vunpack.c.l.b16 %v274
      %v510 = vunpack.c.l.b16 %v275
      %v511 = vunpack.c.l.b16 %v276
      %v512 = vunpack.c.l.b16 %v277
      %v513 = vunpack.c.l.b16 %v278
      %v514 = vunpack.c.l.b16 %v279
      %v515 = vunpack.c.l.b16 %v280
      %v516 = vunpack.c.l.b16 %v281
      %v517 = vunpack.c.l.b16 %v282
      %v518 = vunpack.c.l.b16 %v283
      %v519 = vunpack.c.l.b16 %v284
      %v520 = vunpack.c.l.b16 %v285
      %v521 = vunpack.c.l.b16 %v286
      %v522 = vunpack.c.l.b16 %v287
      %v523 = vunpack.c.l.b16 %v288
      %v524 = vunpack.c.l.b16 %v289
      %v525 = vunpack.c.l.b16 %v290
      %v526 = vunpack.c.l.b16 %v291
      %v527 = vunpack.c.l.b16 %v292
      %v528 = vunpack.c.l.b16 %v293
      %v529 = vunpack.c.l.b16 %v294
      %v530 = vunpack.c.l.b16 %v295
      %v531 = vunpack.c.l.b16 %v296
      %v532 = vunpack.c.l.b16 %v297
      %v533 = vunpack.c.l.b16 %v298
      %v534 = vunpack.c.l.b16 %v299
      %v535 = vunpack.c.l.b16 %v300
      %v536 = vunpack.c.l.b16 %v301
      %v537 = vunpack.c.l.b16 %v302
      %v538 = vunpack.c.l.b16 %v303
      %v539 = vunpack.c.l.b16 %v304
      %v540 = vunpack.c.l.b16 %v305
      %v541 = vunpack.c.l.b16 %v306
      %v542 = vunpack.c.l.b16 %v307
      %v543 = vunpack.c.l.b16 %v308
      %v544 = vunpack.c.l.b16 %v309
      %v545 = vunpack.c.l.b16 %v310
      %v546 = vunpack.c.l.b16 %v311
      %v547 = vunpack.c.l.b16 %v312
      %v548 = vunpack.c.l.b16 %v313
      %v549 = vunpack.c.l.b16 %v314
      %v550 = vunpack.c.l.b16 %v315
      %v551 = vunpack.c.l.b16 %v316
      %v552 = vunpack.c.l.b16 %v317
      %v553 = vunpack.c.l.b16 %v318
      %v554 = vunpack.c.l.b16 %v319
      %v555 = vunpack.c.l.b16 %v320
      %v556 = vunpack.c.l.b16 %v321
      %v557 = vunpack.c.l.b16 %v322
      %v558 = vunpack.c.l.b16 %v323
      %v559 = vunpack.c.l.b16 %v324
      %v560 = vunpack.c.l.b16 %v325
      %v561 = vunpack.c.l.b16 %v326
      %v562 = vunpack.c.l.b16 %v327
      %v563 = vunpack.c.l.b16 %v328
      %v564 = vunpack.c.l.b16 %v329
      %v565 = vunpack.c.l.b16 %v330
      %v566 = vunpack.c.l.b16 %v331
      %v567 = vpack.c.b16 %v504, %v503
      %v568 = vpack.c.b16 %v506, %v505
      %v569 = vpack.c.b16 %v508, %v507
      %v570 = vpack.c.b16 %v510, %v509
      %v571 = vpack.c.b16 %v512, %v511
      %v572 = vpack.c.b16 %v514, %v513
      %v573 = vpack.c.b16 %v516, %v515
      %v574 = vpack.c.b16 %v518, %v517
      %v575 = vpack.c.b16 %v520, %v519
      %v576 = vpack.c.b16 %v522, %v521
      %v577 = vpack.c.b16 %v524, %v523
      %v578 = vpack.c.b16 %v526, %v525
      %v579 = vpack.c.b16 %v528, %v527
      %v580 = vpack.c.b16 %v530, %v529
      %v581 = vpack.c.b16 %v532, %v531
      %v582 = vpack.c.b16 %v534, %v533
      %v583 = vpack.c.b16 %v536, %v535
      %v584 = vpack.c.b16 %v538, %v537
      %v585 = vpack.c.b16 %v540, %v539
      %v586 = vpack.c.b16 %v542, %v541
      %v587 = vpack.c.b16 %v544, %v543
      %v588 = vpack.c.b16 %v546, %v545
      %v589 = vpack.c.b16 %v548, %v547
      %v590 = vpack.c.b16 %v550, %v549
      %v591 = vpack.c.b16 %v552, %v551
      %v592 = vpack.c.b16 %v554, %v553
      %v593 = vpack.c.b16 %v556, %v555
      %v594 = vpack.c.b16 %v558, %v557
      %v595 = vpack.c.b16 %v560, %v559
      %v596 = vpack.c.b16 %v562, %v561
      %v597 = vpack.c.b16 %v564, %v563
      %v598 = vpack.c.b16 %v566, %v565
      %631 = vmatprep.subr.bf16.mxu0 0
      %632 = vmatpush1.bf16.msra.mxu0 %v574
      %633 = vmatprep.subr.bf16.mxu0 0
      %634 = vmatpush1.bf16.msra.mxu0 %v573
      %635 = vmatprep.subr.bf16.mxu0 0
      %636 = vmatpush1.bf16.msra.mxu0 %v572
      %637 = vmatprep.subr.bf16.mxu0 0
      %638 = vmatpush1.bf16.msra.mxu0 %v571
      %639 = vmatprep.subr.bf16.mxu0 0
      %640 = vmatpush1.bf16.msra.mxu0 %v570
      %641 = vmatprep.subr.bf16.mxu0 0
      %642 = vmatpush1.bf16.msra.mxu0 %v569
      %643 = vmatprep.subr.bf16.mxu0 0
      %644 = vmatpush1.bf16.msra.mxu0 %v568
      %645 = vmatprep.subr.bf16.mxu0 0
      %646 = vmatpush1.bf16.msra.mxu0 %v567
      %647 = vmatprep.subr.bf16.mxu0 0
      %648 = vmatpush2.bf16.msra.mxu0 %v582
      %649 = vmatprep.subr.bf16.mxu0 0
      %650 = vmatpush2.bf16.msra.mxu0 %v581
      %651 = vmatprep.subr.bf16.mxu0 0
      %652 = vmatpush2.bf16.msra.mxu0 %v580
      %653 = vmatprep.subr.bf16.mxu0 0
      %654 = vmatpush2.bf16.msra.mxu0 %v579
      %655 = vmatprep.subr.bf16.mxu0 0
      %656 = vmatpush2.bf16.msra.mxu0 %v578
      %657 = vmatprep.subr.bf16.mxu0 0
      %658 = vmatpush2.bf16.msra.mxu0 %v577
      %659 = vmatprep.subr.bf16.mxu0 0
      %660 = vmatpush2.bf16.msra.mxu0 %v576
      %661 = vmatprep.subr.bf16.mxu0 0
      %662 = vmatpush2.bf16.msra.mxu0 %v575
      %663 = vmatprep.mubr.bf16.mxu0 %v400
      %664 = vmatmul.mubr.bf16.gmra.mxu0 %v399
      %v665 = vpop.f32.mrf.mxu0
      %v666 = vadd.f32 %v337, %v665
      %v667 = vpop.f32.mrf.mxu0
      %v668 = vpop.f32.mrf.mxu0
      %v669 = vadd.f32 %v337, %v668
      %v670 = vpop.f32.mrf.mxu0
      %671 = vmatprep.mubr.bf16.mxu0 %v404
      %672 = vmatmul.mubr.bf16.gmra.mxu0 %v403
      %v673 = vpop.f32.mrf.mxu0
      %v674 = vadd.f32 %v337, %v673
      %v675 = vpop.f32.mrf.mxu0
      %v676 = vpop.f32.mrf.mxu0
      %v677 = vadd.f32 %v337, %v676
      %v678 = vpop.f32.mrf.mxu0
      %679 = vmatprep.mubr.bf16.mxu0 %v408
      %680 = vmatmul.mubr.bf16.gmra.mxu0 %v407
      %v681 = vpop.f32.mrf.mxu0
      %v682 = vadd.f32 %v337, %v681
      %v683 = vpop.f32.mrf.mxu0
      %v684 = vpop.f32.mrf.mxu0
      %v685 = vadd.f32 %v337, %v684
      %v686 = vpop.f32.mrf.mxu0
      %687 = vmatprep.mubr.bf16.mxu0 %v412
      %688 = vmatmul.mubr.bf16.gmra.mxu0 %v411
      %v689 = vpop.f32.mrf.mxu0
      %v690 = vadd.f32 %v337, %v689
      %v691 = vpop.f32.mrf.mxu0
      %v692 = vpop.f32.mrf.mxu0
      %v693 = vadd.f32 %v337, %v692
      %v694 = vpop.f32.mrf.mxu0
      %695 = vmatprep.mubr.bf16.mxu0 %v416
      %696 = vmatmul.mubr.bf16.gmra.mxu0 %v415
      %v697 = vpop.f32.mrf.mxu0
      %v698 = vadd.f32 %v337, %v697
      %v699 = vpop.f32.mrf.mxu0
      %v700 = vpop.f32.mrf.mxu0
      %v701 = vadd.f32 %v337, %v700
      %v702 = vpop.f32.mrf.mxu0
      %703 = vdwg.mxu0
      %704 = vmatprep.subr.bf16.mxu0 0
      %705 = vmatpush1.bf16.msra.mxu0 %v590
      %706 = vmatprep.subr.bf16.mxu0 0
      %707 = vmatpush1.bf16.msra.mxu0 %v589
      %708 = vmatprep.subr.bf16.mxu0 0
      %709 = vmatpush1.bf16.msra.mxu0 %v588
      %710 = vmatprep.subr.bf16.mxu0 0
      %711 = vmatpush1.bf16.msra.mxu0 %v587
      %712 = vmatprep.subr.bf16.mxu0 0
      %713 = vmatpush1.bf16.msra.mxu0 %v586
      %714 = vmatprep.subr.bf16.mxu0 0
      %715 = vmatpush1.bf16.msra.mxu0 %v585
      %716 = vmatprep.subr.bf16.mxu0 0
      %717 = vmatpush1.bf16.msra.mxu0 %v584
      %718 = vmatprep.subr.bf16.mxu0 0
      %719 = vmatpush1.bf16.msra.mxu0 %v583
      %720 = vmatprep.subr.bf16.mxu0 0
      %721 = vmatpush2.bf16.msra.mxu0 %v598
      %722 = vmatprep.subr.bf16.mxu0 0
      %723 = vmatpush2.bf16.msra.mxu0 %v597
      %724 = vmatprep.subr.bf16.mxu0 0
      %725 = vmatpush2.bf16.msra.mxu0 %v596
      %726 = vmatprep.subr.bf16.mxu0 0
      %727 = vmatpush2.bf16.msra.mxu0 %v595
      %728 = vmatprep.subr.bf16.mxu0 0
      %729 = vmatpush2.bf16.msra.mxu0 %v594
      %730 = vmatprep.subr.bf16.mxu0 0
      %731 = vmatpush2.bf16.msra.mxu0 %v593
      %732 = vmatprep.subr.bf16.mxu0 0
      %733 = vmatpush2.bf16.msra.mxu0 %v592
      %734 = vmatprep.subr.bf16.mxu0 0
      %735 = vmatpush2.bf16.msra.mxu0 %v591
      %736 = vmatprep.mubr.bf16.mxu0 %v402
      %737 = vmatmul.mubr.bf16.gmra.mxu0 %v401
      %v738 = vpop.f32.mrf.mxu0
      %v739 = vadd.f32 %v666, %v738
      %v740 = vpop.f32.mrf.mxu0
      %v741 = vpop.f32.mrf.mxu0
      %v742 = vadd.f32 %v669, %v741
      %v743 = vpop.f32.mrf.mxu0
      %744 = vmatprep.mubr.bf16.mxu0 %v406
      %745 = vmatmul.mubr.bf16.gmra.mxu0 %v405
      %v746 = vpop.f32.mrf.mxu0
      %v747 = vadd.f32 %v674, %v746
      %v748 = vpop.f32.mrf.mxu0
      %v749 = vpop.f32.mrf.mxu0
      %v750 = vadd.f32 %v677, %v749
      %v751 = vpop.f32.mrf.mxu0
      %752 = vmatprep.mubr.bf16.mxu0 %v410
      %753 = vmatmul.mubr.bf16.gmra.mxu0 %v409
      %v754 = vpop.f32.mrf.mxu0
      %v755 = vadd.f32 %v682, %v754
      %v756 = vpop.f32.mrf.mxu0
      %v757 = vpop.f32.mrf.mxu0
      %v758 = vadd.f32 %v685, %v757
      %v759 = vpop.f32.mrf.mxu0
      %760 = vmatprep.mubr.bf16.mxu0 %v414
      %761 = vmatmul.mubr.bf16.gmra.mxu0 %v413
      %v762 = vpop.f32.mrf.mxu0
      %v763 = vadd.f32 %v690, %v762
      %v764 = vpop.f32.mrf.mxu0
      %v765 = vpop.f32.mrf.mxu0
      %v766 = vadd.f32 %v693, %v765
      %v767 = vpop.f32.mrf.mxu0
      %768 = vmatprep.mubr.bf16.mxu0 %v418
      %769 = vmatmul.mubr.bf16.gmra.mxu0 %v417
      %v770 = vpop.f32.mrf.mxu0
      %v771 = vadd.f32 %v698, %v770
      %v772 = vpop.f32.mrf.mxu0
      %v773 = vpop.f32.mrf.mxu0
      %v774 = vadd.f32 %v701, %v773
      %v775 = vpop.f32.mrf.mxu0
      %776 = vdwg.mxu0
      %v777 = vmax.f32 %v739, 0.0
      %v778 = vmax.f32 %v742, 0.0
      %v779 = vmax.f32 %v747, 0.0
      %v780 = vmax.f32 %v750, 0.0
      %v781 = vmax.f32 %v755, 0.0
      %v782 = vmax.f32 %v758, 0.0
      %v783 = vmax.f32 %v763, 0.0
      %v784 = vmax.f32 %v766, 0.0
      %v785 = vmax.f32 %v771, 0.0
      %v786 = vmax.f32 %v774, 0.0
      %v787 = vpack.c.bf16 %v778, %v777
      %v788 = vpack.c.bf16 %v780, %v779
      %v789 = vpack.c.bf16 %v782, %v781
      %v790 = vpack.c.bf16 %v784, %v783
      %v791 = vpack.c.bf16 %v786, %v785
      %v797 = vunpack.c.l.b16 %v787
      %v798 = vunpack.c.h.b16 %v787
      %v799 = vunpack.c.l.b16 %v788
      %v800 = vunpack.c.h.b16 %v788
      %v801 = vunpack.c.l.b16 %v789
      %v802 = vunpack.c.h.b16 %v789
      %v803 = vunpack.c.l.b16 %v790
      %v804 = vunpack.c.h.b16 %v790
      %v805 = vunpack.c.l.b16 %v791
      %v806 = vunpack.c.h.b16 %v791
      %v807 = vpack.c.b16 %v797, %v797
      %v808 = vpack.c.b16 %v798, %v798
      %v809 = vpack.c.b16 %v799, %v799
      %v810 = vpack.c.b16 %v800, %v800
      %v811 = vpack.c.b16 %v801, %v801
      %v812 = vpack.c.b16 %v802, %v802
      %v813 = vpack.c.b16 %v803, %v803
      %v814 = vpack.c.b16 %v804, %v804
      %v815 = vpack.c.b16 %v805, %v805
      %v816 = vpack.c.b16 %v806, %v806
      %827 = vst [vmem:[%s245] sm:$0xf] %v807
      %828 = vst [vmem:[%s245 + $0x4] sm:$0xf] %v808
      %829 = vst [vmem:[%s245 + $0x8] sm:$0xf] %v809
      %830 = vst [vmem:[%s245 + $0xc] sm:$0xf] %v810
      %831 = vst [vmem:[%s245 + $0x10] sm:$0xf] %v811
      %832 = vst [vmem:[%s245 + $0x14] sm:$0xf] %v812
      %833 = vst [vmem:[%s245 + $0x18] sm:$0xf] %v813
      %834 = vst [vmem:[%s245 + $0x1c] sm:$0xf] %v814
      %835 = vst [vmem:[%s245 + $0x20] sm:$0xf] %v815
      %836 = vst [vmem:[%s245 + $0x24] sm:$0xf] %v816
      %s837 = smul.u32 10, %s19
      %p838 = scmp.lt.s32.totalorder %s18, 1
      %s839 = scalar_select %p838, %s18, 1
      %p840 = scmp.lt.s32.totalorder %s837, 9
      %s841 = scalar_select %p840, %s837, 9
      %s842 = smul.addr %s839, 10
      %s843 = sadd.s32 %s841, %s842
      %s844 = smul.addr %s843, 4
      %s845 = scalar_lea.vmem %s3, %s844
      // Predicated region
      $region33: #{nature_att_encoder_forward.5} parent=31 // pred_check
        %p846 = pneg %p126
      $region34: #{nature_att_encoder_forward.5} parent=31 // pred_check_branch
        %848 = sbr.rel (%p846) target = $region36
      $region35: #{nature_att_encoder_forward.5} parent=31 // pred_region
        %s849 = smul.u32 10, %s19
      $region36: #{nature_att_encoder_forward.5} parent=31 // pred_fallthru
        _
    $region32: #{nature_att_encoder_forward.5} parent=5 // pred_fallthru
      _
    %p850 = scmp.le.s32.totalorder 2, %s9
    // Predicated region
    $region37: #{nature_att_encoder_forward.5} parent=5 // pred_check
      %p851 = pneg %p850
    $region38: #{nature_att_encoder_forward.5} parent=5 // pred_check_branch
      %853 = sbr.rel (%p851) target = $region40
    $region39: #{nature_att_encoder_forward.5} parent=5 // pred_region
      %s854 = ssub.s32 %s9, 2
      // Predicated region
      $region41: #{nature_att_encoder_forward.5} parent=39 // pred_check
        %p855 = pneg %p132
      $region42: #{nature_att_encoder_forward.5} parent=39 // pred_check_branch
        %857 = sbr.rel (%p855) target = $region44
      $region43: #{nature_att_encoder_forward.5} parent=39 // pred_region
        %s858 = smul.u32 10, %s21
        %p859 = scmp.lt.s32.totalorder %s20, 1
        %s860 = scalar_select %p859, %s20, 1
        %p861 = scmp.lt.s32.totalorder %s858, 9
        %s862 = scalar_select %p861, %s858, 9
        %s863 = smul.addr %s860, 10
        %s864 = sadd.s32 %s862, %s863
        %s865 = smul.addr %s864, 4
        %s866 = scalar_lea.vmem %s3, %s865
      $region44: #{nature_att_encoder_forward.5} parent=39 // pred_fallthru
        _
    $region40: #{nature_att_encoder_forward.5} parent=5 // pred_fallthru
      _
  $region6: #{nature_att_encoder_forward.5} parent=0 // loop_footer
    %s13 = sadd.s32 1, %s9
  $region7: #{nature_att_encoder_forward.5} parent=0 // loop_footer_branch
    %8 = sbr.rel target = $region3
  $region8: #{nature_att_encoder_forward.5} parent=0 // loop_exit
    _

// kernel: squeeze.2
$region0: #{squeeze.2}
  %s0 = inlined_call_operand.vmem [shape: bf16[1,32,64], index: 0, kind: input, shape index: {}]
  %s1 = inlined_call_operand.vmem [shape: bf16[2,1024], index: 1, kind: output, shape index: {}]
  $region1: #{squeeze.2} parent=0
    #allocation0 [shape = 'u8[32768]{0}', space=vmem, size = 0x8000, scoped, tag = 'scoped mem for output reshape']
    #allocation1 [shape = 'u8[16384]{0}', space=vmem, size = 0x4000, scoped, tag = 'scoped mem for input reshape']
    %s3 = smul.u32 4, 2
    %s4 = sshll.u32 1, %s3
    %s5 = ssub.s32 %s4, 1
    %s6 = smul.addr 4, 3
    %s7 = scalar_lea.vmem %s0, %s6
    %s8 = sshrl.u32 %s5, 1
    %s9 = sor.u32 %s5, %s8
    %s10 = sand.u32 %s9, 85
    %s11 = sshrl.u32 %s10, 1
    %s12 = sor.u32 %s10, %s11
    %s13 = sand.u32 51, %s12
    %s14 = sshrl.u32 %s13, 2
    %s15 = sor.u32 %s13, %s14
    %s16 = sand.u32 15, %s15
    %v17 = vld [vmem:[%s7] sm:%s16]
    %v18 = vunpack.c.l.bf16 %v17
    %v19 = vunpack.c.h.bf16 %v17
    %s20 = scalar_lea.vmem [#allocation1], 24
    %21 = vst [vmem:[%s20] sm:%s5] %v18
    %s22 = smul.addr 4, 2
    %s23 = scalar_lea.vmem %s0, %s22
    %s24 = sshrl.u32 %s5, 1
    %s25 = sor.u32 %s5, %s24
    %s26 = sand.u32 %s25, 85
    %s27 = sshrl.u32 %s26, 1
    %s28 = sor.u32 %s26, %s27
    %s29 = sand.u32 51, %s28
    %s30 = sshrl.u32 %s29, 2
    %s31 = sor.u32 %s29, %s30
    %s32 = sand.u32 15, %s31
    %v33 = vld [vmem:[%s23] sm:%s32]
    %v34 = vunpack.c.l.bf16 %v33
    %v35 = vunpack.c.h.bf16 %v33
    %s36 = scalar_lea.vmem [#allocation1], 16
    %37 = vst [vmem:[%s36] sm:%s5] %v34
    %s38 = scalar_lea.vmem %s0, 4
    %s39 = sshrl.u32 %s5, 1
    %s40 = sor.u32 %s5, %s39
    %s41 = sand.u32 %s40, 85
    %s42 = sshrl.u32 %s41, 1
    %s43 = sor.u32 %s41, %s42
    %s44 = sand.u32 51, %s43
    %s45 = sshrl.u32 %s44, 2
    %s46 = sor.u32 %s44, %s45
    %s47 = sand.u32 15, %s46
    %v48 = vld [vmem:[%s38] sm:%s47]
    %v49 = vunpack.c.l.bf16 %v48
    %v50 = vunpack.c.h.bf16 %v48
    %s51 = scalar_lea.vmem [#allocation1], 8
    %52 = vst [vmem:[%s51] sm:%s5] %v49
    %s53 = sshrl.u32 %s5, 1
    %s54 = sor.u32 %s5, %s53
    %s55 = sand.u32 %s54, 85
    %s56 = sshrl.u32 %s55, 1
    %s57 = sor.u32 %s55, %s56
    %s58 = sand.u32 51, %s57
    %s59 = sshrl.u32 %s58, 2
    %s60 = sor.u32 %s58, %s59
    %s61 = sand.u32 15, %s60
    %v62 = vld [vmem:[%s0] sm:%s61]
    %v63 = vunpack.c.l.bf16 %v62
    %v64 = vunpack.c.h.bf16 %v62
    %65 = vst [vmem:[#allocation1] sm:%s5] %v63
    %v66 = vld [vmem:[#allocation1] ss:$2 sm:$0xff]
    %vm67 = vcmask 523264
    %68 = vst.msk [vmem:[#allocation0] ss:$8 sm:$0xf] %vm67, %v66
    %69 = vst.msk [vmem:[#allocation0] ss:$8 sm:$0xf0] %vm67, %v66
    %s70 = scalar_lea.vmem [#allocation1], 16
    %v71 = vld [vmem:[%s70] ss:$2 sm:$0xff]
    %vm72 = vcmask 523264
    %s73 = scalar_lea.vmem [#allocation0], 1
    %74 = vst.msk [vmem:[%s73] ss:$8 sm:$0xf] %vm72, %v71
    %s75 = scalar_lea.vmem [#allocation0], 1
    %76 = vst.msk [vmem:[%s75] ss:$8 sm:$0xf0] %vm72, %v71
    %s77 = scalar_lea.vmem [#allocation1], 1
    %s78 = smov 3
    %v79 = vld [vmem:[%s77] ss:$16 sm:%s78]
    %s80 = scalar_lea.vmem [#allocation1], 4294967267
    %s81 = smov 12
    %v82 = vld [vmem:[%s80] ss:$16 sm:%s81]
    %vm83 = vcmask 1043458
    %v84 = vsel %vm83, %v82, %v79
    %s85 = scalar_lea.vmem [#allocation1], 4294967237
    %s86 = smov 48
    %v87 = vld [vmem:[%s85] ss:$16 sm:%s86]
    %vm88 = vcmask 1045508
    %v89 = vsel %vm88, %v87, %v84
    %s90 = scalar_lea.vmem [#allocation1], 4294967207
    %s91 = smov 192
    %v92 = vld [vmem:[%s90] ss:$16 sm:%s91]
    %vm93 = vcmask 1047558
    %v94 = vsel %vm93, %v92, %v89
    %95 = vrot.lane.b32.xlu0 %v94, 64
    %v96 = vpop.permute.xlu0 %95
    %vm97 = vcmask 1048064
    %98 = vst.msk [vmem:[#allocation0] sm:$0x3] %vm97, %v96
    %s99 = scalar_lea.vmem [#allocation0], 6
    %100 = vst.msk [vmem:[%s99] sm:$0xc] %vm97, %v96
    %s101 = scalar_lea.vmem [#allocation0], 12
    %102 = vst.msk [vmem:[%s101] sm:$0x30] %vm97, %v96
    %s103 = scalar_lea.vmem [#allocation0], 18
    %104 = vst.msk [vmem:[%s103] sm:$0xc0] %vm97, %v96
    %s105 = scalar_lea.vmem [#allocation1], 9
    %s106 = smov 3
    %v107 = vld [vmem:[%s105] ss:$16 sm:%s106]
    %s108 = scalar_lea.vmem [#allocation1], 4294967275
    %s109 = smov 12
    %v110 = vld [vmem:[%s108] ss:$16 sm:%s109]
    %vm111 = vcmask 1043458
    %v112 = vsel %vm111, %v110, %v107
    %s113 = scalar_lea.vmem [#allocation1], 4294967245
    %s114 = smov 48
    %v115 = vld [vmem:[%s113] ss:$16 sm:%s114]
    %vm116 = vcmask 1045508
    %v117 = vsel %vm116, %v115, %v112
    %s118 = scalar_lea.vmem [#allocation1], 4294967215
    %s119 = smov 192
    %v120 = vld [vmem:[%s118] ss:$16 sm:%s119]
    %vm121 = vcmask 1047558
    %v122 = vsel %vm121, %v120, %v117
    %123 = vrot.lane.b32.xlu0 %v122, 64
    %v124 = vpop.permute.xlu0 %123
    %vm125 = vcmask 1048064
    %s126 = scalar_lea.vmem [#allocation0], 32
    %127 = vst.msk [vmem:[%s126] sm:$0x3] %vm125, %v124
    %s128 = scalar_lea.vmem [#allocation0], 38
    %129 = vst.msk [vmem:[%s128] sm:$0xc] %vm125, %v124
    %s130 = scalar_lea.vmem [#allocation0], 44
    %131 = vst.msk [vmem:[%s130] sm:$0x30] %vm125, %v124
    %s132 = scalar_lea.vmem [#allocation0], 50
    %133 = vst.msk [vmem:[%s132] sm:$0xc0] %vm125, %v124
    %s135 = smul.u32 1, 2
    %s136 = sshll.u32 1, %s135
    %s137 = ssub.s32 %s136, 1
    %s138 = sshrl.u32 %s135, 1
    %v139 = vld [vmem:[#allocation0] sm:%s137]
    %v140 = vpack.c.bf16 0.0, %v139
    %s141 = sshll.u32 1, %s138
    %s142 = ssub.s32 %s141, 1
    %143 = vst [vmem:[%s1] sm:%s142] %v140
    %s144 = scalar_lea.vmem [#allocation0], 8
    %v145 = vld [vmem:[%s144] sm:%s137]
    %v146 = vpack.c.bf16 0.0, %v145
    %s147 = sshll.u32 1, %s138
    %s148 = ssub.s32 %s147, 1
    %s149 = scalar_lea.vmem %s1, 1
    %150 = vst [vmem:[%s149] sm:%s148] %v146
    %s151 = scalar_lea.vmem [#allocation0], 16
    %v152 = vld [vmem:[%s151] sm:%s137]
    %v153 = vpack.c.bf16 0.0, %v152
    %s154 = sshll.u32 1, %s138
    %s155 = ssub.s32 %s154, 1
    %s156 = smul.addr 1, 2
    %s157 = scalar_lea.vmem %s1, %s156
    %158 = vst [vmem:[%s157] sm:%s155] %v153
    %s159 = scalar_lea.vmem [#allocation0], 24
    %v160 = vld [vmem:[%s159] sm:%s137]
    %v161 = vpack.c.bf16 0.0, %v160
    %s162 = sshll.u32 1, %s138
    %s163 = ssub.s32 %s162, 1
    %s164 = smul.addr 1, 3
    %s165 = scalar_lea.vmem %s1, %s164
    %166 = vst [vmem:[%s165] sm:%s163] %v161
    %s167 = scalar_lea.vmem [#allocation0], 32
    %v168 = vld [vmem:[%s167] sm:%s137]
    %v169 = vpack.c.bf16 0.0, %v168
    %s170 = sshll.u32 1, %s138
    %s171 = ssub.s32 %s170, 1
    %s172 = smul.addr 1, 4
    %s173 = scalar_lea.vmem %s1, %s172
    %174 = vst [vmem:[%s173] sm:%s171] %v169
    %s175 = scalar_lea.vmem [#allocation0], 40
    %v176 = vld [vmem:[%s175] sm:%s137]
    %v177 = vpack.c.bf16 0.0, %v176
    %s178 = sshll.u32 1, %s138
    %s179 = ssub.s32 %s178, 1
    %s180 = smul.addr 1, 5
    %s181 = scalar_lea.vmem %s1, %s180
    %182 = vst [vmem:[%s181] sm:%s179] %v177
    %s183 = scalar_lea.vmem [#allocation0], 48
    %v184 = vld [vmem:[%s183] sm:%s137]
    %v185 = vpack.c.bf16 0.0, %v184
    %s186 = sshll.u32 1, %s138
    %s187 = ssub.s32 %s186, 1
    %s188 = smul.addr 1, 6
    %s189 = scalar_lea.vmem %s1, %s188
    %190 = vst [vmem:[%s189] sm:%s187] %v185
    %s191 = scalar_lea.vmem [#allocation0], 56
    %v192 = vld [vmem:[%s191] sm:%s137]
    %v193 = vpack.c.bf16 0.0, %v192
    %s194 = sshll.u32 1, %s138
    %s195 = ssub.s32 %s194, 1
    %s196 = smul.addr 1, 7
    %s197 = scalar_lea.vmem %s1, %s196
    %198 = vst [vmem:[%s197] sm:%s195] %v193

// kernel: nature_att_encoder_forward.6
$region0: #{nature_att_encoder_forward.6}
  #allocation0 [shape = 'u32[]', space=smem, size = 0x4, offset = 0x4, fixed_abs, tag = 'smem constant byte address 0x4 - core index']
  #allocation1 [shape = 'u32[144,128]{1,0:T(1,128)}', space=vmem, size = 0x12000, scoped, tag = 'internal scratch']
  %s0 = inlined_call_operand.vmem [shape: bf16[2,32,576], index: 0, kind: input, shape index: {}]
  %s1 = inlined_call_operand.vmem [shape: bf16[2,576,128], index: 1, kind: input, shape index: {}]
  %s2 = inlined_call_operand.vmem [shape: f32[2,1,128], index: 2, kind: input, shape index: {}]
  %s3 = inlined_call_operand.vmem [shape: bf16[2,32,128], index: 3, kind: output, shape index: {}]
  %s4 = sld [smem:[#allocation0]]
  $region45: #{nature_att_encoder_forward.6} parent=0
    _
  %s6 = ssub.s32 1, %s4
  %s7 = scalar_select 0, %s6, %s4
  loop: start=0, step=1, limit=4
  $region2: #{nature_att_encoder_forward.6} parent=0 // loop_pre_header
    _
  $region3: #{nature_att_encoder_forward.6} parent=0 // loop_header
    %s9 = sphi 0, %s13
    %p10 = scmp.ge.s32.totalorder %s9, 4
    %s16 = sphi 0, %s28
    %s17 = sphi 0, %s24
    %s18 = sphi 0, %s16
    %s19 = sphi 0, %s17
    %s20 = sphi 0, %s18
    %s21 = sphi 0, %s19
    %s33 = sphi 0, %s35
    %s36 = sphi 0, %s33
    %s37 = sphi 0, %s36
    %s53 = sphi 0, %s37
    %s59 = sphi 0, %s61
    %s62 = sphi 0, %s59
    %s63 = sphi 0, %s62
    %s79 = sphi 0, %s63
    %s85 = sphi 0, %s87
    %s88 = sphi 0, %s85
    %s89 = sphi 0, %s88
    %s105 = sphi 0, %s89
    %s113 = sphi 0, %s115
    %s116 = sphi 0, %s113
    %s117 = sphi 0, %s116
    %s133 = sphi 0, %s117
  $region4: #{nature_att_encoder_forward.6} parent=0 // loop_header_branch
    %12 = sbr.rel (%p10) target = $region8
  $region5: #{nature_att_encoder_forward.6} parent=0 // loop_body
    %s14 = ssub.s32 %s9, 1
    %s15 = ssub.s32 %s9, 2
    %s22 = sadd.s32 1, %s17
    %p23 = scmp.ge.s32.totalorder %s22, 1
    %s24 = scalar_select %p23, 0, %s22
    %s25 = sadd.s32 1, %s16
    %s26 = scalar_select %p23, %s25, %s16
    %p27 = scmp.ge.s32.totalorder %s26, 2
    %s28 = scalar_select %p27, 0, %s26
    %s29 = ssub.s32 %s16, %s28
    %s30 = ssub.s32 %s17, %s24
    %s31 = sor.u32 %s29, %s30
    %p32 = scmp.eq.s32.totalorder %s31, 0
    %s34 = sadd.s32 %s33, 1
    %s35 = scalar_select %p32, %s33, %s34
    %p38 = pneg %p32
    %p39 = scmp.eq.s32.totalorder %s9, 1
    %p40 = por %p38, %p39
    %p41 = scmp.ne.s32.totalorder %s33, %s36
    %p42 = scmp.eq.s32.totalorder %s9, 0
    %p43 = por %p41, %p42
    %p44 = scmp.ne.s32.totalorder %s33, %s36
    %p45 = scmp.eq.s32.totalorder %s14, 1
    %p46 = por %p44, %p45
    %p47 = scmp.ne.s32.totalorder %s36, %s37
    %p48 = scmp.eq.s32.totalorder %s14, 0
    %p49 = por %p47, %p48
    %p50 = scmp.ne.s32.totalorder %s36, %s37
    %p51 = scmp.eq.s32.totalorder %s15, 1
    %p52 = por %p50, %p51
    %p54 = scmp.ne.s32.totalorder %s37, %s53
    %p55 = scmp.eq.s32.totalorder %s15, 0
    %p56 = por %p54, %p55
    %s57 = ssub.s32 %s16, %s28
    %p58 = scmp.eq.s32.totalorder %s57, 0
    %s60 = sadd.s32 %s59, 1
    %s61 = scalar_select %p58, %s59, %s60
    %p64 = pneg %p58
    %p65 = scmp.eq.s32.totalorder %s9, 1
    %p66 = por %p64, %p65
    %p67 = scmp.ne.s32.totalorder %s59, %s62
    %p68 = scmp.eq.s32.totalorder %s9, 0
    %p69 = por %p67, %p68
    %p70 = scmp.ne.s32.totalorder %s59, %s62
    %p71 = scmp.eq.s32.totalorder %s14, 1
    %p72 = por %p70, %p71
    %p73 = scmp.ne.s32.totalorder %s62, %s63
    %p74 = scmp.eq.s32.totalorder %s14, 0
    %p75 = por %p73, %p74
    %p76 = scmp.ne.s32.totalorder %s62, %s63
    %p77 = scmp.eq.s32.totalorder %s15, 1
    %p78 = por %p76, %p77
    %p80 = scmp.ne.s32.totalorder %s63, %s79
    %p81 = scmp.eq.s32.totalorder %s15, 0
    %p82 = por %p80, %p81
    %s83 = ssub.s32 %s16, %s28
    %p84 = scmp.eq.s32.totalorder %s83, 0
    %s86 = sadd.s32 %s85, 1
    %s87 = scalar_select %p84, %s85, %s86
    %p90 = pneg %p84
    %p91 = scmp.eq.s32.totalorder %s9, 1
    %p92 = por %p90, %p91
    %p93 = scmp.ne.s32.totalorder %s85, %s88
    %p94 = scmp.eq.s32.totalorder %s9, 0
    %p95 = por %p93, %p94
    %p96 = scmp.ne.s32.totalorder %s85, %s88
    %p97 = scmp.eq.s32.totalorder %s14, 1
    %p98 = por %p96, %p97
    %p99 = scmp.ne.s32.totalorder %s88, %s89
    %p100 = scmp.eq.s32.totalorder %s14, 0
    %p101 = por %p99, %p100
    %p102 = scmp.ne.s32.totalorder %s88, %s89
    %p103 = scmp.eq.s32.totalorder %s15, 1
    %p104 = por %p102, %p103
    %p106 = scmp.ne.s32.totalorder %s89, %s105
    %p107 = scmp.eq.s32.totalorder %s15, 0
    %p108 = por %p106, %p107
    %s109 = ssub.s32 %s16, %s28
    %s110 = ssub.s32 %s17, %s24
    %s111 = sor.u32 %s109, %s110
    %p112 = scmp.eq.s32.totalorder %s111, 0
    %s114 = sadd.s32 %s113, 1
    %s115 = scalar_select %p112, %s113, %s114
    %p118 = pneg %p112
    %p119 = scmp.eq.s32.totalorder %s9, 1
    %p120 = por %p118, %p119
    %p121 = scmp.ne.s32.totalorder %s113, %s116
    %p122 = scmp.eq.s32.totalorder %s9, 0
    %p123 = por %p121, %p122
    %p124 = scmp.ne.s32.totalorder %s113, %s116
    %p125 = scmp.eq.s32.totalorder %s14, 1
    %p126 = por %p124, %p125
    %p127 = scmp.ne.s32.totalorder %s116, %s117
    %p128 = scmp.eq.s32.totalorder %s14, 0
    %p129 = por %p127, %p128
    %p130 = scmp.ne.s32.totalorder %s116, %s117
    %p131 = scmp.eq.s32.totalorder %s15, 1
    %p132 = por %p130, %p131
    %p134 = scmp.ne.s32.totalorder %s117, %s133
    %p135 = scmp.eq.s32.totalorder %s15, 0
    %p136 = por %p134, %p135
    %p137 = scmp.le.s32.totalorder 1, %s9
    %p138 = scmp.lt.s32.totalorder %s9, 3
    %p139 = pnand %p137, %p138
    %p140 = pneg %p139
    // Predicated region
    $region9: #{nature_att_encoder_forward.6} parent=5 // pred_check
      _
    $region10: #{nature_att_encoder_forward.6} parent=5 // pred_check_branch
      %142 = sbr.rel (%p139) target = $region12
    $region11: #{nature_att_encoder_forward.6} parent=5 // pred_region
      %s143 = ssub.s32 %s9, 1
    $region12: #{nature_att_encoder_forward.6} parent=5 // pred_fallthru
      _
    %p144 = scmp.lt.s32.totalorder %s9, 2
    // Predicated region
    $region13: #{nature_att_encoder_forward.6} parent=5 // pred_check
      %p145 = pneg %p144
    $region14: #{nature_att_encoder_forward.6} parent=5 // pred_check_branch
      %147 = sbr.rel (%p145) target = $region16
    $region15: #{nature_att_encoder_forward.6} parent=5 // pred_region
      // Predicated region
      $region17: #{nature_att_encoder_forward.6} parent=15 // pred_check
        %p148 = pneg %p43
      $region18: #{nature_att_encoder_forward.6} parent=15 // pred_check_branch
        %150 = sbr.rel (%p148) target = $region20
      $region19: #{nature_att_encoder_forward.6} parent=15 // pred_region
        %s151 = smul.u32 4, %s17
        %p152 = scmp.lt.s32.totalorder %s16, 1
        %s153 = scalar_select %p152, %s16, 1
        %p154 = scmp.lt.s32.totalorder %s151, 3
        %s155 = scalar_select %p154, %s151, 3
        %s156 = smul.addr %s155, 5
        %s157 = smul.addr %s153, 20
        %s158 = sadd.s32 %s156, %s157
        %s159 = smul.addr %s158, 4
        %s160 = scalar_lea.vmem %s0, %s159
        %s161 = smul.u32 4, %s17
      $region20: #{nature_att_encoder_forward.6} parent=15 // pred_fallthru
        _
      // Predicated region
      $region21: #{nature_att_encoder_forward.6} parent=15 // pred_check
        %p162 = pneg %p69
      $region22: #{nature_att_encoder_forward.6} parent=15 // pred_check_branch
        %164 = sbr.rel (%p162) target = $region24
      $region23: #{nature_att_encoder_forward.6} parent=15 // pred_region
        %p165 = scmp.lt.s32.totalorder %s16, 1
        %s166 = scalar_select %p165, %s16, 1
        %s167 = smul.addr %s166, 72
        %s168 = smul.addr %s167, 4
        %s169 = scalar_lea.vmem %s1, %s168
      $region24: #{nature_att_encoder_forward.6} parent=15 // pred_fallthru
        _
      // Predicated region
      $region25: #{nature_att_encoder_forward.6} parent=15 // pred_check
        %p170 = pneg %p95
      $region26: #{nature_att_encoder_forward.6} parent=15 // pred_check_branch
        %172 = sbr.rel (%p170) target = $region28
      $region27: #{nature_att_encoder_forward.6} parent=15 // pred_region
        %p173 = scmp.lt.s32.totalorder %s16, 1
        %s174 = scalar_select %p173, %s16, 1
        %s175 = scalar_lea.vmem %s2, %s174
      $region28: #{nature_att_encoder_forward.6} parent=15 // pred_fallthru
        _
    $region16: #{nature_att_encoder_forward.6} parent=5 // pred_fallthru
      _
    %p176 = scmp.le.s32.totalorder 1, %s9
    %p177 = scmp.lt.s32.totalorder %s9, 3
    %p178 = pnand %p176, %p177
    %p179 = pneg %p178
    // Predicated region
    $region29: #{nature_att_encoder_forward.6} parent=5 // pred_check
      _
    $region30: #{nature_att_encoder_forward.6} parent=5 // pred_check_branch
      %181 = sbr.rel (%p178) target = $region32
    $region31: #{nature_att_encoder_forward.6} parent=5 // pred_region
      %s182 = ssub.s32 %s9, 1
      %s183 = smul.u32 4, %s19
      %p184 = scmp.lt.s32.totalorder %s18, 1
      %s185 = scalar_select %p184, %s18, 1
      %p186 = scmp.lt.s32.totalorder %s183, 3
      %s187 = scalar_select %p186, %s183, 3
      %s188 = smul.addr %s187, 5
      %s189 = smul.addr %s185, 20
      %s190 = sadd.s32 %s188, %s189
      %s191 = smul.addr %s190, 4
      %s192 = scalar_lea.vmem %s0, %s191
      %p193 = pneg %p49
      %p194 = pneg %p46
      %p195 = scmp.lt.s32.totalorder %s18, 1
      %s196 = scalar_select %p195, %s18, 1
      %s197 = smul.addr %s196, 72
      %s198 = smul.addr %s197, 4
      %s199 = scalar_lea.vmem %s1, %s198
      %p200 = pneg %p75
      %p201 = pneg %p72
      %p202 = scmp.lt.s32.totalorder %s18, 1
      %s203 = scalar_select %p202, %s18, 1
      %s204 = scalar_lea.vmem %s2, %s203
      %p205 = pneg %p101
      %p206 = pneg %p98
      %p207 = pneg %p129
      %p208 = pneg %p126
      %s209 = smul.u32 4, %s19
      %p210 = scmp.lt.s32.totalorder %s18, 1
      %s211 = scalar_select %p210, %s18, 1
      %p212 = scmp.lt.s32.totalorder %s209, 3
      %s213 = scalar_select %p212, %s209, 3
      %s214 = smul.addr %s211, 4
      %s215 = sadd.s32 %s213, %s214
      %s216 = smul.addr %s215, 4
      %s217 = scalar_lea.vmem %s3, %s216
      %s218 = smul.u32 4, %s19
      %p219 = scmp.lt.s32.totalorder %s18, 1
      %s220 = scalar_select %p219, %s18, 1
      %p221 = scmp.lt.s32.totalorder %s218, 3
      %s222 = scalar_select %p221, %s218, 3
      %s223 = smul.addr %s222, 5
      %s224 = smul.addr %s220, 20
      %s225 = sadd.s32 %s223, %s224
      %s226 = smul.addr %s225, 4
      %s227 = scalar_lea.vmem %s0, %s226
      %s228 = smul.u32 4, %s19
      %p229 = scmp.lt.s32.totalorder %s18, 1
      %s230 = scalar_select %p229, %s18, 1
      %s231 = smul.addr %s230, 72
      %s232 = smul.addr %s231, 4
      %s233 = scalar_lea.vmem %s1, %s232
      %p234 = scmp.lt.s32.totalorder %s18, 1
      %s235 = scalar_select %p234, %s18, 1
      %s236 = scalar_lea.vmem %s2, %s235
      %s237 = smul.u32 4, %s19
      %p238 = scmp.lt.s32.totalorder %s18, 1
      %s239 = scalar_select %p238, %s18, 1
      %p240 = scmp.lt.s32.totalorder %s237, 3
      %s241 = scalar_select %p240, %s237, 3
      %s242 = smul.addr %s239, 4
      %s243 = sadd.s32 %s241, %s242
      %s244 = smul.addr %s243, 4
      %s245 = scalar_lea.vmem %s3, %s244
      %s246 = smul.u32 4, %s19
      %v248 = vld [vmem:[%s227] sm:$0xff]
      %v249 = vld [vmem:[%s227 + $0x8] sm:$0xff]
      %v250 = vld [vmem:[%s227 + $0x10] sm:$0xf]
      %v251 = vld [vmem:[%s227 + $0x14] sm:$0xff]
      %v252 = vld [vmem:[%s227 + $0x1c] sm:$0xff]
      %v253 = vld [vmem:[%s227 + $0x24] sm:$0xf]
      %v254 = vld [vmem:[%s227 + $0x28] sm:$0xff]
      %v255 = vld [vmem:[%s227 + $0x30] sm:$0xff]
      %v256 = vld [vmem:[%s227 + $0x38] sm:$0xf]
      %v257 = vld [vmem:[%s227 + $0x3c] sm:$0xff]
      %v258 = vld [vmem:[%s227 + $0x44] sm:$0xff]
      %v259 = vld [vmem:[%s227 + $0x4c] sm:$0xf]
      %v260 = vld [vmem:[%s233] sm:$0xf]
      %v261 = vld [vmem:[%s233 + $0x4] sm:$0xf]
      %v262 = vld [vmem:[%s233 + $0x8] sm:$0xf]
      %v263 = vld [vmem:[%s233 + $0xc] sm:$0xf]
      %v264 = vld [vmem:[%s233 + $0x10] sm:$0xf]
      %v265 = vld [vmem:[%s233 + $0x14] sm:$0xf]
      %v266 = vld [vmem:[%s233 + $0x18] sm:$0xf]
      %v267 = vld [vmem:[%s233 + $0x1c] sm:$0xf]
      %v268 = vld [vmem:[%s233 + $0x20] sm:$0xf]
      %v269 = vld [vmem:[%s233 + $0x24] sm:$0xf]
      %v270 = vld [vmem:[%s233 + $0x28] sm:$0xf]
      %v271 = vld [vmem:[%s233 + $0x2c] sm:$0xf]
      %v272 = vld [vmem:[%s233 + $0x30] sm:$0xf]
      %v273 = vld [vmem:[%s233 + $0x34] sm:$0xf]
      %v274 = vld [vmem:[%s233 + $0x38] sm:$0xf]
      %v275 = vld [vmem:[%s233 + $0x3c] sm:$0xf]
      %v276 = vld [vmem:[%s233 + $0x40] sm:$0xf]
      %v277 = vld [vmem:[%s233 + $0x44] sm:$0xf]
      %v278 = vld [vmem:[%s233 + $0x48] sm:$0xf]
      %v279 = vld [vmem:[%s233 + $0x4c] sm:$0xf]
      %v280 = vld [vmem:[%s233 + $0x50] sm:$0xf]
      %v281 = vld [vmem:[%s233 + $0x54] sm:$0xf]
      %v282 = vld [vmem:[%s233 + $0x58] sm:$0xf]
      %v283 = vld [vmem:[%s233 + $0x5c] sm:$0xf]
      %v284 = vld [vmem:[%s233 + $0x60] sm:$0xf]
      %v285 = vld [vmem:[%s233 + $0x64] sm:$0xf]
      %v286 = vld [vmem:[%s233 + $0x68] sm:$0xf]
      %v287 = vld [vmem:[%s233 + $0x6c] sm:$0xf]
      %v288 = vld [vmem:[%s233 + $0x70] sm:$0xf]
      %v289 = vld [vmem:[%s233 + $0x74] sm:$0xf]
      %v290 = vld [vmem:[%s233 + $0x78] sm:$0xf]
      %v291 = vld [vmem:[%s233 + $0x7c] sm:$0xf]
      %v292 = vld [vmem:[%s233 + $0x80] sm:$0xf]
      %v293 = vld [vmem:[%s233 + $0x84] sm:$0xf]
      %v294 = vld [vmem:[%s233 + $0x88] sm:$0xf]
      %v295 = vld [vmem:[%s233 + $0x8c] sm:$0xf]
      %v296 = vld [vmem:[%s233 + $0x90] sm:$0xf]
      %v297 = vld [vmem:[%s233 + $0x94] sm:$0xf]
      %v298 = vld [vmem:[%s233 + $0x98] sm:$0xf]
      %v299 = vld [vmem:[%s233 + $0x9c] sm:$0xf]
      %v300 = vld [vmem:[%s233 + $0xa0] sm:$0xf]
      %v301 = vld [vmem:[%s233 + $0xa4] sm:$0xf]
      %v302 = vld [vmem:[%s233 + $0xa8] sm:$0xf]
      %v303 = vld [vmem:[%s233 + $0xac] sm:$0xf]
      %v304 = vld [vmem:[%s233 + $0xb0] sm:$0xf]
      %v305 = vld [vmem:[%s233 + $0xb4] sm:$0xf]
      %v306 = vld [vmem:[%s233 + $0xb8] sm:$0xf]
      %v307 = vld [vmem:[%s233 + $0xbc] sm:$0xf]
      %v308 = vld [vmem:[%s233 + $0xc0] sm:$0xf]
      %v309 = vld [vmem:[%s233 + $0xc4] sm:$0xf]
      %v310 = vld [vmem:[%s233 + $0xc8] sm:$0xf]
      %v311 = vld [vmem:[%s233 + $0xcc] sm:$0xf]
      %v312 = vld [vmem:[%s233 + $0xd0] sm:$0xf]
      %v313 = vld [vmem:[%s233 + $0xd4] sm:$0xf]
      %v314 = vld [vmem:[%s233 + $0xd8] sm:$0xf]
      %v315 = vld [vmem:[%s233 + $0xdc] sm:$0xf]
      %v316 = vld [vmem:[%s233 + $0xe0] sm:$0xf]
      %v317 = vld [vmem:[%s233 + $0xe4] sm:$0xf]
      %v318 = vld [vmem:[%s233 + $0xe8] sm:$0xf]
      %v319 = vld [vmem:[%s233 + $0xec] sm:$0xf]
      %v320 = vld [vmem:[%s233 + $0xf0] sm:$0xf]
      %v321 = vld [vmem:[%s233 + $0xf4] sm:$0xf]
      %v322 = vld [vmem:[%s233 + $0xf8] sm:$0xf]
      %v323 = vld [vmem:[%s233 + $0xfc] sm:$0xf]
      %v324 = vld [vmem:[%s233 + $0x100] sm:$0xf]
      %v325 = vld [vmem:[%s233 + $0x104] sm:$0xf]
      %v326 = vld [vmem:[%s233 + $0x108] sm:$0xf]
      %v327 = vld [vmem:[%s233 + $0x10c] sm:$0xf]
      %v328 = vld [vmem:[%s233 + $0x110] sm:$0xf]
      %v329 = vld [vmem:[%s233 + $0x114] sm:$0xf]
      %v330 = vld [vmem:[%s233 + $0x118] sm:$0xf]
      %v331 = vld [vmem:[%s233 + $0x11c] sm:$0xf]
      %v332 = vld [vmem:[%s236] sm:$0x1]
      %v334 = vlaneseq
      %v335 = vshrl.u32 %v334, 7
      %v336 = vsub.s32 0, %v335
      %v337 = vrot.slane %v332, %v336
      %v351 = vunpack.c.l.b16 %v248
      %v352 = vunpack.c.h.b16 %v248
      %v353 = vunpack.c.l.b16 %v249
      %v354 = vunpack.c.h.b16 %v249
      %v355 = vunpack.c.l.b16 %v250
      %v356 = vunpack.c.l.b16 %v251
      %v357 = vunpack.c.h.b16 %v251
      %v358 = vunpack.c.l.b16 %v252
      %v359 = vunpack.c.h.b16 %v252
      %v360 = vunpack.c.l.b16 %v253
      %v361 = vunpack.c.l.b16 %v254
      %v362 = vunpack.c.h.b16 %v254
      %v363 = vunpack.c.l.b16 %v255
      %v364 = vunpack.c.h.b16 %v255
      %v365 = vunpack.c.l.b16 %v256
      %v366 = vunpack.c.l.b16 %v257
      %v367 = vunpack.c.h.b16 %v257
      %v368 = vunpack.c.l.b16 %v258
      %v369 = vunpack.c.h.b16 %v258
      %v370 = vunpack.c.l.b16 %v259
      %v371 = vpack.c.b16 %v356, %v351
      %v372 = vpack.c.b16 %v357, %v352
      %v373 = vpack.c.b16 %v358, %v353
      %v374 = vpack.c.b16 %v359, %v354
      %v375 = vpack.c.b16 %v360, %v355
      %v376 = vpack.c.b16 %v366, %v361
      %v377 = vpack.c.b16 %v367, %v362
      %v378 = vpack.c.b16 %v368, %v363
      %v379 = vpack.c.b16 %v369, %v364
      %v380 = vpack.c.b16 %v370, %v365
      %v461 = vunpack.c.l.b16 %v260
      %v462 = vunpack.c.l.b16 %v261
      %v463 = vunpack.c.l.b16 %v262
      %v464 = vunpack.c.l.b16 %v263
      %v465 = vunpack.c.l.b16 %v264
      %v466 = vunpack.c.l.b16 %v265
      %v467 = vunpack.c.l.b16 %v266
      %v468 = vunpack.c.l.b16 %v267
      %v469 = vunpack.c.l.b16 %v268
      %v470 = vunpack.c.l.b16 %v269
      %v471 = vunpack.c.l.b16 %v270
      %v472 = vunpack.c.l.b16 %v271
      %v473 = vunpack.c.l.b16 %v272
      %v474 = vunpack.c.l.b16 %v273
      %v475 = vunpack.c.l.b16 %v274
      %v476 = vunpack.c.l.b16 %v275
      %v477 = vunpack.c.l.b16 %v276
      %v478 = vunpack.c.l.b16 %v277
      %v479 = vunpack.c.l.b16 %v278
      %v480 = vunpack.c.l.b16 %v279
      %v481 = vunpack.c.l.b16 %v280
      %v482 = vunpack.c.l.b16 %v281
      %v483 = vunpack.c.l.b16 %v282
      %v484 = vunpack.c.l.b16 %v283
      %v485 = vunpack.c.l.b16 %v284
      %v486 = vunpack.c.l.b16 %v285
      %v487 = vunpack.c.l.b16 %v286
      %v488 = vunpack.c.l.b16 %v287
      %v489 = vunpack.c.l.b16 %v288
      %v490 = vunpack.c.l.b16 %v289
      %v491 = vunpack.c.l.b16 %v290
      %v492 = vunpack.c.l.b16 %v291
      %v493 = vunpack.c.l.b16 %v292
      %v494 = vunpack.c.l.b16 %v293
      %v495 = vunpack.c.l.b16 %v294
      %v496 = vunpack.c.l.b16 %v295
      %v497 = vunpack.c.l.b16 %v296
      %v498 = vunpack.c.l.b16 %v297
      %v499 = vunpack.c.l.b16 %v298
      %v500 = vunpack.c.l.b16 %v299
      %v501 = vunpack.c.l.b16 %v300
      %v502 = vunpack.c.l.b16 %v301
      %v503 = vunpack.c.l.b16 %v302
      %v504 = vunpack.c.l.b16 %v303
      %v505 = vunpack.c.l.b16 %v304
      %v506 = vunpack.c.l.b16 %v305
      %v507 = vunpack.c.l.b16 %v306
      %v508 = vunpack.c.l.b16 %v307
      %v509 = vunpack.c.l.b16 %v308
      %v510 = vunpack.c.l.b16 %v309
      %v511 = vunpack.c.l.b16 %v310
      %v512 = vunpack.c.l.b16 %v311
      %v513 = vunpack.c.l.b16 %v312
      %v514 = vunpack.c.l.b16 %v313
      %v515 = vunpack.c.l.b16 %v314
      %v516 = vunpack.c.l.b16 %v315
      %v517 = vunpack.c.l.b16 %v316
      %v518 = vunpack.c.l.b16 %v317
      %v519 = vunpack.c.l.b16 %v318
      %v520 = vunpack.c.l.b16 %v319
      %v521 = vunpack.c.l.b16 %v320
      %v522 = vunpack.c.l.b16 %v321
      %v523 = vunpack.c.l.b16 %v322
      %v524 = vunpack.c.l.b16 %v323
      %v525 = vunpack.c.l.b16 %v324
      %v526 = vunpack.c.l.b16 %v325
      %v527 = vunpack.c.l.b16 %v326
      %v528 = vunpack.c.l.b16 %v327
      %v529 = vunpack.c.l.b16 %v328
      %v530 = vunpack.c.l.b16 %v329
      %v531 = vunpack.c.l.b16 %v330
      %v532 = vunpack.c.l.b16 %v331
      %v533 = vpack.c.b16 %v462, %v461
      %v534 = vpack.c.b16 %v464, %v463
      %v535 = vpack.c.b16 %v466, %v465
      %v536 = vpack.c.b16 %v468, %v467
      %v537 = vpack.c.b16 %v470, %v469
      %v538 = vpack.c.b16 %v472, %v471
      %v539 = vpack.c.b16 %v474, %v473
      %v540 = vpack.c.b16 %v476, %v475
      %v541 = vpack.c.b16 %v478, %v477
      %v542 = vpack.c.b16 %v480, %v479
      %v543 = vpack.c.b16 %v482, %v481
      %v544 = vpack.c.b16 %v484, %v483
      %v545 = vpack.c.b16 %v486, %v485
      %v546 = vpack.c.b16 %v488, %v487
      %v547 = vpack.c.b16 %v490, %v489
      %v548 = vpack.c.b16 %v492, %v491
      %v549 = vpack.c.b16 %v494, %v493
      %v550 = vpack.c.b16 %v496, %v495
      %v551 = vpack.c.b16 %v498, %v497
      %v552 = vpack.c.b16 %v500, %v499
      %v553 = vpack.c.b16 %v502, %v501
      %v554 = vpack.c.b16 %v504, %v503
      %v555 = vpack.c.b16 %v506, %v505
      %v556 = vpack.c.b16 %v508, %v507
      %v557 = vpack.c.b16 %v510, %v509
      %v558 = vpack.c.b16 %v512, %v511
      %v559 = vpack.c.b16 %v514, %v513
      %v560 = vpack.c.b16 %v516, %v515
      %v561 = vpack.c.b16 %v518, %v517
      %v562 = vpack.c.b16 %v520, %v519
      %v563 = vpack.c.b16 %v522, %v521
      %v564 = vpack.c.b16 %v524, %v523
      %v565 = vpack.c.b16 %v526, %v525
      %v566 = vpack.c.b16 %v528, %v527
      %v567 = vpack.c.b16 %v530, %v529
      %v568 = vpack.c.b16 %v532, %v531
      %vm605 = vcmask 523264
      %v607 = vsel %vm605, %v375, 0
      %v610 = vsel %vm605, %v380, 0
      %612 = vmatprep.subr.bf16.mxu0 0
      %613 = vmatpush1.bf16.msra.mxu0 %v540
      %614 = vmatprep.subr.bf16.mxu0 0
      %615 = vmatpush1.bf16.msra.mxu0 %v539
      %616 = vmatprep.subr.bf16.mxu0 0
      %617 = vmatpush1.bf16.msra.mxu0 %v538
      %618 = vmatprep.subr.bf16.mxu0 0
      %619 = vmatpush1.bf16.msra.mxu0 %v537
      %620 = vmatprep.subr.bf16.mxu0 0
      %621 = vmatpush1.bf16.msra.mxu0 %v536
      %622 = vmatprep.subr.bf16.mxu0 0
      %623 = vmatpush1.bf16.msra.mxu0 %v535
      %624 = vmatprep.subr.bf16.mxu0 0
      %625 = vmatpush1.bf16.msra.mxu0 %v534
      %626 = vmatprep.subr.bf16.mxu0 0
      %627 = vmatpush1.bf16.msra.mxu0 %v533
      %628 = vmatprep.subr.bf16.mxu0 0
      %629 = vmatpush2.bf16.msra.mxu0 %v548
      %630 = vmatprep.subr.bf16.mxu0 0
      %631 = vmatpush2.bf16.msra.mxu0 %v547
      %632 = vmatprep.subr.bf16.mxu0 0
      %633 = vmatpush2.bf16.msra.mxu0 %v546
      %634 = vmatprep.subr.bf16.mxu0 0
      %635 = vmatpush2.bf16.msra.mxu0 %v545
      %636 = vmatprep.subr.bf16.mxu0 0
      %637 = vmatpush2.bf16.msra.mxu0 %v544
      %638 = vmatprep.subr.bf16.mxu0 0
      %639 = vmatpush2.bf16.msra.mxu0 %v543
      %640 = vmatprep.subr.bf16.mxu0 0
      %641 = vmatpush2.bf16.msra.mxu0 %v542
      %642 = vmatprep.subr.bf16.mxu0 0
      %643 = vmatpush2.bf16.msra.mxu0 %v541
      %644 = vmatprep.mubr.bf16.mxu0 %v372
      %645 = vmatmul.mubr.bf16.gmra.mxu0 %v371
      %v646 = vpop.f32.mrf.mxu0
      %v647 = vadd.f32 %v337, %v646
      %v648 = vpop.f32.mrf.mxu0
      %v649 = vpop.f32.mrf.mxu0
      %v650 = vadd.f32 %v337, %v649
      %v651 = vpop.f32.mrf.mxu0
      %652 = vmatprep.mubr.bf16.mxu0 %v377
      %653 = vmatmul.mubr.bf16.gmra.mxu0 %v376
      %v654 = vpop.f32.mrf.mxu0
      %v655 = vadd.f32 %v337, %v654
      %v656 = vpop.f32.mrf.mxu0
      %v657 = vpop.f32.mrf.mxu0
      %v658 = vadd.f32 %v337, %v657
      %v659 = vpop.f32.mrf.mxu0
      %660 = vdwg.mxu0
      %661 = vmatprep.subr.bf16.mxu0 0
      %662 = vmatpush1.bf16.msra.mxu0 %v556
      %663 = vmatprep.subr.bf16.mxu0 0
      %664 = vmatpush1.bf16.msra.mxu0 %v555
      %665 = vmatprep.subr.bf16.mxu0 0
      %666 = vmatpush1.bf16.msra.mxu0 %v554
      %667 = vmatprep.subr.bf16.mxu0 0
      %668 = vmatpush1.bf16.msra.mxu0 %v553
      %669 = vmatprep.subr.bf16.mxu0 0
      %670 = vmatpush1.bf16.msra.mxu0 %v552
      %671 = vmatprep.subr.bf16.mxu0 0
      %672 = vmatpush1.bf16.msra.mxu0 %v551
      %673 = vmatprep.subr.bf16.mxu0 0
      %674 = vmatpush1.bf16.msra.mxu0 %v550
      %675 = vmatprep.subr.bf16.mxu0 0
      %676 = vmatpush1.bf16.msra.mxu0 %v549
      %677 = vmatprep.subr.bf16.mxu0 0
      %678 = vmatpush2.bf16.msra.mxu0 %v564
      %679 = vmatprep.subr.bf16.mxu0 0
      %680 = vmatpush2.bf16.msra.mxu0 %v563
      %681 = vmatprep.subr.bf16.mxu0 0
      %682 = vmatpush2.bf16.msra.mxu0 %v562
      %683 = vmatprep.subr.bf16.mxu0 0
      %684 = vmatpush2.bf16.msra.mxu0 %v561
      %685 = vmatprep.subr.bf16.mxu0 0
      %686 = vmatpush2.bf16.msra.mxu0 %v560
      %687 = vmatprep.subr.bf16.mxu0 0
      %688 = vmatpush2.bf16.msra.mxu0 %v559
      %689 = vmatprep.subr.bf16.mxu0 0
      %690 = vmatpush2.bf16.msra.mxu0 %v558
      %691 = vmatprep.subr.bf16.mxu0 0
      %692 = vmatpush2.bf16.msra.mxu0 %v557
      %693 = vmatprep.mubr.bf16.mxu0 %v374
      %694 = vmatmul.mubr.bf16.gmra.mxu0 %v373
      %v695 = vpop.f32.mrf.mxu0
      %v696 = vadd.f32 %v647, %v695
      %v697 = vpop.f32.mrf.mxu0
      %v698 = vpop.f32.mrf.mxu0
      %v699 = vadd.f32 %v650, %v698
      %v700 = vpop.f32.mrf.mxu0
      %701 = vmatprep.mubr.bf16.mxu0 %v379
      %702 = vmatmul.mubr.bf16.gmra.mxu0 %v378
      %v703 = vpop.f32.mrf.mxu0
      %v704 = vadd.f32 %v655, %v703
      %v705 = vpop.f32.mrf.mxu0
      %v706 = vpop.f32.mrf.mxu0
      %v707 = vadd.f32 %v658, %v706
      %v708 = vpop.f32.mrf.mxu0
      %709 = vdwg.mxu0
      %710 = vmatprep.subr.bf16.mxu0 0
      %711 = vmatpush1.bf16.msra.mxu0 0
      %712 = vmatprep.subr.bf16.mxu0 0
      %713 = vmatpush1.bf16.msra.mxu0 0
      %714 = vmatprep.subr.bf16.mxu0 0
      %715 = vmatpush1.bf16.msra.mxu0 0
      %716 = vmatprep.subr.bf16.mxu0 0
      %717 = vmatpush1.bf16.msra.mxu0 0
      %718 = vmatprep.subr.bf16.mxu0 0
      %719 = vmatpush1.bf16.msra.mxu0 %v568
      %720 = vmatprep.subr.bf16.mxu0 0
      %721 = vmatpush1.bf16.msra.mxu0 %v567
      %722 = vmatprep.subr.bf16.mxu0 0
      %723 = vmatpush1.bf16.msra.mxu0 %v566
      %724 = vmatprep.subr.bf16.mxu0 0
      %725 = vmatpush1.bf16.msra.mxu0 %v565
      %726 = vmatprep.subr.bf16.mxu0 0
      %727 = vmatpush2.bf16.msra.mxu0 0
      %728 = vmatprep.subr.bf16.mxu0 0
      %729 = vmatpush2.bf16.msra.mxu0 0
      %730 = vmatprep.subr.bf16.mxu0 0
      %731 = vmatpush2.bf16.msra.mxu0 0
      %732 = vmatprep.subr.bf16.mxu0 0
      %733 = vmatpush2.bf16.msra.mxu0 0
      %734 = vmatprep.subr.bf16.mxu0 0
      %735 = vmatpush2.bf16.msra.mxu0 0
      %736 = vmatprep.subr.bf16.mxu0 0
      %737 = vmatpush2.bf16.msra.mxu0 0
      %738 = vmatprep.subr.bf16.mxu0 0
      %739 = vmatpush2.bf16.msra.mxu0 0
      %740 = vmatprep.subr.bf16.mxu0 0
      %741 = vmatpush2.bf16.msra.mxu0 0
      %742 = vmatprep.mubr.bf16.mxu0 0
      %743 = vmatmul.mubr.bf16.gmra.mxu0 %v607
      %v744 = vpop.f32.mrf.mxu0
      %v745 = vadd.f32 %v696, %v744
      %v746 = vpop.f32.mrf.mxu0
      %v747 = vpop.f32.mrf.mxu0
      %v748 = vadd.f32 %v699, %v747
      %v749 = vpop.f32.mrf.mxu0
      %750 = vmatprep.mubr.bf16.mxu0 0
      %751 = vmatmul.mubr.bf16.gmra.mxu0 %v610
      %v752 = vpop.f32.mrf.mxu0
      %v753 = vadd.f32 %v704, %v752
      %v754 = vpop.f32.mrf.mxu0
      %v755 = vpop.f32.mrf.mxu0
      %v756 = vadd.f32 %v707, %v755
      %v757 = vpop.f32.mrf.mxu0
      %758 = vdwg.mxu0
      %v759 = vmax.f32 %v745, 0.0
      %v760 = vmax.f32 %v748, 0.0
      %v761 = vmax.f32 %v753, 0.0
      %v762 = vmax.f32 %v756, 0.0
      %v763 = vpack.c.bf16 %v760, %v759
      %v764 = vpack.c.bf16 %v762, %v761
      %v767 = vunpack.c.l.b16 %v763
      %v768 = vunpack.c.h.b16 %v763
      %v769 = vunpack.c.l.b16 %v764
      %v770 = vunpack.c.h.b16 %v764
      %v771 = vpack.c.b16 %v767, %v767
      %v772 = vpack.c.b16 %v768, %v768
      %v773 = vpack.c.b16 %v769, %v769
      %v774 = vpack.c.b16 %v770, %v770
      %779 = vst [vmem:[%s245] sm:$0xf] %v771
      %780 = vst [vmem:[%s245 + $0x4] sm:$0xf] %v772
      %781 = vst [vmem:[%s245 + $0x8] sm:$0xf] %v773
      %782 = vst [vmem:[%s245 + $0xc] sm:$0xf] %v774
      %s783 = smul.u32 4, %s19
      %p784 = scmp.lt.s32.totalorder %s18, 1
      %s785 = scalar_select %p784, %s18, 1
      %p786 = scmp.lt.s32.totalorder %s783, 3
      %s787 = scalar_select %p786, %s783, 3
      %s788 = smul.addr %s785, 4
      %s789 = sadd.s32 %s787, %s788
      %s790 = smul.addr %s789, 4
      %s791 = scalar_lea.vmem %s3, %s790
      // Predicated region
      $region33: #{nature_att_encoder_forward.6} parent=31 // pred_check
        %p792 = pneg %p126
      $region34: #{nature_att_encoder_forward.6} parent=31 // pred_check_branch
        %794 = sbr.rel (%p792) target = $region36
      $region35: #{nature_att_encoder_forward.6} parent=31 // pred_region
        %s795 = smul.u32 4, %s19
      $region36: #{nature_att_encoder_forward.6} parent=31 // pred_fallthru
        _
    $region32: #{nature_att_encoder_forward.6} parent=5 // pred_fallthru
      _
    %p796 = scmp.le.s32.totalorder 2, %s9
    // Predicated region
    $region37: #{nature_att_encoder_forward.6} parent=5 // pred_check
      %p797 = pneg %p796
    $region38: #{nature_att_encoder_forward.6} parent=5 // pred_check_branch
      %799 = sbr.rel (%p797) target = $region40
    $region39: #{nature_att_encoder_forward.6} parent=5 // pred_region
      %s800 = ssub.s32 %s9, 2
      // Predicated region
      $region41: #{nature_att_encoder_forward.6} parent=39 // pred_check
        %p801 = pneg %p132
      $region42: #{nature_att_encoder_forward.6} parent=39 // pred_check_branch
        %803 = sbr.rel (%p801) target = $region44
      $region43: #{nature_att_encoder_forward.6} parent=39 // pred_region
        %s804 = smul.u32 4, %s21
        %p805 = scmp.lt.s32.totalorder %s20, 1
        %s806 = scalar_select %p805, %s20, 1
        %p807 = scmp.lt.s32.totalorder %s804, 3
        %s808 = scalar_select %p807, %s804, 3
        %s809 = smul.addr %s806, 4
        %s810 = sadd.s32 %s808, %s809
        %s811 = smul.addr %s810, 4
        %s812 = scalar_lea.vmem %s3, %s811
      $region44: #{nature_att_encoder_forward.6} parent=39 // pred_fallthru
        _
    $region40: #{nature_att_encoder_forward.6} parent=5 // pred_fallthru
      _
  $region6: #{nature_att_encoder_forward.6} parent=0 // loop_footer
    %s13 = sadd.s32 1, %s9
  $region7: #{nature_att_encoder_forward.6} parent=0 // loop_footer_branch
    %8 = sbr.rel target = $region3
  $region8: #{nature_att_encoder_forward.6} parent=0 // loop_exit
    _

// kernel: nature_att_encoder_forward.7
$region0: #{nature_att_encoder_forward.7}
  #allocation0 [shape = 'u32[]', space=smem, size = 0x4, offset = 0x4, fixed_abs, tag = 'smem constant byte address 0x4 - core index']
  #allocation1 [shape = 'u32[144,128]{1,0:T(1,128)}', space=vmem, size = 0x12000, scoped, tag = 'internal scratch']
  %s0 = inlined_call_operand.smem [shape: u32[34], index: -1, kind: input, shape index: {}]
  %s1 = sld [smem:[%s0]]
  %s2 = scalar_lea.smem %s0, 1
  %s3 = sld [smem:[%s2]]
  %s4 = scalar_lea.smem %s0, 2
  %s5 = sld [smem:[%s4]]
  %s6 = scalar_lea.smem %s0, 3
  %s7 = sld [smem:[%s6]]
  %s8 = scalar_lea.smem %s0, 4
  %s9 = sld [smem:[%s8]]
  %s10 = scalar_lea.smem %s0, 5
  %s11 = sld [smem:[%s10]]
  %s12 = scalar_lea.smem %s0, 6
  %s13 = sld [smem:[%s12]]
  %s14 = scalar_lea.smem %s0, 7
  %s15 = sld [smem:[%s14]]
  %s16 = scalar_lea.smem %s0, 8
  %s17 = sld [smem:[%s16]]
  %s18 = scalar_lea.smem %s0, 9
  %s19 = sld [smem:[%s18]]
  %s20 = scalar_lea.smem %s0, 10
  %s21 = sld [smem:[%s20]]
  %s22 = scalar_lea.smem %s0, 11
  %s23 = sld [smem:[%s22]]
  %s24 = scalar_lea.smem %s0, 12
  %s25 = sld [smem:[%s24]]
  %s26 = scalar_lea.smem %s0, 13
  %s27 = sld [smem:[%s26]]
  %s28 = scalar_lea.smem %s0, 14
  %s29 = sld [smem:[%s28]]
  %s30 = scalar_lea.smem %s0, 15
  %s31 = sld [smem:[%s30]]
  %s32 = scalar_lea.smem %s0, 16
  %s33 = sld [smem:[%s32]]
  %s34 = scalar_lea.smem %s0, 17
  %s35 = sld [smem:[%s34]]
  %s36 = scalar_lea.smem %s0, 18
  %s37 = sld [smem:[%s36]]
  %s38 = scalar_lea.smem %s0, 19
  %s39 = sld [smem:[%s38]]
  %s40 = scalar_lea.smem %s0, 20
  %s41 = sld [smem:[%s40]]
  %s42 = scalar_lea.smem %s0, 21
  %s43 = sld [smem:[%s42]]
  %s44 = scalar_lea.smem %s0, 22
  %s45 = sld [smem:[%s44]]
  %s46 = scalar_lea.smem %s0, 23
  %s47 = sld [smem:[%s46]]
  %s48 = scalar_lea.smem %s0, 24
  %s49 = sld [smem:[%s48]]
  %s50 = scalar_lea.smem %s0, 25
  %s51 = sld [smem:[%s50]]
  %s52 = scalar_lea.smem %s0, 26
  %s53 = sld [smem:[%s52]]
  %s54 = scalar_lea.smem %s0, 27
  %s55 = sld [smem:[%s54]]
  %s56 = scalar_lea.smem %s0, 28
  %s57 = sld [smem:[%s56]]
  %s58 = scalar_lea.smem %s0, 29
  %s59 = sld [smem:[%s58]]
  %s60 = scalar_lea.smem %s0, 30
  %s61 = sld [smem:[%s60]]
  %s62 = scalar_lea.smem %s0, 31
  %s63 = sld [smem:[%s62]]
  %s64 = scalar_lea.smem %s0, 32
  %s65 = sld [smem:[%s64]]
  %s66 = scalar_lea.smem %s0, 33
  %s67 = sld [smem:[%s66]]
  %s68 = sld [smem:[#allocation0]]
  $region142: #{nature_att_encoder_forward.7} parent=0
    _
  %s70 = ssub.s32 1, %s68
  %s71 = scalar_select 0, %s70, %s68
  $region1: #{nature_att_encoder_forward.7} parent=0
    #allocation2 [shape = 'u8[2048]{0}', space=vmem, size = 0x800, scoped, tag = 'output window, operand 0, single buffered']
    #allocation3 [shape = 's32[1]{0}', space=sflag, size = 0x4, scoped, tag = 'scoped memory for nature_att_encoder_forward.7']
    %72 = vsyncpa [#allocation3], 0
    // Predicated region
    $region2: #{nature_att_encoder_forward.7} parent=1 // pred_check
      _
    $region3: #{nature_att_encoder_forward.7} parent=1 // pred_check_branch
      %74 = sbr.rel (0) target = $region5
    $region4: #{nature_att_encoder_forward.7} parent=1 // pred_region
      _
    $region5: #{nature_att_encoder_forward.7} parent=1 // pred_fallthru
      _
    // Predicated region
    $region6: #{nature_att_encoder_forward.7} parent=1 // pred_check
      _
    $region7: #{nature_att_encoder_forward.7} parent=1 // pred_check_branch
      %76 = sbr.rel (0) target = $region9
    $region8: #{nature_att_encoder_forward.7} parent=1 // pred_region
      _
    $region9: #{nature_att_encoder_forward.7} parent=1 // pred_fallthru
      _
    // Predicated region
    $region10: #{nature_att_encoder_forward.7} parent=1 // pred_check
      _
    $region11: #{nature_att_encoder_forward.7} parent=1 // pred_check_branch
      %78 = sbr.rel (0) target = $region13
    $region12: #{nature_att_encoder_forward.7} parent=1 // pred_region
      _
    $region13: #{nature_att_encoder_forward.7} parent=1 // pred_fallthru
      _
    // Predicated region
    $region14: #{nature_att_encoder_forward.7} parent=1 // pred_check
      _
    $region15: #{nature_att_encoder_forward.7} parent=1 // pred_check_branch
      %80 = sbr.rel (0) target = $region17
    $region16: #{nature_att_encoder_forward.7} parent=1 // pred_region
      _
    $region17: #{nature_att_encoder_forward.7} parent=1 // pred_fallthru
      _
    // Predicated region
    $region18: #{nature_att_encoder_forward.7} parent=1 // pred_check
      _
    $region19: #{nature_att_encoder_forward.7} parent=1 // pred_check_branch
      %82 = sbr.rel (0) target = $region21
    $region20: #{nature_att_encoder_forward.7} parent=1 // pred_region
      _
    $region21: #{nature_att_encoder_forward.7} parent=1 // pred_fallthru
      _
    // Predicated region
    $region22: #{nature_att_encoder_forward.7} parent=1 // pred_check
      _
    $region23: #{nature_att_encoder_forward.7} parent=1 // pred_check_branch
      %84 = sbr.rel (0) target = $region25
    $region24: #{nature_att_encoder_forward.7} parent=1 // pred_region
      _
    $region25: #{nature_att_encoder_forward.7} parent=1 // pred_fallthru
      _
    // Predicated region
    $region26: #{nature_att_encoder_forward.7} parent=1 // pred_check
      _
    $region27: #{nature_att_encoder_forward.7} parent=1 // pred_check_branch
      %86 = sbr.rel (0) target = $region29
    $region28: #{nature_att_encoder_forward.7} parent=1 // pred_region
      _
    $region29: #{nature_att_encoder_forward.7} parent=1 // pred_fallthru
      _
    // Predicated region
    $region30: #{nature_att_encoder_forward.7} parent=1 // pred_check
      _
    $region31: #{nature_att_encoder_forward.7} parent=1 // pred_check_branch
      %88 = sbr.rel (0) target = $region33
    $region32: #{nature_att_encoder_forward.7} parent=1 // pred_region
      _
    $region33: #{nature_att_encoder_forward.7} parent=1 // pred_fallthru
      _
    // Predicated region
    $region34: #{nature_att_encoder_forward.7} parent=1 // pred_check
      _
    $region35: #{nature_att_encoder_forward.7} parent=1 // pred_check_branch
      %90 = sbr.rel (0) target = $region37
    $region36: #{nature_att_encoder_forward.7} parent=1 // pred_region
      _
    $region37: #{nature_att_encoder_forward.7} parent=1 // pred_fallthru
      _
    // Predicated region
    $region38: #{nature_att_encoder_forward.7} parent=1 // pred_check
      _
    $region39: #{nature_att_encoder_forward.7} parent=1 // pred_check_branch
      %92 = sbr.rel (0) target = $region41
    $region40: #{nature_att_encoder_forward.7} parent=1 // pred_region
      _
    $region41: #{nature_att_encoder_forward.7} parent=1 // pred_fallthru
      _
    // Predicated region
    $region42: #{nature_att_encoder_forward.7} parent=1 // pred_check
      _
    $region43: #{nature_att_encoder_forward.7} parent=1 // pred_check_branch
      %94 = sbr.rel (0) target = $region45
    $region44: #{nature_att_encoder_forward.7} parent=1 // pred_region
      _
    $region45: #{nature_att_encoder_forward.7} parent=1 // pred_fallthru
      _
    // Predicated region
    $region46: #{nature_att_encoder_forward.7} parent=1 // pred_check
      _
    $region47: #{nature_att_encoder_forward.7} parent=1 // pred_check_branch
      %96 = sbr.rel (0) target = $region49
    $region48: #{nature_att_encoder_forward.7} parent=1 // pred_region
      _
    $region49: #{nature_att_encoder_forward.7} parent=1 // pred_fallthru
      _
    // Predicated region
    $region50: #{nature_att_encoder_forward.7} parent=1 // pred_check
      _
    $region51: #{nature_att_encoder_forward.7} parent=1 // pred_check_branch
      %98 = sbr.rel (0) target = $region53
    $region52: #{nature_att_encoder_forward.7} parent=1 // pred_region
      _
    $region53: #{nature_att_encoder_forward.7} parent=1 // pred_fallthru
      _
    // Predicated region
    $region54: #{nature_att_encoder_forward.7} parent=1 // pred_check
      _
    $region55: #{nature_att_encoder_forward.7} parent=1 // pred_check_branch
      %100 = sbr.rel (0) target = $region57
    $region56: #{nature_att_encoder_forward.7} parent=1 // pred_region
      _
    $region57: #{nature_att_encoder_forward.7} parent=1 // pred_fallthru
      _
    // Predicated region
    $region58: #{nature_att_encoder_forward.7} parent=1 // pred_check
      _
    $region59: #{nature_att_encoder_forward.7} parent=1 // pred_check_branch
      %102 = sbr.rel (0) target = $region61
    $region60: #{nature_att_encoder_forward.7} parent=1 // pred_region
      _
    $region61: #{nature_att_encoder_forward.7} parent=1 // pred_fallthru
      _
    // Predicated region
    $region62: #{nature_att_encoder_forward.7} parent=1 // pred_check
      _
    $region63: #{nature_att_encoder_forward.7} parent=1 // pred_check_branch
      %104 = sbr.rel (0) target = $region65
    $region64: #{nature_att_encoder_forward.7} parent=1 // pred_region
      _
    $region65: #{nature_att_encoder_forward.7} parent=1 // pred_fallthru
      _
    // Predicated region
    $region66: #{nature_att_encoder_forward.7} parent=1 // pred_check
      _
    $region67: #{nature_att_encoder_forward.7} parent=1 // pred_check_branch
      %106 = sbr.rel (0) target = $region69
    $region68: #{nature_att_encoder_forward.7} parent=1 // pred_region
      _
    $region69: #{nature_att_encoder_forward.7} parent=1 // pred_fallthru
      _
    // Predicated region
    $region70: #{nature_att_encoder_forward.7} parent=1 // pred_check
      _
    $region71: #{nature_att_encoder_forward.7} parent=1 // pred_check_branch
      %108 = sbr.rel (0) target = $region73
    $region72: #{nature_att_encoder_forward.7} parent=1 // pred_region
      _
    $region73: #{nature_att_encoder_forward.7} parent=1 // pred_fallthru
      _
    // Predicated region
    $region74: #{nature_att_encoder_forward.7} parent=1 // pred_check
      _
    $region75: #{nature_att_encoder_forward.7} parent=1 // pred_check_branch
      %110 = sbr.rel (0) target = $region77
    $region76: #{nature_att_encoder_forward.7} parent=1 // pred_region
      _
    $region77: #{nature_att_encoder_forward.7} parent=1 // pred_fallthru
      _
    // Predicated region
    $region78: #{nature_att_encoder_forward.7} parent=1 // pred_check
      _
    $region79: #{nature_att_encoder_forward.7} parent=1 // pred_check_branch
      %112 = sbr.rel (0) target = $region81
    $region80: #{nature_att_encoder_forward.7} parent=1 // pred_region
      _
    $region81: #{nature_att_encoder_forward.7} parent=1 // pred_fallthru
      _
    // Predicated region
    $region82: #{nature_att_encoder_forward.7} parent=1 // pred_check
      _
    $region83: #{nature_att_encoder_forward.7} parent=1 // pred_check_branch
      %114 = sbr.rel (0) target = $region85
    $region84: #{nature_att_encoder_forward.7} parent=1 // pred_region
      _
    $region85: #{nature_att_encoder_forward.7} parent=1 // pred_fallthru
      _
    // Predicated region
    $region86: #{nature_att_encoder_forward.7} parent=1 // pred_check
      _
    $region87: #{nature_att_encoder_forward.7} parent=1 // pred_check_branch
      %116 = sbr.rel (0) target = $region89
    $region88: #{nature_att_encoder_forward.7} parent=1 // pred_region
      _
    $region89: #{nature_att_encoder_forward.7} parent=1 // pred_fallthru
      _
    // Predicated region
    $region90: #{nature_att_encoder_forward.7} parent=1 // pred_check
      _
    $region91: #{nature_att_encoder_forward.7} parent=1 // pred_check_branch
      %118 = sbr.rel (0) target = $region93
    $region92: #{nature_att_encoder_forward.7} parent=1 // pred_region
      _
    $region93: #{nature_att_encoder_forward.7} parent=1 // pred_fallthru
      _
    // Predicated region
    $region94: #{nature_att_encoder_forward.7} parent=1 // pred_check
      _
    $region95: #{nature_att_encoder_forward.7} parent=1 // pred_check_branch
      %120 = sbr.rel (0) target = $region97
    $region96: #{nature_att_encoder_forward.7} parent=1 // pred_region
      _
    $region97: #{nature_att_encoder_forward.7} parent=1 // pred_fallthru
      _
    // Predicated region
    $region98: #{nature_att_encoder_forward.7} parent=1 // pred_check
      _
    $region99: #{nature_att_encoder_forward.7} parent=1 // pred_check_branch
      %122 = sbr.rel (0) target = $region101
    $region100: #{nature_att_encoder_forward.7} parent=1 // pred_region
      _
    $region101: #{nature_att_encoder_forward.7} parent=1 // pred_fallthru
      _
    // Predicated region
    $region102: #{nature_att_encoder_forward.7} parent=1 // pred_check
      _
    $region103: #{nature_att_encoder_forward.7} parent=1 // pred_check_branch
      %124 = sbr.rel (0) target = $region105
    $region104: #{nature_att_encoder_forward.7} parent=1 // pred_region
      _
    $region105: #{nature_att_encoder_forward.7} parent=1 // pred_fallthru
      _
    // Predicated region
    $region106: #{nature_att_encoder_forward.7} parent=1 // pred_check
      _
    $region107: #{nature_att_encoder_forward.7} parent=1 // pred_check_branch
      %126 = sbr.rel (0) target = $region109
    $region108: #{nature_att_encoder_forward.7} parent=1 // pred_region
      _
    $region109: #{nature_att_encoder_forward.7} parent=1 // pred_fallthru
      _
    // Predicated region
    $region110: #{nature_att_encoder_forward.7} parent=1 // pred_check
      _
    $region111: #{nature_att_encoder_forward.7} parent=1 // pred_check_branch
      %128 = sbr.rel (0) target = $region113
    $region112: #{nature_att_encoder_forward.7} parent=1 // pred_region
      _
    $region113: #{nature_att_encoder_forward.7} parent=1 // pred_fallthru
      _
    // Predicated region
    $region114: #{nature_att_encoder_forward.7} parent=1 // pred_check
      _
    $region115: #{nature_att_encoder_forward.7} parent=1 // pred_check_branch
      %130 = sbr.rel (0) target = $region117
    $region116: #{nature_att_encoder_forward.7} parent=1 // pred_region
      _
    $region117: #{nature_att_encoder_forward.7} parent=1 // pred_fallthru
      _
    // Predicated region
    $region118: #{nature_att_encoder_forward.7} parent=1 // pred_check
      _
    $region119: #{nature_att_encoder_forward.7} parent=1 // pred_check_branch
      %132 = sbr.rel (0) target = $region121
    $region120: #{nature_att_encoder_forward.7} parent=1 // pred_region
      _
    $region121: #{nature_att_encoder_forward.7} parent=1 // pred_fallthru
      _
    // Predicated region
    $region122: #{nature_att_encoder_forward.7} parent=1 // pred_check
      _
    $region123: #{nature_att_encoder_forward.7} parent=1 // pred_check_branch
      %134 = sbr.rel (0) target = $region125
    $region124: #{nature_att_encoder_forward.7} parent=1 // pred_region
      _
    $region125: #{nature_att_encoder_forward.7} parent=1 // pred_fallthru
      _
    // Predicated region
    $region126: #{nature_att_encoder_forward.7} parent=1 // pred_check
      _
    $region127: #{nature_att_encoder_forward.7} parent=1 // pred_check_branch
      %136 = sbr.rel (0) target = $region129
    $region128: #{nature_att_encoder_forward.7} parent=1 // pred_region
      _
    $region129: #{nature_att_encoder_forward.7} parent=1 // pred_fallthru
      _
    // Predicated region
    $region130: #{nature_att_encoder_forward.7} parent=1 // pred_check
      _
    $region131: #{nature_att_encoder_forward.7} parent=1 // pred_check_branch
      %138 = sbr.rel (0) target = $region133
    $region132: #{nature_att_encoder_forward.7} parent=1 // pred_region
      _
    $region133: #{nature_att_encoder_forward.7} parent=1 // pred_fallthru
      _
    %v140 = vld [vmem:[%s1] sm:$0xff]
    %v141 = vld [vmem:[%s7] sm:$0xf]
    %v142 = vld [vmem:[%s7 + $0x4] sm:$0xf]
    %v143 = vld [vmem:[%s7 + $0x8] sm:$0xf]
    %v144 = vld [vmem:[%s7 + $0xc] sm:$0xf]
    %v145 = vld [vmem:[%s7 + $0x10] sm:$0xf]
    %v146 = vld [vmem:[%s7 + $0x14] sm:$0xf]
    %v147 = vld [vmem:[%s7 + $0x18] sm:$0xf]
    %v148 = vld [vmem:[%s7 + $0x1c] sm:$0xf]
    %v149 = vld [vmem:[%s7 + $0x20] sm:$0xf]
    %v150 = vld [vmem:[%s7 + $0x24] sm:$0xf]
    %v151 = vld [vmem:[%s7 + $0x28] sm:$0xf]
    %v152 = vld [vmem:[%s7 + $0x2c] sm:$0xf]
    %v153 = vld [vmem:[%s7 + $0x30] sm:$0xf]
    %v154 = vld [vmem:[%s7 + $0x34] sm:$0xf]
    %v155 = vld [vmem:[%s7 + $0x38] sm:$0xf]
    %v156 = vld [vmem:[%s7 + $0x3c] sm:$0xf]
    %v157 = vld [vmem:[%s7 + $0x40] sm:$0xf]
    %v158 = vld [vmem:[%s7 + $0x44] sm:$0xf]
    %v159 = vld [vmem:[%s7 + $0x48] sm:$0xf]
    %v160 = vld [vmem:[%s7 + $0x4c] sm:$0xf]
    %v161 = vld [vmem:[%s7 + $0x50] sm:$0xf]
    %v162 = vld [vmem:[%s7 + $0x54] sm:$0xf]
    %v163 = vld [vmem:[%s7 + $0x58] sm:$0xf]
    %v164 = vld [vmem:[%s7 + $0x5c] sm:$0xf]
    %v165 = vld [vmem:[%s7 + $0x60] sm:$0xf]
    %v166 = vld [vmem:[%s7 + $0x64] sm:$0xf]
    %v167 = vld [vmem:[%s7 + $0x68] sm:$0xf]
    %v168 = vld [vmem:[%s7 + $0x6c] sm:$0xf]
    %v169 = vld [vmem:[%s7 + $0x70] sm:$0xf]
    %v170 = vld [vmem:[%s7 + $0x74] sm:$0xf]
    %v171 = vld [vmem:[%s7 + $0x78] sm:$0xf]
    %v172 = vld [vmem:[%s7 + $0x7c] sm:$0xf]
    %v173 = vld [vmem:[%s7 + $0x80] sm:$0xf]
    %v174 = vld [vmem:[%s7 + $0x84] sm:$0xf]
    %v175 = vld [vmem:[%s7 + $0x88] sm:$0xf]
    %v176 = vld [vmem:[%s7 + $0x8c] sm:$0xf]
    %v177 = vld [vmem:[%s7 + $0x90] sm:$0xf]
    %v178 = vld [vmem:[%s7 + $0x94] sm:$0xf]
    %v179 = vld [vmem:[%s7 + $0x98] sm:$0xf]
    %v180 = vld [vmem:[%s7 + $0x9c] sm:$0xf]
    %v181 = vld [vmem:[%s7 + $0xa0] sm:$0xf]
    %v182 = vld [vmem:[%s7 + $0xa4] sm:$0xf]
    %v183 = vld [vmem:[%s7 + $0xa8] sm:$0xf]
    %v184 = vld [vmem:[%s7 + $0xac] sm:$0xf]
    %v185 = vld [vmem:[%s7 + $0xb0] sm:$0xf]
    %v186 = vld [vmem:[%s7 + $0xb4] sm:$0xf]
    %v187 = vld [vmem:[%s7 + $0xb8] sm:$0xf]
    %v188 = vld [vmem:[%s7 + $0xbc] sm:$0xf]
    %v189 = vld [vmem:[%s7 + $0xc0] sm:$0xf]
    %v190 = vld [vmem:[%s7 + $0xc4] sm:$0xf]
    %v191 = vld [vmem:[%s7 + $0xc8] sm:$0xf]
    %v192 = vld [vmem:[%s7 + $0xcc] sm:$0xf]
    %v193 = vld [vmem:[%s7 + $0xd0] sm:$0xf]
    %v194 = vld [vmem:[%s7 + $0xd4] sm:$0xf]
    %v195 = vld [vmem:[%s7 + $0xd8] sm:$0xf]
    %v196 = vld [vmem:[%s7 + $0xdc] sm:$0xf]
    %v197 = vld [vmem:[%s7 + $0xe0] sm:$0xf]
    %v198 = vld [vmem:[%s7 + $0xe4] sm:$0xf]
    %v199 = vld [vmem:[%s7 + $0xe8] sm:$0xf]
    %v200 = vld [vmem:[%s7 + $0xec] sm:$0xf]
    %v201 = vld [vmem:[%s7 + $0xf0] sm:$0xf]
    %v202 = vld [vmem:[%s7 + $0xf4] sm:$0xf]
    %v203 = vld [vmem:[%s7 + $0xf8] sm:$0xf]
    %v204 = vld [vmem:[%s7 + $0xfc] sm:$0xf]
    %v205 = vld [vmem:[%s7 + $0x100] sm:$0xf]
    %v206 = vld [vmem:[%s7 + $0x104] sm:$0xf]
    %v207 = vld [vmem:[%s7 + $0x108] sm:$0xf]
    %v208 = vld [vmem:[%s7 + $0x10c] sm:$0xf]
    %v209 = vld [vmem:[%s7 + $0x110] sm:$0xf]
    %v210 = vld [vmem:[%s7 + $0x114] sm:$0xf]
    %v211 = vld [vmem:[%s7 + $0x118] sm:$0xf]
    %v212 = vld [vmem:[%s7 + $0x11c] sm:$0xf]
    %v213 = vld [vmem:[%s7 + $0x120] sm:$0xf]
    %v214 = vld [vmem:[%s7 + $0x124] sm:$0xf]
    %v215 = vld [vmem:[%s7 + $0x128] sm:$0xf]
    %v216 = vld [vmem:[%s7 + $0x12c] sm:$0xf]
    %v217 = vld [vmem:[%s7 + $0x130] sm:$0xf]
    %v218 = vld [vmem:[%s7 + $0x134] sm:$0xf]
    %v219 = vld [vmem:[%s7 + $0x138] sm:$0xf]
    %v220 = vld [vmem:[%s7 + $0x13c] sm:$0xf]
    %v221 = vld [vmem:[%s7 + $0x140] sm:$0xf]
    %v222 = vld [vmem:[%s7 + $0x144] sm:$0xf]
    %v223 = vld [vmem:[%s7 + $0x148] sm:$0xf]
    %v224 = vld [vmem:[%s7 + $0x14c] sm:$0xf]
    %v225 = vld [vmem:[%s7 + $0x150] sm:$0xf]
    %v226 = vld [vmem:[%s7 + $0x154] sm:$0xf]
    %v227 = vld [vmem:[%s7 + $0x158] sm:$0xf]
    %v228 = vld [vmem:[%s7 + $0x15c] sm:$0xf]
    %v229 = vld [vmem:[%s7 + $0x160] sm:$0xf]
    %v230 = vld [vmem:[%s7 + $0x164] sm:$0xf]
    %v231 = vld [vmem:[%s7 + $0x168] sm:$0xf]
    %v232 = vld [vmem:[%s7 + $0x16c] sm:$0xf]
    %v233 = vld [vmem:[%s7 + $0x170] sm:$0xf]
    %v234 = vld [vmem:[%s7 + $0x174] sm:$0xf]
    %v235 = vld [vmem:[%s7 + $0x178] sm:$0xf]
    %v236 = vld [vmem:[%s7 + $0x17c] sm:$0xf]
    %v237 = vld [vmem:[%s7 + $0x180] sm:$0xf]
    %v238 = vld [vmem:[%s7 + $0x184] sm:$0xf]
    %v239 = vld [vmem:[%s7 + $0x188] sm:$0xf]
    %v240 = vld [vmem:[%s7 + $0x18c] sm:$0xf]
    %v241 = vld [vmem:[%s7 + $0x190] sm:$0xf]
    %v242 = vld [vmem:[%s7 + $0x194] sm:$0xf]
    %v243 = vld [vmem:[%s7 + $0x198] sm:$0xf]
    %v244 = vld [vmem:[%s7 + $0x19c] sm:$0xf]
    %v245 = vld [vmem:[%s7 + $0x1a0] sm:$0xf]
    %v246 = vld [vmem:[%s7 + $0x1a4] sm:$0xf]
    %v247 = vld [vmem:[%s7 + $0x1a8] sm:$0xf]
    %v248 = vld [vmem:[%s7 + $0x1ac] sm:$0xf]
    %v249 = vld [vmem:[%s7 + $0x1b0] sm:$0xf]
    %v250 = vld [vmem:[%s7 + $0x1b4] sm:$0xf]
    %v251 = vld [vmem:[%s7 + $0x1b8] sm:$0xf]
    %v252 = vld [vmem:[%s7 + $0x1bc] sm:$0xf]
    %v253 = vld [vmem:[%s7 + $0x1c0] sm:$0xf]
    %v254 = vld [vmem:[%s7 + $0x1c4] sm:$0xf]
    %v255 = vld [vmem:[%s7 + $0x1c8] sm:$0xf]
    %v256 = vld [vmem:[%s7 + $0x1cc] sm:$0xf]
    %v257 = vld [vmem:[%s7 + $0x1d0] sm:$0xf]
    %v258 = vld [vmem:[%s7 + $0x1d4] sm:$0xf]
    %v259 = vld [vmem:[%s7 + $0x1d8] sm:$0xf]
    %v260 = vld [vmem:[%s7 + $0x1dc] sm:$0xf]
    %v261 = vld [vmem:[%s7 + $0x1e0] sm:$0xf]
    %v262 = vld [vmem:[%s7 + $0x1e4] sm:$0xf]
    %v263 = vld [vmem:[%s7 + $0x1e8] sm:$0xf]
    %v264 = vld [vmem:[%s7 + $0x1ec] sm:$0xf]
    %v265 = vld [vmem:[%s7 + $0x1f0] sm:$0xf]
    %v266 = vld [vmem:[%s7 + $0x1f4] sm:$0xf]
    %v267 = vld [vmem:[%s7 + $0x1f8] sm:$0xf]
    %v268 = vld [vmem:[%s7 + $0x1fc] sm:$0xf]
    %v269 = vld [vmem:[%s9] sm:$0x1]
    %v271 = vlaneseq
    %v272 = vshrl.u32 %v271, 7
    %v273 = vsub.s32 0, %v272
    %v274 = vrot.slane %v269, %v273
    %v277 = vcombine.high %v140, %v140
    %v279 = vunpack.c.l.s4 1966171168
    %v280 = vunpack.c.0.s8 %v279
    %v281 = vlaneseq
    %v282 = vshrl.u32 %v281, 7
    %v283 = vsub.s32 %v280, %v282
    %v284 = vrot.slane %v140, %v283
    %v286 = vunpack.c.l.s4 1966171168
    %v287 = vunpack.c.0.s8 %v286
    %v288 = vlaneseq
    %v289 = vshrl.u32 %v288, 7
    %v290 = vsub.s32 %v287, %v289
    %v291 = vrot.slane %v277, %v290
    %v292 = vcombine.high %v284, %v284
    %v293 = vcombine.high %v291, %v291
    %v295 = vunpack.c.l.s4 1966171168
    %v296 = vunpack.c.0.s8 %v295
    %v297 = vlaneseq
    %v298 = vshrl.u32 %v297, 7
    %v299 = vsub.s32 %v296, %v298
    %v300 = vrot.slane %v284, %v299
    %v302 = vunpack.c.l.s4 1966171168
    %v303 = vunpack.c.0.s8 %v302
    %v304 = vlaneseq
    %v305 = vshrl.u32 %v304, 7
    %v306 = vsub.s32 %v303, %v305
    %v307 = vrot.slane %v291, %v306
    %v309 = vunpack.c.l.s4 1966171168
    %v310 = vunpack.c.0.s8 %v309
    %v311 = vlaneseq
    %v312 = vshrl.u32 %v311, 7
    %v313 = vsub.s32 %v310, %v312
    %v314 = vrot.slane %v292, %v313
    %v316 = vunpack.c.l.s4 1966171168
    %v317 = vunpack.c.0.s8 %v316
    %v318 = vlaneseq
    %v319 = vshrl.u32 %v318, 7
    %v320 = vsub.s32 %v317, %v319
    %v321 = vrot.slane %v293, %v320
    %v322 = vcombine.high %v300, %v300
    %v323 = vcombine.high %v307, %v307
    %v324 = vcombine.high %v314, %v314
    %v325 = vcombine.high %v321, %v321
    %v462 = vunpack.c.l.b16 %v141
    %v463 = vunpack.c.l.b16 %v142
    %v464 = vunpack.c.l.b16 %v143
    %v465 = vunpack.c.l.b16 %v144
    %v466 = vunpack.c.l.b16 %v145
    %v467 = vunpack.c.l.b16 %v146
    %v468 = vunpack.c.l.b16 %v147
    %v469 = vunpack.c.l.b16 %v148
    %v470 = vunpack.c.l.b16 %v149
    %v471 = vunpack.c.l.b16 %v150
    %v472 = vunpack.c.l.b16 %v151
    %v473 = vunpack.c.l.b16 %v152
    %v474 = vunpack.c.l.b16 %v153
    %v475 = vunpack.c.l.b16 %v154
    %v476 = vunpack.c.l.b16 %v155
    %v477 = vunpack.c.l.b16 %v156
    %v478 = vunpack.c.l.b16 %v157
    %v479 = vunpack.c.l.b16 %v158
    %v480 = vunpack.c.l.b16 %v159
    %v481 = vunpack.c.l.b16 %v160
    %v482 = vunpack.c.l.b16 %v161
    %v483 = vunpack.c.l.b16 %v162
    %v484 = vunpack.c.l.b16 %v163
    %v485 = vunpack.c.l.b16 %v164
    %v486 = vunpack.c.l.b16 %v165
    %v487 = vunpack.c.l.b16 %v166
    %v488 = vunpack.c.l.b16 %v167
    %v489 = vunpack.c.l.b16 %v168
    %v490 = vunpack.c.l.b16 %v169
    %v491 = vunpack.c.l.b16 %v170
    %v492 = vunpack.c.l.b16 %v171
    %v493 = vunpack.c.l.b16 %v172
    %v494 = vunpack.c.l.b16 %v173
    %v495 = vunpack.c.l.b16 %v174
    %v496 = vunpack.c.l.b16 %v175
    %v497 = vunpack.c.l.b16 %v176
    %v498 = vunpack.c.l.b16 %v177
    %v499 = vunpack.c.l.b16 %v178
    %v500 = vunpack.c.l.b16 %v179
    %v501 = vunpack.c.l.b16 %v180
    %v502 = vunpack.c.l.b16 %v181
    %v503 = vunpack.c.l.b16 %v182
    %v504 = vunpack.c.l.b16 %v183
    %v505 = vunpack.c.l.b16 %v184
    %v506 = vunpack.c.l.b16 %v185
    %v507 = vunpack.c.l.b16 %v186
    %v508 = vunpack.c.l.b16 %v187
    %v509 = vunpack.c.l.b16 %v188
    %v510 = vunpack.c.l.b16 %v189
    %v511 = vunpack.c.l.b16 %v190
    %v512 = vunpack.c.l.b16 %v191
    %v513 = vunpack.c.l.b16 %v192
    %v514 = vunpack.c.l.b16 %v193
    %v515 = vunpack.c.l.b16 %v194
    %v516 = vunpack.c.l.b16 %v195
    %v517 = vunpack.c.l.b16 %v196
    %v518 = vunpack.c.l.b16 %v197
    %v519 = vunpack.c.l.b16 %v198
    %v520 = vunpack.c.l.b16 %v199
    %v521 = vunpack.c.l.b16 %v200
    %v522 = vunpack.c.l.b16 %v201
    %v523 = vunpack.c.l.b16 %v202
    %v524 = vunpack.c.l.b16 %v203
    %v525 = vunpack.c.l.b16 %v204
    %v526 = vunpack.c.l.b16 %v205
    %v527 = vunpack.c.l.b16 %v206
    %v528 = vunpack.c.l.b16 %v207
    %v529 = vunpack.c.l.b16 %v208
    %v530 = vunpack.c.l.b16 %v209
    %v531 = vunpack.c.l.b16 %v210
    %v532 = vunpack.c.l.b16 %v211
    %v533 = vunpack.c.l.b16 %v212
    %v534 = vunpack.c.l.b16 %v213
    %v535 = vunpack.c.l.b16 %v214
    %v536 = vunpack.c.l.b16 %v215
    %v537 = vunpack.c.l.b16 %v216
    %v538 = vunpack.c.l.b16 %v217
    %v539 = vunpack.c.l.b16 %v218
    %v540 = vunpack.c.l.b16 %v219
    %v541 = vunpack.c.l.b16 %v220
    %v542 = vunpack.c.l.b16 %v221
    %v543 = vunpack.c.l.b16 %v222
    %v544 = vunpack.c.l.b16 %v223
    %v545 = vunpack.c.l.b16 %v224
    %v546 = vunpack.c.l.b16 %v225
    %v547 = vunpack.c.l.b16 %v226
    %v548 = vunpack.c.l.b16 %v227
    %v549 = vunpack.c.l.b16 %v228
    %v550 = vunpack.c.l.b16 %v229
    %v551 = vunpack.c.l.b16 %v230
    %v552 = vunpack.c.l.b16 %v231
    %v553 = vunpack.c.l.b16 %v232
    %v554 = vunpack.c.l.b16 %v233
    %v555 = vunpack.c.l.b16 %v234
    %v556 = vunpack.c.l.b16 %v235
    %v557 = vunpack.c.l.b16 %v236
    %v558 = vunpack.c.l.b16 %v237
    %v559 = vunpack.c.l.b16 %v238
    %v560 = vunpack.c.l.b16 %v239
    %v561 = vunpack.c.l.b16 %v240
    %v562 = vunpack.c.l.b16 %v241
    %v563 = vunpack.c.l.b16 %v242
    %v564 = vunpack.c.l.b16 %v243
    %v565 = vunpack.c.l.b16 %v244
    %v566 = vunpack.c.l.b16 %v245
    %v567 = vunpack.c.l.b16 %v246
    %v568 = vunpack.c.l.b16 %v247
    %v569 = vunpack.c.l.b16 %v248
    %v570 = vunpack.c.l.b16 %v249
    %v571 = vunpack.c.l.b16 %v250
    %v572 = vunpack.c.l.b16 %v251
    %v573 = vunpack.c.l.b16 %v252
    %v574 = vunpack.c.l.b16 %v253
    %v575 = vunpack.c.l.b16 %v254
    %v576 = vunpack.c.l.b16 %v255
    %v577 = vunpack.c.l.b16 %v256
    %v578 = vunpack.c.l.b16 %v257
    %v579 = vunpack.c.l.b16 %v258
    %v580 = vunpack.c.l.b16 %v259
    %v581 = vunpack.c.l.b16 %v260
    %v582 = vunpack.c.l.b16 %v261
    %v583 = vunpack.c.l.b16 %v262
    %v584 = vunpack.c.l.b16 %v263
    %v585 = vunpack.c.l.b16 %v264
    %v586 = vunpack.c.l.b16 %v265
    %v587 = vunpack.c.l.b16 %v266
    %v588 = vunpack.c.l.b16 %v267
    %v589 = vunpack.c.l.b16 %v268
    %v590 = vpack.c.b16 %v463, %v462
    %v591 = vpack.c.b16 %v465, %v464
    %v592 = vpack.c.b16 %v467, %v466
    %v593 = vpack.c.b16 %v469, %v468
    %v594 = vpack.c.b16 %v471, %v470
    %v595 = vpack.c.b16 %v473, %v472
    %v596 = vpack.c.b16 %v475, %v474
    %v597 = vpack.c.b16 %v477, %v476
    %v598 = vpack.c.b16 %v479, %v478
    %v599 = vpack.c.b16 %v481, %v480
    %v600 = vpack.c.b16 %v483, %v482
    %v601 = vpack.c.b16 %v485, %v484
    %v602 = vpack.c.b16 %v487, %v486
    %v603 = vpack.c.b16 %v489, %v488
    %v604 = vpack.c.b16 %v491, %v490
    %v605 = vpack.c.b16 %v493, %v492
    %v606 = vpack.c.b16 %v495, %v494
    %v607 = vpack.c.b16 %v497, %v496
    %v608 = vpack.c.b16 %v499, %v498
    %v609 = vpack.c.b16 %v501, %v500
    %v610 = vpack.c.b16 %v503, %v502
    %v611 = vpack.c.b16 %v505, %v504
    %v612 = vpack.c.b16 %v507, %v506
    %v613 = vpack.c.b16 %v509, %v508
    %v614 = vpack.c.b16 %v511, %v510
    %v615 = vpack.c.b16 %v513, %v512
    %v616 = vpack.c.b16 %v515, %v514
    %v617 = vpack.c.b16 %v517, %v516
    %v618 = vpack.c.b16 %v519, %v518
    %v619 = vpack.c.b16 %v521, %v520
    %v620 = vpack.c.b16 %v523, %v522
    %v621 = vpack.c.b16 %v525, %v524
    %v622 = vpack.c.b16 %v527, %v526
    %v623 = vpack.c.b16 %v529, %v528
    %v624 = vpack.c.b16 %v531, %v530
    %v625 = vpack.c.b16 %v533, %v532
    %v626 = vpack.c.b16 %v535, %v534
    %v627 = vpack.c.b16 %v537, %v536
    %v628 = vpack.c.b16 %v539, %v538
    %v629 = vpack.c.b16 %v541, %v540
    %v630 = vpack.c.b16 %v543, %v542
    %v631 = vpack.c.b16 %v545, %v544
    %v632 = vpack.c.b16 %v547, %v546
    %v633 = vpack.c.b16 %v549, %v548
    %v634 = vpack.c.b16 %v551, %v550
    %v635 = vpack.c.b16 %v553, %v552
    %v636 = vpack.c.b16 %v555, %v554
    %v637 = vpack.c.b16 %v557, %v556
    %v638 = vpack.c.b16 %v559, %v558
    %v639 = vpack.c.b16 %v561, %v560
    %v640 = vpack.c.b16 %v563, %v562
    %v641 = vpack.c.b16 %v565, %v564
    %v642 = vpack.c.b16 %v567, %v566
    %v643 = vpack.c.b16 %v569, %v568
    %v644 = vpack.c.b16 %v571, %v570
    %v645 = vpack.c.b16 %v573, %v572
    %v646 = vpack.c.b16 %v575, %v574
    %v647 = vpack.c.b16 %v577, %v576
    %v648 = vpack.c.b16 %v579, %v578
    %v649 = vpack.c.b16 %v581, %v580
    %v650 = vpack.c.b16 %v583, %v582
    %v651 = vpack.c.b16 %v585, %v584
    %v652 = vpack.c.b16 %v587, %v586
    %v653 = vpack.c.b16 %v589, %v588
    %718 = vmatprep.subr.bf16.mxu0 0
    %719 = vmatpush1.bf16.msra.mxu0 %v597
    %720 = vmatprep.subr.bf16.mxu0 0
    %721 = vmatpush1.bf16.msra.mxu0 %v596
    %722 = vmatprep.subr.bf16.mxu0 0
    %723 = vmatpush1.bf16.msra.mxu0 %v595
    %724 = vmatprep.subr.bf16.mxu0 0
    %725 = vmatpush1.bf16.msra.mxu0 %v594
    %726 = vmatprep.subr.bf16.mxu0 0
    %727 = vmatpush1.bf16.msra.mxu0 %v593
    %728 = vmatprep.subr.bf16.mxu0 0
    %729 = vmatpush1.bf16.msra.mxu0 %v592
    %730 = vmatprep.subr.bf16.mxu0 0
    %731 = vmatpush1.bf16.msra.mxu0 %v591
    %732 = vmatprep.subr.bf16.mxu0 0
    %733 = vmatpush1.bf16.msra.mxu0 %v590
    %734 = vmatprep.subr.bf16.mxu0 0
    %735 = vmatpush2.bf16.msra.mxu0 %v605
    %736 = vmatprep.subr.bf16.mxu0 0
    %737 = vmatpush2.bf16.msra.mxu0 %v604
    %738 = vmatprep.subr.bf16.mxu0 0
    %739 = vmatpush2.bf16.msra.mxu0 %v603
    %740 = vmatprep.subr.bf16.mxu0 0
    %741 = vmatpush2.bf16.msra.mxu0 %v602
    %742 = vmatprep.subr.bf16.mxu0 0
    %743 = vmatpush2.bf16.msra.mxu0 %v601
    %744 = vmatprep.subr.bf16.mxu0 0
    %745 = vmatpush2.bf16.msra.mxu0 %v600
    %746 = vmatprep.subr.bf16.mxu0 0
    %747 = vmatpush2.bf16.msra.mxu0 %v599
    %748 = vmatprep.subr.bf16.mxu0 0
    %749 = vmatpush2.bf16.msra.mxu0 %v598
    %750 = vmatprep.mubr.bf16.mxu0 %v314
    %751 = vmatmul.mubr.bf16.gmra.mxu0 %v300
    %v752 = vpop.f32.mrf.mxu0
    %v753 = vadd.f32 %v274, %v752
    %v754 = vpop.f32.mrf.mxu0
    %v755 = vpop.f32.mrf.mxu0
    %v756 = vpop.f32.mrf.mxu0
    %757 = vdwg.mxu0
    %758 = vmatprep.subr.bf16.mxu0 0
    %759 = vmatpush1.bf16.msra.mxu0 %v613
    %760 = vmatprep.subr.bf16.mxu0 0
    %761 = vmatpush1.bf16.msra.mxu0 %v612
    %762 = vmatprep.subr.bf16.mxu0 0
    %763 = vmatpush1.bf16.msra.mxu0 %v611
    %764 = vmatprep.subr.bf16.mxu0 0
    %765 = vmatpush1.bf16.msra.mxu0 %v610
    %766 = vmatprep.subr.bf16.mxu0 0
    %767 = vmatpush1.bf16.msra.mxu0 %v609
    %768 = vmatprep.subr.bf16.mxu0 0
    %769 = vmatpush1.bf16.msra.mxu0 %v608
    %770 = vmatprep.subr.bf16.mxu0 0
    %771 = vmatpush1.bf16.msra.mxu0 %v607
    %772 = vmatprep.subr.bf16.mxu0 0
    %773 = vmatpush1.bf16.msra.mxu0 %v606
    %774 = vmatprep.subr.bf16.mxu0 0
    %775 = vmatpush2.bf16.msra.mxu0 %v621
    %776 = vmatprep.subr.bf16.mxu0 0
    %777 = vmatpush2.bf16.msra.mxu0 %v620
    %778 = vmatprep.subr.bf16.mxu0 0
    %779 = vmatpush2.bf16.msra.mxu0 %v619
    %780 = vmatprep.subr.bf16.mxu0 0
    %781 = vmatpush2.bf16.msra.mxu0 %v618
    %782 = vmatprep.subr.bf16.mxu0 0
    %783 = vmatpush2.bf16.msra.mxu0 %v617
    %784 = vmatprep.subr.bf16.mxu0 0
    %785 = vmatpush2.bf16.msra.mxu0 %v616
    %786 = vmatprep.subr.bf16.mxu0 0
    %787 = vmatpush2.bf16.msra.mxu0 %v615
    %788 = vmatprep.subr.bf16.mxu0 0
    %789 = vmatpush2.bf16.msra.mxu0 %v614
    %790 = vmatprep.mubr.bf16.mxu0 %v324
    %791 = vmatmul.mubr.bf16.gmra.mxu0 %v322
    %v792 = vpop.f32.mrf.mxu0
    %v793 = vadd.f32 %v753, %v792
    %v794 = vpop.f32.mrf.mxu0
    %v795 = vpop.f32.mrf.mxu0
    %v796 = vpop.f32.mrf.mxu0
    %797 = vdwg.mxu0
    %798 = vmatprep.subr.bf16.mxu0 0
    %799 = vmatpush1.bf16.msra.mxu0 %v629
    %800 = vmatprep.subr.bf16.mxu0 0
    %801 = vmatpush1.bf16.msra.mxu0 %v628
    %802 = vmatprep.subr.bf16.mxu0 0
    %803 = vmatpush1.bf16.msra.mxu0 %v627
    %804 = vmatprep.subr.bf16.mxu0 0
    %805 = vmatpush1.bf16.msra.mxu0 %v626
    %806 = vmatprep.subr.bf16.mxu0 0
    %807 = vmatpush1.bf16.msra.mxu0 %v625
    %808 = vmatprep.subr.bf16.mxu0 0
    %809 = vmatpush1.bf16.msra.mxu0 %v624
    %810 = vmatprep.subr.bf16.mxu0 0
    %811 = vmatpush1.bf16.msra.mxu0 %v623
    %812 = vmatprep.subr.bf16.mxu0 0
    %813 = vmatpush1.bf16.msra.mxu0 %v622
    %814 = vmatprep.subr.bf16.mxu0 0
    %815 = vmatpush2.bf16.msra.mxu0 %v637
    %816 = vmatprep.subr.bf16.mxu0 0
    %817 = vmatpush2.bf16.msra.mxu0 %v636
    %818 = vmatprep.subr.bf16.mxu0 0
    %819 = vmatpush2.bf16.msra.mxu0 %v635
    %820 = vmatprep.subr.bf16.mxu0 0
    %821 = vmatpush2.bf16.msra.mxu0 %v634
    %822 = vmatprep.subr.bf16.mxu0 0
    %823 = vmatpush2.bf16.msra.mxu0 %v633
    %824 = vmatprep.subr.bf16.mxu0 0
    %825 = vmatpush2.bf16.msra.mxu0 %v632
    %826 = vmatprep.subr.bf16.mxu0 0
    %827 = vmatpush2.bf16.msra.mxu0 %v631
    %828 = vmatprep.subr.bf16.mxu0 0
    %829 = vmatpush2.bf16.msra.mxu0 %v630
    %830 = vmatprep.mubr.bf16.mxu0 %v321
    %831 = vmatmul.mubr.bf16.gmra.mxu0 %v307
    %v832 = vpop.f32.mrf.mxu0
    %v833 = vadd.f32 %v793, %v832
    %v834 = vpop.f32.mrf.mxu0
    %v835 = vpop.f32.mrf.mxu0
    %v836 = vpop.f32.mrf.mxu0
    %837 = vdwg.mxu0
    %838 = vmatprep.subr.bf16.mxu0 0
    %839 = vmatpush1.bf16.msra.mxu0 %v645
    %840 = vmatprep.subr.bf16.mxu0 0
    %841 = vmatpush1.bf16.msra.mxu0 %v644
    %842 = vmatprep.subr.bf16.mxu0 0
    %843 = vmatpush1.bf16.msra.mxu0 %v643
    %844 = vmatprep.subr.bf16.mxu0 0
    %845 = vmatpush1.bf16.msra.mxu0 %v642
    %846 = vmatprep.subr.bf16.mxu0 0
    %847 = vmatpush1.bf16.msra.mxu0 %v641
    %848 = vmatprep.subr.bf16.mxu0 0
    %849 = vmatpush1.bf16.msra.mxu0 %v640
    %850 = vmatprep.subr.bf16.mxu0 0
    %851 = vmatpush1.bf16.msra.mxu0 %v639
    %852 = vmatprep.subr.bf16.mxu0 0
    %853 = vmatpush1.bf16.msra.mxu0 %v638
    %854 = vmatprep.subr.bf16.mxu0 0
    %855 = vmatpush2.bf16.msra.mxu0 %v653
    %856 = vmatprep.subr.bf16.mxu0 0
    %857 = vmatpush2.bf16.msra.mxu0 %v652
    %858 = vmatprep.subr.bf16.mxu0 0
    %859 = vmatpush2.bf16.msra.mxu0 %v651
    %860 = vmatprep.subr.bf16.mxu0 0
    %861 = vmatpush2.bf16.msra.mxu0 %v650
    %862 = vmatprep.subr.bf16.mxu0 0
    %863 = vmatpush2.bf16.msra.mxu0 %v649
    %864 = vmatprep.subr.bf16.mxu0 0
    %865 = vmatpush2.bf16.msra.mxu0 %v648
    %866 = vmatprep.subr.bf16.mxu0 0
    %867 = vmatpush2.bf16.msra.mxu0 %v647
    %868 = vmatprep.subr.bf16.mxu0 0
    %869 = vmatpush2.bf16.msra.mxu0 %v646
    %870 = vmatprep.mubr.bf16.mxu0 %v325
    %871 = vmatmul.mubr.bf16.gmra.mxu0 %v323
    %v872 = vpop.f32.mrf.mxu0
    %v873 = vadd.f32 %v833, %v872
    %v874 = vpop.f32.mrf.mxu0
    %v875 = vpop.f32.mrf.mxu0
    %v876 = vpop.f32.mrf.mxu0
    %877 = vdwg.mxu0
    %v878 = vmax.f32 %v873, 0.0
    %v879 = vld [vmem:[%s3] sm:$0xff]
    %v880 = vld [vmem:[%s11] sm:$0xf]
    %v881 = vld [vmem:[%s11 + $0x4] sm:$0xf]
    %v882 = vld [vmem:[%s11 + $0x8] sm:$0xf]
    %v883 = vld [vmem:[%s11 + $0xc] sm:$0xf]
    %v884 = vld [vmem:[%s11 + $0x10] sm:$0xf]
    %v885 = vld [vmem:[%s11 + $0x14] sm:$0xf]
    %v886 = vld [vmem:[%s11 + $0x18] sm:$0xf]
    %v887 = vld [vmem:[%s11 + $0x1c] sm:$0xf]
    %v888 = vld [vmem:[%s11 + $0x20] sm:$0xf]
    %v889 = vld [vmem:[%s11 + $0x24] sm:$0xf]
    %v890 = vld [vmem:[%s11 + $0x28] sm:$0xf]
    %v891 = vld [vmem:[%s11 + $0x2c] sm:$0xf]
    %v892 = vld [vmem:[%s11 + $0x30] sm:$0xf]
    %v893 = vld [vmem:[%s11 + $0x34] sm:$0xf]
    %v894 = vld [vmem:[%s11 + $0x38] sm:$0xf]
    %v895 = vld [vmem:[%s11 + $0x3c] sm:$0xf]
    %v896 = vld [vmem:[%s11 + $0x40] sm:$0xf]
    %v897 = vld [vmem:[%s11 + $0x44] sm:$0xf]
    %v898 = vld [vmem:[%s11 + $0x48] sm:$0xf]
    %v899 = vld [vmem:[%s11 + $0x4c] sm:$0xf]
    %v900 = vld [vmem:[%s11 + $0x50] sm:$0xf]
    %v901 = vld [vmem:[%s11 + $0x54] sm:$0xf]
    %v902 = vld [vmem:[%s11 + $0x58] sm:$0xf]
    %v903 = vld [vmem:[%s11 + $0x5c] sm:$0xf]
    %v904 = vld [vmem:[%s11 + $0x60] sm:$0xf]
    %v905 = vld [vmem:[%s11 + $0x64] sm:$0xf]
    %v906 = vld [vmem:[%s11 + $0x68] sm:$0xf]
    %v907 = vld [vmem:[%s11 + $0x6c] sm:$0xf]
    %v908 = vld [vmem:[%s11 + $0x70] sm:$0xf]
    %v909 = vld [vmem:[%s11 + $0x74] sm:$0xf]
    %v910 = vld [vmem:[%s11 + $0x78] sm:$0xf]
    %v911 = vld [vmem:[%s11 + $0x7c] sm:$0xf]
    %v912 = vld [vmem:[%s11 + $0x80] sm:$0xf]
    %v913 = vld [vmem:[%s11 + $0x84] sm:$0xf]
    %v914 = vld [vmem:[%s11 + $0x88] sm:$0xf]
    %v915 = vld [vmem:[%s11 + $0x8c] sm:$0xf]
    %v916 = vld [vmem:[%s11 + $0x90] sm:$0xf]
    %v917 = vld [vmem:[%s11 + $0x94] sm:$0xf]
    %v918 = vld [vmem:[%s11 + $0x98] sm:$0xf]
    %v919 = vld [vmem:[%s11 + $0x9c] sm:$0xf]
    %v920 = vld [vmem:[%s11 + $0xa0] sm:$0xf]
    %v921 = vld [vmem:[%s11 + $0xa4] sm:$0xf]
    %v922 = vld [vmem:[%s11 + $0xa8] sm:$0xf]
    %v923 = vld [vmem:[%s11 + $0xac] sm:$0xf]
    %v924 = vld [vmem:[%s11 + $0xb0] sm:$0xf]
    %v925 = vld [vmem:[%s11 + $0xb4] sm:$0xf]
    %v926 = vld [vmem:[%s11 + $0xb8] sm:$0xf]
    %v927 = vld [vmem:[%s11 + $0xbc] sm:$0xf]
    %v928 = vld [vmem:[%s11 + $0xc0] sm:$0xf]
    %v929 = vld [vmem:[%s11 + $0xc4] sm:$0xf]
    %v930 = vld [vmem:[%s11 + $0xc8] sm:$0xf]
    %v931 = vld [vmem:[%s11 + $0xcc] sm:$0xf]
    %v932 = vld [vmem:[%s11 + $0xd0] sm:$0xf]
    %v933 = vld [vmem:[%s11 + $0xd4] sm:$0xf]
    %v934 = vld [vmem:[%s11 + $0xd8] sm:$0xf]
    %v935 = vld [vmem:[%s11 + $0xdc] sm:$0xf]
    %v936 = vld [vmem:[%s11 + $0xe0] sm:$0xf]
    %v937 = vld [vmem:[%s11 + $0xe4] sm:$0xf]
    %v938 = vld [vmem:[%s11 + $0xe8] sm:$0xf]
    %v939 = vld [vmem:[%s11 + $0xec] sm:$0xf]
    %v940 = vld [vmem:[%s11 + $0xf0] sm:$0xf]
    %v941 = vld [vmem:[%s11 + $0xf4] sm:$0xf]
    %v942 = vld [vmem:[%s11 + $0xf8] sm:$0xf]
    %v943 = vld [vmem:[%s11 + $0xfc] sm:$0xf]
    %v944 = vld [vmem:[%s11 + $0x100] sm:$0xf]
    %v945 = vld [vmem:[%s11 + $0x104] sm:$0xf]
    %v946 = vld [vmem:[%s11 + $0x108] sm:$0xf]
    %v947 = vld [vmem:[%s11 + $0x10c] sm:$0xf]
    %v948 = vld [vmem:[%s11 + $0x110] sm:$0xf]
    %v949 = vld [vmem:[%s11 + $0x114] sm:$0xf]
    %v950 = vld [vmem:[%s11 + $0x118] sm:$0xf]
    %v951 = vld [vmem:[%s11 + $0x11c] sm:$0xf]
    %v952 = vld [vmem:[%s11 + $0x120] sm:$0xf]
    %v953 = vld [vmem:[%s11 + $0x124] sm:$0xf]
    %v954 = vld [vmem:[%s11 + $0x128] sm:$0xf]
    %v955 = vld [vmem:[%s11 + $0x12c] sm:$0xf]
    %v956 = vld [vmem:[%s11 + $0x130] sm:$0xf]
    %v957 = vld [vmem:[%s11 + $0x134] sm:$0xf]
    %v958 = vld [vmem:[%s11 + $0x138] sm:$0xf]
    %v959 = vld [vmem:[%s11 + $0x13c] sm:$0xf]
    %v960 = vld [vmem:[%s11 + $0x140] sm:$0xf]
    %v961 = vld [vmem:[%s11 + $0x144] sm:$0xf]
    %v962 = vld [vmem:[%s11 + $0x148] sm:$0xf]
    %v963 = vld [vmem:[%s11 + $0x14c] sm:$0xf]
    %v964 = vld [vmem:[%s11 + $0x150] sm:$0xf]
    %v965 = vld [vmem:[%s11 + $0x154] sm:$0xf]
    %v966 = vld [vmem:[%s11 + $0x158] sm:$0xf]
    %v967 = vld [vmem:[%s11 + $0x15c] sm:$0xf]
    %v968 = vld [vmem:[%s11 + $0x160] sm:$0xf]
    %v969 = vld [vmem:[%s11 + $0x164] sm:$0xf]
    %v970 = vld [vmem:[%s11 + $0x168] sm:$0xf]
    %v971 = vld [vmem:[%s11 + $0x16c] sm:$0xf]
    %v972 = vld [vmem:[%s11 + $0x170] sm:$0xf]
    %v973 = vld [vmem:[%s11 + $0x174] sm:$0xf]
    %v974 = vld [vmem:[%s11 + $0x178] sm:$0xf]
    %v975 = vld [vmem:[%s11 + $0x17c] sm:$0xf]
    %v976 = vld [vmem:[%s11 + $0x180] sm:$0xf]
    %v977 = vld [vmem:[%s11 + $0x184] sm:$0xf]
    %v978 = vld [vmem:[%s11 + $0x188] sm:$0xf]
    %v979 = vld [vmem:[%s11 + $0x18c] sm:$0xf]
    %v980 = vld [vmem:[%s11 + $0x190] sm:$0xf]
    %v981 = vld [vmem:[%s11 + $0x194] sm:$0xf]
    %v982 = vld [vmem:[%s11 + $0x198] sm:$0xf]
    %v983 = vld [vmem:[%s11 + $0x19c] sm:$0xf]
    %v984 = vld [vmem:[%s11 + $0x1a0] sm:$0xf]
    %v985 = vld [vmem:[%s11 + $0x1a4] sm:$0xf]
    %v986 = vld [vmem:[%s11 + $0x1a8] sm:$0xf]
    %v987 = vld [vmem:[%s11 + $0x1ac] sm:$0xf]
    %v988 = vld [vmem:[%s11 + $0x1b0] sm:$0xf]
    %v989 = vld [vmem:[%s11 + $0x1b4] sm:$0xf]
    %v990 = vld [vmem:[%s11 + $0x1b8] sm:$0xf]
    %v991 = vld [vmem:[%s11 + $0x1bc] sm:$0xf]
    %v992 = vld [vmem:[%s11 + $0x1c0] sm:$0xf]
    %v993 = vld [vmem:[%s11 + $0x1c4] sm:$0xf]
    %v994 = vld [vmem:[%s11 + $0x1c8] sm:$0xf]
    %v995 = vld [vmem:[%s11 + $0x1cc] sm:$0xf]
    %v996 = vld [vmem:[%s11 + $0x1d0] sm:$0xf]
    %v997 = vld [vmem:[%s11 + $0x1d4] sm:$0xf]
    %v998 = vld [vmem:[%s11 + $0x1d8] sm:$0xf]
    %v999 = vld [vmem:[%s11 + $0x1dc] sm:$0xf]
    %v1000 = vld [vmem:[%s11 + $0x1e0] sm:$0xf]
    %v1001 = vld [vmem:[%s11 + $0x1e4] sm:$0xf]
    %v1002 = vld [vmem:[%s11 + $0x1e8] sm:$0xf]
    %v1003 = vld [vmem:[%s11 + $0x1ec] sm:$0xf]
    %v1004 = vld [vmem:[%s11 + $0x1f0] sm:$0xf]
    %v1005 = vld [vmem:[%s11 + $0x1f4] sm:$0xf]
    %v1006 = vld [vmem:[%s11 + $0x1f8] sm:$0xf]
    %v1007 = vld [vmem:[%s11 + $0x1fc] sm:$0xf]
    %v1008 = vld [vmem:[%s13] sm:$0x1]
    %v1010 = vlaneseq
    %v1011 = vshrl.u32 %v1010, 7
    %v1012 = vsub.s32 0, %v1011
    %v1013 = vrot.slane %v1008, %v1012
    %v1016 = vcombine.high %v879, %v879
    %v1018 = vunpack.c.l.s4 1966171168
    %v1019 = vunpack.c.0.s8 %v1018
    %v1020 = vlaneseq
    %v1021 = vshrl.u32 %v1020, 7
    %v1022 = vsub.s32 %v1019, %v1021
    %v1023 = vrot.slane %v879, %v1022
    %v1025 = vunpack.c.l.s4 1966171168
    %v1026 = vunpack.c.0.s8 %v1025
    %v1027 = vlaneseq
    %v1028 = vshrl.u32 %v1027, 7
    %v1029 = vsub.s32 %v1026, %v1028
    %v1030 = vrot.slane %v1016, %v1029
    %v1031 = vcombine.high %v1023, %v1023
    %v1032 = vcombine.high %v1030, %v1030
    %v1034 = vunpack.c.l.s4 1966171168
    %v1035 = vunpack.c.0.s8 %v1034
    %v1036 = vlaneseq
    %v1037 = vshrl.u32 %v1036, 7
    %v1038 = vsub.s32 %v1035, %v1037
    %v1039 = vrot.slane %v1023, %v1038
    %v1041 = vunpack.c.l.s4 1966171168
    %v1042 = vunpack.c.0.s8 %v1041
    %v1043 = vlaneseq
    %v1044 = vshrl.u32 %v1043, 7
    %v1045 = vsub.s32 %v1042, %v1044
    %v1046 = vrot.slane %v1030, %v1045
    %v1048 = vunpack.c.l.s4 1966171168
    %v1049 = vunpack.c.0.s8 %v1048
    %v1050 = vlaneseq
    %v1051 = vshrl.u32 %v1050, 7
    %v1052 = vsub.s32 %v1049, %v1051
    %v1053 = vrot.slane %v1031, %v1052
    %v1055 = vunpack.c.l.s4 1966171168
    %v1056 = vunpack.c.0.s8 %v1055
    %v1057 = vlaneseq
    %v1058 = vshrl.u32 %v1057, 7
    %v1059 = vsub.s32 %v1056, %v1058
    %v1060 = vrot.slane %v1032, %v1059
    %v1061 = vcombine.high %v1039, %v1039
    %v1062 = vcombine.high %v1046, %v1046
    %v1063 = vcombine.high %v1053, %v1053
    %v1064 = vcombine.high %v1060, %v1060
    %v1201 = vunpack.c.l.b16 %v880
    %v1202 = vunpack.c.l.b16 %v881
    %v1203 = vunpack.c.l.b16 %v882
    %v1204 = vunpack.c.l.b16 %v883
    %v1205 = vunpack.c.l.b16 %v884
    %v1206 = vunpack.c.l.b16 %v885
    %v1207 = vunpack.c.l.b16 %v886
    %v1208 = vunpack.c.l.b16 %v887
    %v1209 = vunpack.c.l.b16 %v888
    %v1210 = vunpack.c.l.b16 %v889
    %v1211 = vunpack.c.l.b16 %v890
    %v1212 = vunpack.c.l.b16 %v891
    %v1213 = vunpack.c.l.b16 %v892
    %v1214 = vunpack.c.l.b16 %v893
    %v1215 = vunpack.c.l.b16 %v894
    %v1216 = vunpack.c.l.b16 %v895
    %v1217 = vunpack.c.l.b16 %v896
    %v1218 = vunpack.c.l.b16 %v897
    %v1219 = vunpack.c.l.b16 %v898
    %v1220 = vunpack.c.l.b16 %v899
    %v1221 = vunpack.c.l.b16 %v900
    %v1222 = vunpack.c.l.b16 %v901
    %v1223 = vunpack.c.l.b16 %v902
    %v1224 = vunpack.c.l.b16 %v903
    %v1225 = vunpack.c.l.b16 %v904
    %v1226 = vunpack.c.l.b16 %v905
    %v1227 = vunpack.c.l.b16 %v906
    %v1228 = vunpack.c.l.b16 %v907
    %v1229 = vunpack.c.l.b16 %v908
    %v1230 = vunpack.c.l.b16 %v909
    %v1231 = vunpack.c.l.b16 %v910
    %v1232 = vunpack.c.l.b16 %v911
    %v1233 = vunpack.c.l.b16 %v912
    %v1234 = vunpack.c.l.b16 %v913
    %v1235 = vunpack.c.l.b16 %v914
    %v1236 = vunpack.c.l.b16 %v915
    %v1237 = vunpack.c.l.b16 %v916
    %v1238 = vunpack.c.l.b16 %v917
    %v1239 = vunpack.c.l.b16 %v918
    %v1240 = vunpack.c.l.b16 %v919
    %v1241 = vunpack.c.l.b16 %v920
    %v1242 = vunpack.c.l.b16 %v921
    %v1243 = vunpack.c.l.b16 %v922
    %v1244 = vunpack.c.l.b16 %v923
    %v1245 = vunpack.c.l.b16 %v924
    %v1246 = vunpack.c.l.b16 %v925
    %v1247 = vunpack.c.l.b16 %v926
    %v1248 = vunpack.c.l.b16 %v927
    %v1249 = vunpack.c.l.b16 %v928
    %v1250 = vunpack.c.l.b16 %v929
    %v1251 = vunpack.c.l.b16 %v930
    %v1252 = vunpack.c.l.b16 %v931
    %v1253 = vunpack.c.l.b16 %v932
    %v1254 = vunpack.c.l.b16 %v933
    %v1255 = vunpack.c.l.b16 %v934
    %v1256 = vunpack.c.l.b16 %v935
    %v1257 = vunpack.c.l.b16 %v936
    %v1258 = vunpack.c.l.b16 %v937
    %v1259 = vunpack.c.l.b16 %v938
    %v1260 = vunpack.c.l.b16 %v939
    %v1261 = vunpack.c.l.b16 %v940
    %v1262 = vunpack.c.l.b16 %v941
    %v1263 = vunpack.c.l.b16 %v942
    %v1264 = vunpack.c.l.b16 %v943
    %v1265 = vunpack.c.l.b16 %v944
    %v1266 = vunpack.c.l.b16 %v945
    %v1267 = vunpack.c.l.b16 %v946
    %v1268 = vunpack.c.l.b16 %v947
    %v1269 = vunpack.c.l.b16 %v948
    %v1270 = vunpack.c.l.b16 %v949
    %v1271 = vunpack.c.l.b16 %v950
    %v1272 = vunpack.c.l.b16 %v951
    %v1273 = vunpack.c.l.b16 %v952
    %v1274 = vunpack.c.l.b16 %v953
    %v1275 = vunpack.c.l.b16 %v954
    %v1276 = vunpack.c.l.b16 %v955
    %v1277 = vunpack.c.l.b16 %v956
    %v1278 = vunpack.c.l.b16 %v957
    %v1279 = vunpack.c.l.b16 %v958
    %v1280 = vunpack.c.l.b16 %v959
    %v1281 = vunpack.c.l.b16 %v960
    %v1282 = vunpack.c.l.b16 %v961
    %v1283 = vunpack.c.l.b16 %v962
    %v1284 = vunpack.c.l.b16 %v963
    %v1285 = vunpack.c.l.b16 %v964
    %v1286 = vunpack.c.l.b16 %v965
    %v1287 = vunpack.c.l.b16 %v966
    %v1288 = vunpack.c.l.b16 %v967
    %v1289 = vunpack.c.l.b16 %v968
    %v1290 = vunpack.c.l.b16 %v969
    %v1291 = vunpack.c.l.b16 %v970
    %v1292 = vunpack.c.l.b16 %v971
    %v1293 = vunpack.c.l.b16 %v972
    %v1294 = vunpack.c.l.b16 %v973
    %v1295 = vunpack.c.l.b16 %v974
    %v1296 = vunpack.c.l.b16 %v975
    %v1297 = vunpack.c.l.b16 %v976
    %v1298 = vunpack.c.l.b16 %v977
    %v1299 = vunpack.c.l.b16 %v978
    %v1300 = vunpack.c.l.b16 %v979
    %v1301 = vunpack.c.l.b16 %v980
    %v1302 = vunpack.c.l.b16 %v981
    %v1303 = vunpack.c.l.b16 %v982
    %v1304 = vunpack.c.l.b16 %v983
    %v1305 = vunpack.c.l.b16 %v984
    %v1306 = vunpack.c.l.b16 %v985
    %v1307 = vunpack.c.l.b16 %v986
    %v1308 = vunpack.c.l.b16 %v987
    %v1309 = vunpack.c.l.b16 %v988
    %v1310 = vunpack.c.l.b16 %v989
    %v1311 = vunpack.c.l.b16 %v990
    %v1312 = vunpack.c.l.b16 %v991
    %v1313 = vunpack.c.l.b16 %v992
    %v1314 = vunpack.c.l.b16 %v993
    %v1315 = vunpack.c.l.b16 %v994
    %v1316 = vunpack.c.l.b16 %v995
    %v1317 = vunpack.c.l.b16 %v996
    %v1318 = vunpack.c.l.b16 %v997
    %v1319 = vunpack.c.l.b16 %v998
    %v1320 = vunpack.c.l.b16 %v999
    %v1321 = vunpack.c.l.b16 %v1000
    %v1322 = vunpack.c.l.b16 %v1001
    %v1323 = vunpack.c.l.b16 %v1002
    %v1324 = vunpack.c.l.b16 %v1003
    %v1325 = vunpack.c.l.b16 %v1004
    %v1326 = vunpack.c.l.b16 %v1005
    %v1327 = vunpack.c.l.b16 %v1006
    %v1328 = vunpack.c.l.b16 %v1007
    %v1329 = vpack.c.b16 %v1202, %v1201
    %v1330 = vpack.c.b16 %v1204, %v1203
    %v1331 = vpack.c.b16 %v1206, %v1205
    %v1332 = vpack.c.b16 %v1208, %v1207
    %v1333 = vpack.c.b16 %v1210, %v1209
    %v1334 = vpack.c.b16 %v1212, %v1211
    %v1335 = vpack.c.b16 %v1214, %v1213
    %v1336 = vpack.c.b16 %v1216, %v1215
    %v1337 = vpack.c.b16 %v1218, %v1217
    %v1338 = vpack.c.b16 %v1220, %v1219
    %v1339 = vpack.c.b16 %v1222, %v1221
    %v1340 = vpack.c.b16 %v1224, %v1223
    %v1341 = vpack.c.b16 %v1226, %v1225
    %v1342 = vpack.c.b16 %v1228, %v1227
    %v1343 = vpack.c.b16 %v1230, %v1229
    %v1344 = vpack.c.b16 %v1232, %v1231
    %v1345 = vpack.c.b16 %v1234, %v1233
    %v1346 = vpack.c.b16 %v1236, %v1235
    %v1347 = vpack.c.b16 %v1238, %v1237
    %v1348 = vpack.c.b16 %v1240, %v1239
    %v1349 = vpack.c.b16 %v1242, %v1241
    %v1350 = vpack.c.b16 %v1244, %v1243
    %v1351 = vpack.c.b16 %v1246, %v1245
    %v1352 = vpack.c.b16 %v1248, %v1247
    %v1353 = vpack.c.b16 %v1250, %v1249
    %v1354 = vpack.c.b16 %v1252, %v1251
    %v1355 = vpack.c.b16 %v1254, %v1253
    %v1356 = vpack.c.b16 %v1256, %v1255
    %v1357 = vpack.c.b16 %v1258, %v1257
    %v1358 = vpack.c.b16 %v1260, %v1259
    %v1359 = vpack.c.b16 %v1262, %v1261
    %v1360 = vpack.c.b16 %v1264, %v1263
    %v1361 = vpack.c.b16 %v1266, %v1265
    %v1362 = vpack.c.b16 %v1268, %v1267
    %v1363 = vpack.c.b16 %v1270, %v1269
    %v1364 = vpack.c.b16 %v1272, %v1271
    %v1365 = vpack.c.b16 %v1274, %v1273
    %v1366 = vpack.c.b16 %v1276, %v1275
    %v1367 = vpack.c.b16 %v1278, %v1277
    %v1368 = vpack.c.b16 %v1280, %v1279
    %v1369 = vpack.c.b16 %v1282, %v1281
    %v1370 = vpack.c.b16 %v1284, %v1283
    %v1371 = vpack.c.b16 %v1286, %v1285
    %v1372 = vpack.c.b16 %v1288, %v1287
    %v1373 = vpack.c.b16 %v1290, %v1289
    %v1374 = vpack.c.b16 %v1292, %v1291
    %v1375 = vpack.c.b16 %v1294, %v1293
    %v1376 = vpack.c.b16 %v1296, %v1295
    %v1377 = vpack.c.b16 %v1298, %v1297
    %v1378 = vpack.c.b16 %v1300, %v1299
    %v1379 = vpack.c.b16 %v1302, %v1301
    %v1380 = vpack.c.b16 %v1304, %v1303
    %v1381 = vpack.c.b16 %v1306, %v1305
    %v1382 = vpack.c.b16 %v1308, %v1307
    %v1383 = vpack.c.b16 %v1310, %v1309
    %v1384 = vpack.c.b16 %v1312, %v1311
    %v1385 = vpack.c.b16 %v1314, %v1313
    %v1386 = vpack.c.b16 %v1316, %v1315
    %v1387 = vpack.c.b16 %v1318, %v1317
    %v1388 = vpack.c.b16 %v1320, %v1319
    %v1389 = vpack.c.b16 %v1322, %v1321
    %v1390 = vpack.c.b16 %v1324, %v1323
    %v1391 = vpack.c.b16 %v1326, %v1325
    %v1392 = vpack.c.b16 %v1328, %v1327
    %1457 = vmatprep.subr.bf16.mxu0 0
    %1458 = vmatpush1.bf16.msra.mxu0 %v1336
    %1459 = vmatprep.subr.bf16.mxu0 0
    %1460 = vmatpush1.bf16.msra.mxu0 %v1335
    %1461 = vmatprep.subr.bf16.mxu0 0
    %1462 = vmatpush1.bf16.msra.mxu0 %v1334
    %1463 = vmatprep.subr.bf16.mxu0 0
    %1464 = vmatpush1.bf16.msra.mxu0 %v1333
    %1465 = vmatprep.subr.bf16.mxu0 0
    %1466 = vmatpush1.bf16.msra.mxu0 %v1332
    %1467 = vmatprep.subr.bf16.mxu0 0
    %1468 = vmatpush1.bf16.msra.mxu0 %v1331
    %1469 = vmatprep.subr.bf16.mxu0 0
    %1470 = vmatpush1.bf16.msra.mxu0 %v1330
    %1471 = vmatprep.subr.bf16.mxu0 0
    %1472 = vmatpush1.bf16.msra.mxu0 %v1329
    %1473 = vmatprep.subr.bf16.mxu0 0
    %1474 = vmatpush2.bf16.msra.mxu0 %v1344
    %1475 = vmatprep.subr.bf16.mxu0 0
    %1476 = vmatpush2.bf16.msra.mxu0 %v1343
    %1477 = vmatprep.subr.bf16.mxu0 0
    %1478 = vmatpush2.bf16.msra.mxu0 %v1342
    %1479 = vmatprep.subr.bf16.mxu0 0
    %1480 = vmatpush2.bf16.msra.mxu0 %v1341
    %1481 = vmatprep.subr.bf16.mxu0 0
    %1482 = vmatpush2.bf16.msra.mxu0 %v1340
    %1483 = vmatprep.subr.bf16.mxu0 0
    %1484 = vmatpush2.bf16.msra.mxu0 %v1339
    %1485 = vmatprep.subr.bf16.mxu0 0
    %1486 = vmatpush2.bf16.msra.mxu0 %v1338
    %1487 = vmatprep.subr.bf16.mxu0 0
    %1488 = vmatpush2.bf16.msra.mxu0 %v1337
    %1489 = vmatprep.mubr.bf16.mxu0 %v1053
    %1490 = vmatmul.mubr.bf16.gmra.mxu0 %v1039
    %v1491 = vpop.f32.mrf.mxu0
    %v1492 = vadd.f32 %v1013, %v1491
    %v1493 = vpop.f32.mrf.mxu0
    %v1494 = vpop.f32.mrf.mxu0
    %v1495 = vpop.f32.mrf.mxu0
    %1496 = vdwg.mxu0
    %1497 = vmatprep.subr.bf16.mxu0 0
    %1498 = vmatpush1.bf16.msra.mxu0 %v1352
    %1499 = vmatprep.subr.bf16.mxu0 0
    %1500 = vmatpush1.bf16.msra.mxu0 %v1351
    %1501 = vmatprep.subr.bf16.mxu0 0
    %1502 = vmatpush1.bf16.msra.mxu0 %v1350
    %1503 = vmatprep.subr.bf16.mxu0 0
    %1504 = vmatpush1.bf16.msra.mxu0 %v1349
    %1505 = vmatprep.subr.bf16.mxu0 0
    %1506 = vmatpush1.bf16.msra.mxu0 %v1348
    %1507 = vmatprep.subr.bf16.mxu0 0
    %1508 = vmatpush1.bf16.msra.mxu0 %v1347
    %1509 = vmatprep.subr.bf16.mxu0 0
    %1510 = vmatpush1.bf16.msra.mxu0 %v1346
    %1511 = vmatprep.subr.bf16.mxu0 0
    %1512 = vmatpush1.bf16.msra.mxu0 %v1345
    %1513 = vmatprep.subr.bf16.mxu0 0
    %1514 = vmatpush2.bf16.msra.mxu0 %v1360
    %1515 = vmatprep.subr.bf16.mxu0 0
    %1516 = vmatpush2.bf16.msra.mxu0 %v1359
    %1517 = vmatprep.subr.bf16.mxu0 0
    %1518 = vmatpush2.bf16.msra.mxu0 %v1358
    %1519 = vmatprep.subr.bf16.mxu0 0
    %1520 = vmatpush2.bf16.msra.mxu0 %v1357
    %1521 = vmatprep.subr.bf16.mxu0 0
    %1522 = vmatpush2.bf16.msra.mxu0 %v1356
    %1523 = vmatprep.subr.bf16.mxu0 0
    %1524 = vmatpush2.bf16.msra.mxu0 %v1355
    %1525 = vmatprep.subr.bf16.mxu0 0
    %1526 = vmatpush2.bf16.msra.mxu0 %v1354
    %1527 = vmatprep.subr.bf16.mxu0 0
    %1528 = vmatpush2.bf16.msra.mxu0 %v1353
    %1529 = vmatprep.mubr.bf16.mxu0 %v1063
    %1530 = vmatmul.mubr.bf16.gmra.mxu0 %v1061
    %v1531 = vpop.f32.mrf.mxu0
    %v1532 = vadd.f32 %v1492, %v1531
    %v1533 = vpop.f32.mrf.mxu0
    %v1534 = vpop.f32.mrf.mxu0
    %v1535 = vpop.f32.mrf.mxu0
    %1536 = vdwg.mxu0
    %1537 = vmatprep.subr.bf16.mxu0 0
    %1538 = vmatpush1.bf16.msra.mxu0 %v1368
    %1539 = vmatprep.subr.bf16.mxu0 0
    %1540 = vmatpush1.bf16.msra.mxu0 %v1367
    %1541 = vmatprep.subr.bf16.mxu0 0
    %1542 = vmatpush1.bf16.msra.mxu0 %v1366
    %1543 = vmatprep.subr.bf16.mxu0 0
    %1544 = vmatpush1.bf16.msra.mxu0 %v1365
    %1545 = vmatprep.subr.bf16.mxu0 0
    %1546 = vmatpush1.bf16.msra.mxu0 %v1364
    %1547 = vmatprep.subr.bf16.mxu0 0
    %1548 = vmatpush1.bf16.msra.mxu0 %v1363
    %1549 = vmatprep.subr.bf16.mxu0 0
    %1550 = vmatpush1.bf16.msra.mxu0 %v1362
    %1551 = vmatprep.subr.bf16.mxu0 0
    %1552 = vmatpush1.bf16.msra.mxu0 %v1361
    %1553 = vmatprep.subr.bf16.mxu0 0
    %1554 = vmatpush2.bf16.msra.mxu0 %v1376
    %1555 = vmatprep.subr.bf16.mxu0 0
    %1556 = vmatpush2.bf16.msra.mxu0 %v1375
    %1557 = vmatprep.subr.bf16.mxu0 0
    %1558 = vmatpush2.bf16.msra.mxu0 %v1374
    %1559 = vmatprep.subr.bf16.mxu0 0
    %1560 = vmatpush2.bf16.msra.mxu0 %v1373
    %1561 = vmatprep.subr.bf16.mxu0 0
    %1562 = vmatpush2.bf16.msra.mxu0 %v1372
    %1563 = vmatprep.subr.bf16.mxu0 0
    %1564 = vmatpush2.bf16.msra.mxu0 %v1371
    %1565 = vmatprep.subr.bf16.mxu0 0
    %1566 = vmatpush2.bf16.msra.mxu0 %v1370
    %1567 = vmatprep.subr.bf16.mxu0 0
    %1568 = vmatpush2.bf16.msra.mxu0 %v1369
    %1569 = vmatprep.mubr.bf16.mxu0 %v1060
    %1570 = vmatmul.mubr.bf16.gmra.mxu0 %v1046
    %v1571 = vpop.f32.mrf.mxu0
    %v1572 = vadd.f32 %v1532, %v1571
    %v1573 = vpop.f32.mrf.mxu0
    %v1574 = vpop.f32.mrf.mxu0
    %v1575 = vpop.f32.mrf.mxu0
    %1576 = vdwg.mxu0
    %1577 = vmatprep.subr.bf16.mxu0 0
    %1578 = vmatpush1.bf16.msra.mxu0 %v1384
    %1579 = vmatprep.subr.bf16.mxu0 0
    %1580 = vmatpush1.bf16.msra.mxu0 %v1383
    %1581 = vmatprep.subr.bf16.mxu0 0
    %1582 = vmatpush1.bf16.msra.mxu0 %v1382
    %1583 = vmatprep.subr.bf16.mxu0 0
    %1584 = vmatpush1.bf16.msra.mxu0 %v1381
    %1585 = vmatprep.subr.bf16.mxu0 0
    %1586 = vmatpush1.bf16.msra.mxu0 %v1380
    %1587 = vmatprep.subr.bf16.mxu0 0
    %1588 = vmatpush1.bf16.msra.mxu0 %v1379
    %1589 = vmatprep.subr.bf16.mxu0 0
    %1590 = vmatpush1.bf16.msra.mxu0 %v1378
    %1591 = vmatprep.subr.bf16.mxu0 0
    %1592 = vmatpush1.bf16.msra.mxu0 %v1377
    %1593 = vmatprep.subr.bf16.mxu0 0
    %1594 = vmatpush2.bf16.msra.mxu0 %v1392
    %1595 = vmatprep.subr.bf16.mxu0 0
    %1596 = vmatpush2.bf16.msra.mxu0 %v1391
    %1597 = vmatprep.subr.bf16.mxu0 0
    %1598 = vmatpush2.bf16.msra.mxu0 %v1390
    %1599 = vmatprep.subr.bf16.mxu0 0
    %1600 = vmatpush2.bf16.msra.mxu0 %v1389
    %1601 = vmatprep.subr.bf16.mxu0 0
    %1602 = vmatpush2.bf16.msra.mxu0 %v1388
    %1603 = vmatprep.subr.bf16.mxu0 0
    %1604 = vmatpush2.bf16.msra.mxu0 %v1387
    %1605 = vmatprep.subr.bf16.mxu0 0
    %1606 = vmatpush2.bf16.msra.mxu0 %v1386
    %1607 = vmatprep.subr.bf16.mxu0 0
    %1608 = vmatpush2.bf16.msra.mxu0 %v1385
    %1609 = vmatprep.mubr.bf16.mxu0 %v1064
    %1610 = vmatmul.mubr.bf16.gmra.mxu0 %v1062
    %v1611 = vpop.f32.mrf.mxu0
    %v1612 = vadd.f32 %v1572, %v1611
    %v1613 = vpop.f32.mrf.mxu0
    %v1614 = vpop.f32.mrf.mxu0
    %v1615 = vpop.f32.mrf.mxu0
    %1616 = vdwg.mxu0
    %v1617 = vmax.f32 %v1612, 0.0
    %v1618 = vld [vmem:[%s5] sm:$0x3]
    %v1619 = vld [vmem:[%s15] sm:$0xff]
    %v1620 = vld [vmem:[%s15 + $0x8] sm:$0xff]
    %v1621 = vld [vmem:[%s17] sm:$0x1]
    %v1623 = vlaneseq
    %v1624 = vshrl.u32 %v1623, 7
    %v1625 = vsub.s32 0, %v1624
    %v1626 = vrot.slane %v1621, %v1625
    %vm1628 = vcmask 130048
    %v1630 = vsel %vm1628, %v1618, 0
    %1632 = vmatprep.subr.mxu0 0.0
    %1633 = vmatpush1.msra.mxu0 0.0
    %1634 = vmatprep.subr.mxu0 0.0
    %1635 = vmatpush1.msra.mxu0 0.0
    %1636 = vmatprep.subr.mxu0 0.0
    %1637 = vmatpush1.msra.mxu0 0.0
    %1638 = vmatprep.subr.mxu0 0.0
    %1639 = vmatpush1.msra.mxu0 0.0
    %1640 = vmatprep.subr.mxu0 0.0
    %1641 = vmatpush1.msra.mxu0 0.0
    %1642 = vmatprep.subr.mxu0 0.0
    %1643 = vmatpush1.msra.mxu0 0.0
    %1644 = vmatprep.subr.mxu0 0.0
    %1645 = vmatpush1.msra.mxu0 0.0
    %1646 = vmatprep.subr.mxu0 0.0
    %1647 = vmatpush1.msra.mxu0 0.0
    %1648 = vmatprep.subr.mxu0 0.0
    %1649 = vmatpush1.msra.mxu0 0.0
    %1650 = vmatprep.subr.mxu0 0.0
    %1651 = vmatpush1.msra.mxu0 0.0
    %1652 = vmatprep.subr.mxu0 0.0
    %1653 = vmatpush1.msra.mxu0 0.0
    %1654 = vmatprep.subr.mxu0 0.0
    %1655 = vmatpush1.msra.mxu0 0.0
    %1656 = vmatprep.subr.mxu0 0.0
    %1657 = vmatpush1.msra.mxu0 0.0
    %1658 = vmatprep.subr.mxu0 0.0
    %1659 = vmatpush1.msra.mxu0 0.0
    %1660 = vmatprep.subr.mxu0 0.0
    %1661 = vmatpush1.msra.mxu0 %v1620
    %1662 = vmatprep.subr.mxu0 0.0
    %1663 = vmatpush1.msra.mxu0 %v1619
    %1664 = vmatprep.subr.mxu0 0.0
    %1665 = vmatpush2.msra.mxu0 0.0
    %1666 = vmatprep.subr.mxu0 0.0
    %1667 = vmatpush2.msra.mxu0 0.0
    %1668 = vmatprep.subr.mxu0 0.0
    %1669 = vmatpush2.msra.mxu0 0.0
    %1670 = vmatprep.subr.mxu0 0.0
    %1671 = vmatpush2.msra.mxu0 0.0
    %1672 = vmatprep.subr.mxu0 0.0
    %1673 = vmatpush2.msra.mxu0 0.0
    %1674 = vmatprep.subr.mxu0 0.0
    %1675 = vmatpush2.msra.mxu0 0.0
    %1676 = vmatprep.subr.mxu0 0.0
    %1677 = vmatpush2.msra.mxu0 0.0
    %1678 = vmatprep.subr.mxu0 0.0
    %1679 = vmatpush2.msra.mxu0 0.0
    %1680 = vmatprep.subr.mxu0 0.0
    %1681 = vmatpush2.msra.mxu0 0.0
    %1682 = vmatprep.subr.mxu0 0.0
    %1683 = vmatpush2.msra.mxu0 0.0
    %1684 = vmatprep.subr.mxu0 0.0
    %1685 = vmatpush2.msra.mxu0 0.0
    %1686 = vmatprep.subr.mxu0 0.0
    %1687 = vmatpush2.msra.mxu0 0.0
    %1688 = vmatprep.subr.mxu0 0.0
    %1689 = vmatpush2.msra.mxu0 0.0
    %1690 = vmatprep.subr.mxu0 0.0
    %1691 = vmatpush2.msra.mxu0 0.0
    %1692 = vmatprep.subr.mxu0 0.0
    %1693 = vmatpush2.msra.mxu0 0.0
    %1694 = vmatprep.subr.mxu0 0.0
    %1695 = vmatpush2.msra.mxu0 0.0
    %1696 = vmatprep.mubr.f32.mxu0 0.0
    %1697 = vmatmul.mubr.f32.gmra.mxu0 %v1630
    %v1698 = vpop.f32.mrf.mxu0
    %v1699 = vadd.f32 %v1626, %v1698
    %v1700 = vpop.f32.mrf.mxu0
    %1701 = vdwg.mxu0
    %v1702 = vmax.f32 %v1699, 0.0
    %v1704 = vrot.slane %v1617, 6
    %v1707 = vrot.slane %v1702, 4
    %vm1709 = vcmask 1041408
    %v1710 = vsel %vm1709, %v878, %v1704
    %vm1711 = vcmask 1043456
    %v1712 = vsel %vm1711, %v1710, %v1707
    %v1713 = vld [vmem:[%s19] sm:$0xff]
    %v1714 = vld [vmem:[%s19 + $0x8] sm:$0xff]
    %v1715 = vld [vmem:[%s19 + $0x10] sm:$0xff]
    %v1716 = vld [vmem:[%s19 + $0x18] sm:$0xff]
    %v1717 = vld [vmem:[%s19 + $0x20] sm:$0xff]
    %v1718 = vld [vmem:[%s19 + $0x28] sm:$0xff]
    %v1719 = vld [vmem:[%s19 + $0x30] sm:$0xff]
    %v1720 = vld [vmem:[%s19 + $0x38] sm:$0xff]
    %v1721 = vld [vmem:[%s19 + $0x40] sm:$0xff]
    %v1722 = vld [vmem:[%s19 + $0x48] sm:$0xff]
    %v1723 = vld [vmem:[%s19 + $0x50] sm:$0xff]
    %v1724 = vld [vmem:[%s19 + $0x58] sm:$0xff]
    %v1725 = vld [vmem:[%s19 + $0x60] sm:$0xff]
    %v1726 = vld [vmem:[%s19 + $0x68] sm:$0xff]
    %v1727 = vld [vmem:[%s19 + $0x70] sm:$0xff]
    %v1728 = vld [vmem:[%s19 + $0x78] sm:$0xff]
    %v1729 = vld [vmem:[%s21] sm:$0x3]
    %v1731 = vlaneseq
    %v1732 = vshrl.u32 %v1731, 7
    %v1733 = vsub.s32 0, %v1732
    %v1734 = vrot.slane %v1729, %v1733
    %v1735 = vlaneseq
    %v1736 = vshrl.u32 %v1735, 7
    %v1737 = vsub.s32 1, %v1736
    %v1738 = vrot.slane %v1729, %v1737
    %vm1741 = vcmask 523264
    %v1743 = vsel %vm1741, %v1712, 0
    %1745 = vmatprep.subr.mxu0 0.0
    %1746 = vmatpush1.msra.mxu0 0.0
    %1747 = vmatprep.subr.mxu0 0.0
    %1748 = vmatpush1.msra.mxu0 0.0
    %1749 = vmatprep.subr.mxu0 0.0
    %1750 = vmatpush1.msra.mxu0 0.0
    %1751 = vmatprep.subr.mxu0 0.0
    %1752 = vmatpush1.msra.mxu0 0.0
    %1753 = vmatprep.subr.mxu0 0.0
    %1754 = vmatpush1.msra.mxu0 0.0
    %1755 = vmatprep.subr.mxu0 0.0
    %1756 = vmatpush1.msra.mxu0 0.0
    %1757 = vmatprep.subr.mxu0 0.0
    %1758 = vmatpush1.msra.mxu0 0.0
    %1759 = vmatprep.subr.mxu0 0.0
    %1760 = vmatpush1.msra.mxu0 0.0
    %1761 = vmatprep.subr.mxu0 %v1728
    %1762 = vmatpush1.msra.mxu0 %v1727
    %1763 = vmatprep.subr.mxu0 %v1726
    %1764 = vmatpush1.msra.mxu0 %v1725
    %1765 = vmatprep.subr.mxu0 %v1724
    %1766 = vmatpush1.msra.mxu0 %v1723
    %1767 = vmatprep.subr.mxu0 %v1722
    %1768 = vmatpush1.msra.mxu0 %v1721
    %1769 = vmatprep.subr.mxu0 %v1720
    %1770 = vmatpush1.msra.mxu0 %v1719
    %1771 = vmatprep.subr.mxu0 %v1718
    %1772 = vmatpush1.msra.mxu0 %v1717
    %1773 = vmatprep.subr.mxu0 %v1716
    %1774 = vmatpush1.msra.mxu0 %v1715
    %1775 = vmatprep.subr.mxu0 %v1714
    %1776 = vmatpush1.msra.mxu0 %v1713
    %1777 = vmatprep.subr.mxu0 0.0
    %1778 = vmatpush2.msra.mxu0 0.0
    %1779 = vmatprep.subr.mxu0 0.0
    %1780 = vmatpush2.msra.mxu0 0.0
    %1781 = vmatprep.subr.mxu0 0.0
    %1782 = vmatpush2.msra.mxu0 0.0
    %1783 = vmatprep.subr.mxu0 0.0
    %1784 = vmatpush2.msra.mxu0 0.0
    %1785 = vmatprep.subr.mxu0 0.0
    %1786 = vmatpush2.msra.mxu0 0.0
    %1787 = vmatprep.subr.mxu0 0.0
    %1788 = vmatpush2.msra.mxu0 0.0
    %1789 = vmatprep.subr.mxu0 0.0
    %1790 = vmatpush2.msra.mxu0 0.0
    %1791 = vmatprep.subr.mxu0 0.0
    %1792 = vmatpush2.msra.mxu0 0.0
    %1793 = vmatprep.subr.mxu0 0.0
    %1794 = vmatpush2.msra.mxu0 0.0
    %1795 = vmatprep.subr.mxu0 0.0
    %1796 = vmatpush2.msra.mxu0 0.0
    %1797 = vmatprep.subr.mxu0 0.0
    %1798 = vmatpush2.msra.mxu0 0.0
    %1799 = vmatprep.subr.mxu0 0.0
    %1800 = vmatpush2.msra.mxu0 0.0
    %1801 = vmatprep.subr.mxu0 0.0
    %1802 = vmatpush2.msra.mxu0 0.0
    %1803 = vmatprep.subr.mxu0 0.0
    %1804 = vmatpush2.msra.mxu0 0.0
    %1805 = vmatprep.subr.mxu0 0.0
    %1806 = vmatpush2.msra.mxu0 0.0
    %1807 = vmatprep.subr.mxu0 0.0
    %1808 = vmatpush2.msra.mxu0 0.0
    %1809 = vmatprep.mubr.f32.mxu0 0.0
    %1810 = vmatmul.mubr.f32.gmra.mxu0 %v1743
    %v1811 = vpop.f32.mrf.mxu0
    %v1812 = vadd.f32 %v1734, %v1811
    %v1813 = vpop.f32.mrf.mxu0
    %v1814 = vadd.f32 %v1738, %v1813
    %1815 = vdwg.mxu0
    %1817 = vrot.lane.b32.xlu0 %v1812, 64
    %v1818 = vpop.permute.xlu0 %1817
    %v1820 = vmul.f32 %v1812, %v1818
    %vm1821 = vcmask 517120
    %v1822 = vsel %vm1821, %v1820, 0.0
    %1823 = vadd.xlane.f32.xlu0 %v1822
    %v1824 = vpop.xlane.xlu0 %1823
    %v1825 = vmul.f32 %v1824, 0.125
    %v1826 = vrot.slane %v1812, 2
    %1827 = vrot.lane.b32.xlu0 %v1826, 64
    %v1828 = vpop.permute.xlu0 %1827
    %v1830 = vmul.f32 %v1812, %v1828
    %v1831 = vsel %vm1821, %v1830, 0.0
    %1832 = vadd.xlane.f32.xlu0 %v1831
    %v1833 = vpop.xlane.xlu0 %1832
    %v1834 = vmul.f32 %v1833, 0.125
    %v1835 = vrot.slane %v1812, 4
    %1836 = vrot.lane.b32.xlu0 %v1835, 64
    %v1837 = vpop.permute.xlu0 %1836
    %v1839 = vmul.f32 %v1812, %v1837
    %v1840 = vsel %vm1821, %v1839, 0.0
    %1841 = vadd.xlane.f32.xlu0 %v1840
    %v1842 = vpop.xlane.xlu0 %1841
    %v1843 = vmul.f32 %v1842, 0.125
    %v1844 = vmax.f32 %v1825, %v1834
    %v1845 = vmax.f32 %v1844, %v1843
    %v1846 = vsub.f32 %v1825, %v1845
    %v1847 = vmul.f32 %v1846, 1.442695
    %v1848 = vpow.pop %v1847
    %v1849 = vsub.f32 %v1834, %v1845
    %v1850 = vmul.f32 %v1849, 1.442695
    %v1851 = vpow.pop %v1850
    %v1852 = vsub.f32 %v1843, %v1845
    %v1853 = vmul.f32 %v1852, 1.442695
    %v1854 = vpow.pop %v1853
    %v1855 = vadd.f32 %v1848, %v1851
    %v1856 = vadd.f32 %v1855, %v1854
    %v1857 = vrcp.pop %v1856
    %v1858 = vmul.f32 %v1848, %v1857
    %v1859 = vmul.f32 %v1858, %v1814
    %v1860 = vmul.f32 %v1851, %v1857
    %v1862 = vrot.slane %v1814, 2
    %v1864 = vmul.f32 %v1860, %v1862
    %v1865 = vadd.f32 %v1859, %v1864
    %v1866 = vmul.f32 %v1854, %v1857
    %v1867 = vrot.slane %v1814, 4
    %v1869 = vmul.f32 %v1866, %v1867
    %v1870 = vadd.f32 %v1865, %v1869
    %v1871 = vrot.slane %v1812, 6
    %1872 = vrot.lane.b32.xlu0 %v1871, 64
    %v1873 = vpop.permute.xlu0 %1872
    %v1875 = vmul.f32 %v1812, %v1873
    %vm1876 = vcmask 519170
    %v1877 = vsel %vm1876, %v1875, 0.0
    %1878 = vadd.xlane.f32.xlu0 %v1877
    %v1879 = vpop.xlane.xlu0 %1878
    %v1880 = vmul.f32 %v1879, 0.125
    %v1881 = vsel %vm1876, %v1820, 0.0
    %1882 = vadd.xlane.f32.xlu0 %v1881
    %v1883 = vpop.xlane.xlu0 %1882
    %v1884 = vmul.f32 %v1883, 0.125
    %v1885 = vsel %vm1876, %v1830, 0.0
    %1886 = vadd.xlane.f32.xlu0 %v1885
    %v1887 = vpop.xlane.xlu0 %1886
    %v1888 = vmul.f32 %v1887, 0.125
    %v1889 = vmax.f32 %v1880, %v1884
    %v1890 = vmax.f32 %v1889, %v1888
    %v1891 = vsub.f32 %v1880, %v1890
    %v1892 = vmul.f32 %v1891, 1.442695
    %v1893 = vpow.pop %v1892
    %v1894 = vsub.f32 %v1884, %v1890
    %v1895 = vmul.f32 %v1894, 1.442695
    %v1896 = vpow.pop %v1895
    %v1897 = vsub.f32 %v1888, %v1890
    %v1898 = vmul.f32 %v1897, 1.442695
    %v1899 = vpow.pop %v1898
    %v1900 = vadd.f32 %v1893, %v1896
    %v1901 = vadd.f32 %v1900, %v1899
    %v1902 = vrcp.pop %v1901
    %v1903 = vmul.f32 %v1893, %v1902
    %v1904 = vrot.slane %v1814, 6
    %v1906 = vmul.f32 %v1903, %v1904
    %v1907 = vmul.f32 %v1896, %v1902
    %v1908 = vmul.f32 %v1907, %v1814
    %v1909 = vadd.f32 %v1906, %v1908
    %v1910 = vmul.f32 %v1899, %v1902
    %v1911 = vmul.f32 %v1910, %v1862
    %v1912 = vadd.f32 %v1909, %v1911
    %vm1913 = vcmask 521220
    %v1914 = vsel %vm1913, %v1839, 0.0
    %1915 = vadd.xlane.f32.xlu0 %v1914
    %v1916 = vpop.xlane.xlu0 %1915
    %v1917 = vmul.f32 %v1916, 0.125
    %v1918 = vsel %vm1913, %v1875, 0.0
    %1919 = vadd.xlane.f32.xlu0 %v1918
    %v1920 = vpop.xlane.xlu0 %1919
    %v1921 = vmul.f32 %v1920, 0.125
    %v1922 = vsel %vm1913, %v1820, 0.0
    %1923 = vadd.xlane.f32.xlu0 %v1922
    %v1924 = vpop.xlane.xlu0 %1923
    %v1925 = vmul.f32 %v1924, 0.125
    %v1926 = vmax.f32 %v1917, %v1921
    %v1927 = vmax.f32 %v1926, %v1925
    %v1928 = vsub.f32 %v1917, %v1927
    %v1929 = vmul.f32 %v1928, 1.442695
    %v1930 = vpow.pop %v1929
    %v1931 = vsub.f32 %v1921, %v1927
    %v1932 = vmul.f32 %v1931, 1.442695
    %v1933 = vpow.pop %v1932
    %v1934 = vsub.f32 %v1925, %v1927
    %v1935 = vmul.f32 %v1934, 1.442695
    %v1936 = vpow.pop %v1935
    %v1937 = vadd.f32 %v1930, %v1933
    %v1938 = vadd.f32 %v1937, %v1936
    %v1939 = vrcp.pop %v1938
    %v1940 = vmul.f32 %v1930, %v1939
    %v1941 = vmul.f32 %v1940, %v1867
    %v1942 = vmul.f32 %v1933, %v1939
    %v1943 = vmul.f32 %v1942, %v1904
    %v1944 = vadd.f32 %v1941, %v1943
    %v1945 = vmul.f32 %v1936, %v1939
    %v1946 = vmul.f32 %v1945, %v1814
    %v1947 = vadd.f32 %v1944, %v1946
    %v1948 = vsel %vm1709, %v1870, %v1912
    %v1949 = vsel %vm1711, %v1948, %v1947
    %v1950 = vld [vmem:[%s23] sm:$0xff]
    %v1951 = vld [vmem:[%s23 + $0x8] sm:$0xff]
    %v1952 = vld [vmem:[%s23 + $0x10] sm:$0xff]
    %v1953 = vld [vmem:[%s23 + $0x18] sm:$0xff]
    %v1954 = vld [vmem:[%s23 + $0x20] sm:$0xff]
    %v1955 = vld [vmem:[%s23 + $0x28] sm:$0xff]
    %v1956 = vld [vmem:[%s23 + $0x30] sm:$0xff]
    %v1957 = vld [vmem:[%s23 + $0x38] sm:$0xff]
    %v1958 = vld [vmem:[%s25] sm:$0x1]
    %v1960 = vlaneseq
    %v1961 = vshrl.u32 %v1960, 7
    %v1962 = vsub.s32 0, %v1961
    %v1963 = vrot.slane %v1958, %v1962
    %v1966 = vsel %vm1741, %v1949, 0
    %1968 = vmatprep.subr.mxu0 0.0
    %1969 = vmatpush1.msra.mxu0 0.0
    %1970 = vmatprep.subr.mxu0 0.0
    %1971 = vmatpush1.msra.mxu0 0.0
    %1972 = vmatprep.subr.mxu0 0.0
    %1973 = vmatpush1.msra.mxu0 0.0
    %1974 = vmatprep.subr.mxu0 0.0
    %1975 = vmatpush1.msra.mxu0 0.0
    %1976 = vmatprep.subr.mxu0 0.0
    %1977 = vmatpush1.msra.mxu0 0.0
    %1978 = vmatprep.subr.mxu0 0.0
    %1979 = vmatpush1.msra.mxu0 0.0
    %1980 = vmatprep.subr.mxu0 0.0
    %1981 = vmatpush1.msra.mxu0 0.0
    %1982 = vmatprep.subr.mxu0 0.0
    %1983 = vmatpush1.msra.mxu0 0.0
    %1984 = vmatprep.subr.mxu0 0.0
    %1985 = vmatpush1.msra.mxu0 %v1957
    %1986 = vmatprep.subr.mxu0 0.0
    %1987 = vmatpush1.msra.mxu0 %v1956
    %1988 = vmatprep.subr.mxu0 0.0
    %1989 = vmatpush1.msra.mxu0 %v1955
    %1990 = vmatprep.subr.mxu0 0.0
    %1991 = vmatpush1.msra.mxu0 %v1954
    %1992 = vmatprep.subr.mxu0 0.0
    %1993 = vmatpush1.msra.mxu0 %v1953
    %1994 = vmatprep.subr.mxu0 0.0
    %1995 = vmatpush1.msra.mxu0 %v1952
    %1996 = vmatprep.subr.mxu0 0.0
    %1997 = vmatpush1.msra.mxu0 %v1951
    %1998 = vmatprep.subr.mxu0 0.0
    %1999 = vmatpush1.msra.mxu0 %v1950
    %2000 = vmatprep.subr.mxu0 0.0
    %2001 = vmatpush2.msra.mxu0 0.0
    %2002 = vmatprep.subr.mxu0 0.0
    %2003 = vmatpush2.msra.mxu0 0.0
    %2004 = vmatprep.subr.mxu0 0.0
    %2005 = vmatpush2.msra.mxu0 0.0
    %2006 = vmatprep.subr.mxu0 0.0
    %2007 = vmatpush2.msra.mxu0 0.0
    %2008 = vmatprep.subr.mxu0 0.0
    %2009 = vmatpush2.msra.mxu0 0.0
    %2010 = vmatprep.subr.mxu0 0.0
    %2011 = vmatpush2.msra.mxu0 0.0
    %2012 = vmatprep.subr.mxu0 0.0
    %2013 = vmatpush2.msra.mxu0 0.0
    %2014 = vmatprep.subr.mxu0 0.0
    %2015 = vmatpush2.msra.mxu0 0.0
    %2016 = vmatprep.subr.mxu0 0.0
    %2017 = vmatpush2.msra.mxu0 0.0
    %2018 = vmatprep.subr.mxu0 0.0
    %2019 = vmatpush2.msra.mxu0 0.0
    %2020 = vmatprep.subr.mxu0 0.0
    %2021 = vmatpush2.msra.mxu0 0.0
    %2022 = vmatprep.subr.mxu0 0.0
    %2023 = vmatpush2.msra.mxu0 0.0
    %2024 = vmatprep.subr.mxu0 0.0
    %2025 = vmatpush2.msra.mxu0 0.0
    %2026 = vmatprep.subr.mxu0 0.0
    %2027 = vmatpush2.msra.mxu0 0.0
    %2028 = vmatprep.subr.mxu0 0.0
    %2029 = vmatpush2.msra.mxu0 0.0
    %2030 = vmatprep.subr.mxu0 0.0
    %2031 = vmatpush2.msra.mxu0 0.0
    %2032 = vmatprep.mubr.f32.mxu0 0.0
    %2033 = vmatmul.mubr.f32.gmra.mxu0 %v1966
    %v2034 = vpop.f32.mrf.mxu0
    %v2035 = vadd.f32 %v1963, %v2034
    %v2036 = vpop.f32.mrf.mxu0
    %2037 = vdwg.mxu0
    %v2038 = vadd.f32 %v1712, %v2035
    %v2039 = vld [vmem:[%s27] sm:$0x1]
    %v2040 = vld [vmem:[%s29] sm:$0x1]
    %vm2041 = vcmask 521216
    %v2042 = vsel %vm2041, %v2038, 0.0
    %2043 = vadd.xlane.f32.xlu0 %v2042
    %v2044 = vpop.xlane.xlu0 %2043
    %v2045 = vrcp.pop 64.0
    %v2046 = vmul.f32 %v2044, %v2045
    %v2047 = vsub.f32 %v2038, %v2046
    %v2048 = vmul.f32 %v2047, %v2047
    %v2049 = vsel %vm2041, %v2048, 0.0
    %2050 = vadd.xlane.f32.xlu0 %v2049
    %v2051 = vpop.xlane.xlu0 %2050
    %v2052 = vmul.f32 %v2051, %v2045
    %v2053 = vadd.f32 %v2052, 1e-05
    %v2054 = vrsqrt.pop %v2053
    %v2055 = vmul.f32 %v2047, %v2054
    %v2057 = vlaneseq
    %v2058 = vshrl.u32 %v2057, 7
    %v2059 = vsub.s32 0, %v2058
    %v2060 = vrot.slane %v2039, %v2059
    %v2062 = vmul.f32 %v2055, %v2060
    %v2064 = vlaneseq
    %v2065 = vshrl.u32 %v2064, 7
    %v2066 = vsub.s32 0, %v2065
    %v2067 = vrot.slane %v2040, %v2066
    %v2069 = vadd.f32 %v2062, %v2067
    %v2070 = vld [vmem:[%s31] sm:$0xff]
    %v2071 = vld [vmem:[%s31 + $0x8] sm:$0xff]
    %v2072 = vld [vmem:[%s31 + $0x10] sm:$0xff]
    %v2073 = vld [vmem:[%s31 + $0x18] sm:$0xff]
    %v2074 = vld [vmem:[%s31 + $0x20] sm:$0xff]
    %v2075 = vld [vmem:[%s31 + $0x28] sm:$0xff]
    %v2076 = vld [vmem:[%s31 + $0x30] sm:$0xff]
    %v2077 = vld [vmem:[%s31 + $0x38] sm:$0xff]
    %v2078 = vld [vmem:[%s33] sm:$0x1]
    %v2080 = vlaneseq
    %v2081 = vshrl.u32 %v2080, 7
    %v2082 = vsub.s32 0, %v2081
    %v2083 = vrot.slane %v2078, %v2082
    %v2086 = vsel %vm1741, %v2069, 0
    %2088 = vmatprep.subr.mxu0 0.0
    %2089 = vmatpush1.msra.mxu0 0.0
    %2090 = vmatprep.subr.mxu0 0.0
    %2091 = vmatpush1.msra.mxu0 0.0
    %2092 = vmatprep.subr.mxu0 0.0
    %2093 = vmatpush1.msra.mxu0 0.0
    %2094 = vmatprep.subr.mxu0 0.0
    %2095 = vmatpush1.msra.mxu0 0.0
    %2096 = vmatprep.subr.mxu0 0.0
    %2097 = vmatpush1.msra.mxu0 0.0
    %2098 = vmatprep.subr.mxu0 0.0
    %2099 = vmatpush1.msra.mxu0 0.0
    %2100 = vmatprep.subr.mxu0 0.0
    %2101 = vmatpush1.msra.mxu0 0.0
    %2102 = vmatprep.subr.mxu0 0.0
    %2103 = vmatpush1.msra.mxu0 0.0
    %2104 = vmatprep.subr.mxu0 0.0
    %2105 = vmatpush1.msra.mxu0 %v2077
    %2106 = vmatprep.subr.mxu0 0.0
    %2107 = vmatpush1.msra.mxu0 %v2076
    %2108 = vmatprep.subr.mxu0 0.0
    %2109 = vmatpush1.msra.mxu0 %v2075
    %2110 = vmatprep.subr.mxu0 0.0
    %2111 = vmatpush1.msra.mxu0 %v2074
    %2112 = vmatprep.subr.mxu0 0.0
    %2113 = vmatpush1.msra.mxu0 %v2073
    %2114 = vmatprep.subr.mxu0 0.0
    %2115 = vmatpush1.msra.mxu0 %v2072
    %2116 = vmatprep.subr.mxu0 0.0
    %2117 = vmatpush1.msra.mxu0 %v2071
    %2118 = vmatprep.subr.mxu0 0.0
    %2119 = vmatpush1.msra.mxu0 %v2070
    %2120 = vmatprep.subr.mxu0 0.0
    %2121 = vmatpush2.msra.mxu0 0.0
    %2122 = vmatprep.subr.mxu0 0.0
    %2123 = vmatpush2.msra.mxu0 0.0
    %2124 = vmatprep.subr.mxu0 0.0
    %2125 = vmatpush2.msra.mxu0 0.0
    %2126 = vmatprep.subr.mxu0 0.0
    %2127 = vmatpush2.msra.mxu0 0.0
    %2128 = vmatprep.subr.mxu0 0.0
    %2129 = vmatpush2.msra.mxu0 0.0
    %2130 = vmatprep.subr.mxu0 0.0
    %2131 = vmatpush2.msra.mxu0 0.0
    %2132 = vmatprep.subr.mxu0 0.0
    %2133 = vmatpush2.msra.mxu0 0.0
    %2134 = vmatprep.subr.mxu0 0.0
    %2135 = vmatpush2.msra.mxu0 0.0
    %2136 = vmatprep.subr.mxu0 0.0
    %2137 = vmatpush2.msra.mxu0 0.0
    %2138 = vmatprep.subr.mxu0 0.0
    %2139 = vmatpush2.msra.mxu0 0.0
    %2140 = vmatprep.subr.mxu0 0.0
    %2141 = vmatpush2.msra.mxu0 0.0
    %2142 = vmatprep.subr.mxu0 0.0
    %2143 = vmatpush2.msra.mxu0 0.0
    %2144 = vmatprep.subr.mxu0 0.0
    %2145 = vmatpush2.msra.mxu0 0.0
    %2146 = vmatprep.subr.mxu0 0.0
    %2147 = vmatpush2.msra.mxu0 0.0
    %2148 = vmatprep.subr.mxu0 0.0
    %2149 = vmatpush2.msra.mxu0 0.0
    %2150 = vmatprep.subr.mxu0 0.0
    %2151 = vmatpush2.msra.mxu0 0.0
    %2152 = vmatprep.mubr.f32.mxu0 0.0
    %2153 = vmatmul.mubr.f32.gmra.mxu0 %v2086
    %v2154 = vpop.f32.mrf.mxu0
    %v2155 = vadd.f32 %v2083, %v2154
    %v2156 = vpop.f32.mrf.mxu0
    %2157 = vdwg.mxu0
    %v2158 = vmax.f32 %v2155, 0.0
    %v2159 = vld [vmem:[%s35] sm:$0xff]
    %v2160 = vld [vmem:[%s35 + $0x8] sm:$0xff]
    %v2161 = vld [vmem:[%s35 + $0x10] sm:$0xff]
    %v2162 = vld [vmem:[%s35 + $0x18] sm:$0xff]
    %v2163 = vld [vmem:[%s35 + $0x20] sm:$0xff]
    %v2164 = vld [vmem:[%s35 + $0x28] sm:$0xff]
    %v2165 = vld [vmem:[%s35 + $0x30] sm:$0xff]
    %v2166 = vld [vmem:[%s35 + $0x38] sm:$0xff]
    %v2167 = vld [vmem:[%s37] sm:$0x1]
    %v2169 = vlaneseq
    %v2170 = vshrl.u32 %v2169, 7
    %v2171 = vsub.s32 0, %v2170
    %v2172 = vrot.slane %v2167, %v2171
    %v2175 = vsel %vm1741, %v2158, 0
    %2177 = vmatprep.subr.mxu0 0.0
    %2178 = vmatpush1.msra.mxu0 0.0
    %2179 = vmatprep.subr.mxu0 0.0
    %2180 = vmatpush1.msra.mxu0 0.0
    %2181 = vmatprep.subr.mxu0 0.0
    %2182 = vmatpush1.msra.mxu0 0.0
    %2183 = vmatprep.subr.mxu0 0.0
    %2184 = vmatpush1.msra.mxu0 0.0
    %2185 = vmatprep.subr.mxu0 0.0
    %2186 = vmatpush1.msra.mxu0 0.0
    %2187 = vmatprep.subr.mxu0 0.0
    %2188 = vmatpush1.msra.mxu0 0.0
    %2189 = vmatprep.subr.mxu0 0.0
    %2190 = vmatpush1.msra.mxu0 0.0
    %2191 = vmatprep.subr.mxu0 0.0
    %2192 = vmatpush1.msra.mxu0 0.0
    %2193 = vmatprep.subr.mxu0 0.0
    %2194 = vmatpush1.msra.mxu0 %v2166
    %2195 = vmatprep.subr.mxu0 0.0
    %2196 = vmatpush1.msra.mxu0 %v2165
    %2197 = vmatprep.subr.mxu0 0.0
    %2198 = vmatpush1.msra.mxu0 %v2164
    %2199 = vmatprep.subr.mxu0 0.0
    %2200 = vmatpush1.msra.mxu0 %v2163
    %2201 = vmatprep.subr.mxu0 0.0
    %2202 = vmatpush1.msra.mxu0 %v2162
    %2203 = vmatprep.subr.mxu0 0.0
    %2204 = vmatpush1.msra.mxu0 %v2161
    %2205 = vmatprep.subr.mxu0 0.0
    %2206 = vmatpush1.msra.mxu0 %v2160
    %2207 = vmatprep.subr.mxu0 0.0
    %2208 = vmatpush1.msra.mxu0 %v2159
    %2209 = vmatprep.subr.mxu0 0.0
    %2210 = vmatpush2.msra.mxu0 0.0
    %2211 = vmatprep.subr.mxu0 0.0
    %2212 = vmatpush2.msra.mxu0 0.0
    %2213 = vmatprep.subr.mxu0 0.0
    %2214 = vmatpush2.msra.mxu0 0.0
    %2215 = vmatprep.subr.mxu0 0.0
    %2216 = vmatpush2.msra.mxu0 0.0
    %2217 = vmatprep.subr.mxu0 0.0
    %2218 = vmatpush2.msra.mxu0 0.0
    %2219 = vmatprep.subr.mxu0 0.0
    %2220 = vmatpush2.msra.mxu0 0.0
    %2221 = vmatprep.subr.mxu0 0.0
    %2222 = vmatpush2.msra.mxu0 0.0
    %2223 = vmatprep.subr.mxu0 0.0
    %2224 = vmatpush2.msra.mxu0 0.0
    %2225 = vmatprep.subr.mxu0 0.0
    %2226 = vmatpush2.msra.mxu0 0.0
    %2227 = vmatprep.subr.mxu0 0.0
    %2228 = vmatpush2.msra.mxu0 0.0
    %2229 = vmatprep.subr.mxu0 0.0
    %2230 = vmatpush2.msra.mxu0 0.0
    %2231 = vmatprep.subr.mxu0 0.0
    %2232 = vmatpush2.msra.mxu0 0.0
    %2233 = vmatprep.subr.mxu0 0.0
    %2234 = vmatpush2.msra.mxu0 0.0
    %2235 = vmatprep.subr.mxu0 0.0
    %2236 = vmatpush2.msra.mxu0 0.0
    %2237 = vmatprep.subr.mxu0 0.0
    %2238 = vmatpush2.msra.mxu0 0.0
    %2239 = vmatprep.subr.mxu0 0.0
    %2240 = vmatpush2.msra.mxu0 0.0
    %2241 = vmatprep.mubr.f32.mxu0 0.0
    %2242 = vmatmul.mubr.f32.gmra.mxu0 %v2175
    %v2243 = vpop.f32.mrf.mxu0
    %v2244 = vadd.f32 %v2172, %v2243
    %v2245 = vpop.f32.mrf.mxu0
    %2246 = vdwg.mxu0
    %v2247 = vadd.f32 %v2069, %v2244
    %v2248 = vld [vmem:[%s39] sm:$0x1]
    %v2249 = vld [vmem:[%s41] sm:$0x1]
    %v2250 = vsel %vm2041, %v2247, 0.0
    %2251 = vadd.xlane.f32.xlu0 %v2250
    %v2252 = vpop.xlane.xlu0 %2251
    %v2253 = vmul.f32 %v2252, %v2045
    %v2254 = vsub.f32 %v2247, %v2253
    %v2255 = vmul.f32 %v2254, %v2254
    %v2256 = vsel %vm2041, %v2255, 0.0
    %2257 = vadd.xlane.f32.xlu0 %v2256
    %v2258 = vpop.xlane.xlu0 %2257
    %v2259 = vmul.f32 %v2258, %v2045
    %v2260 = vadd.f32 %v2259, 1e-05
    %v2261 = vrsqrt.pop %v2260
    %v2262 = vmul.f32 %v2254, %v2261
    %v2264 = vlaneseq
    %v2265 = vshrl.u32 %v2264, 7
    %v2266 = vsub.s32 0, %v2265
    %v2267 = vrot.slane %v2248, %v2266
    %v2269 = vmul.f32 %v2262, %v2267
    %v2271 = vlaneseq
    %v2272 = vshrl.u32 %v2271, 7
    %v2273 = vsub.s32 0, %v2272
    %v2274 = vrot.slane %v2249, %v2273
    %v2276 = vadd.f32 %v2269, %v2274
    %v2277 = vld [vmem:[%s43] sm:$0xff]
    %v2278 = vld [vmem:[%s43 + $0x8] sm:$0xff]
    %v2279 = vld [vmem:[%s43 + $0x10] sm:$0xff]
    %v2280 = vld [vmem:[%s43 + $0x18] sm:$0xff]
    %v2281 = vld [vmem:[%s43 + $0x20] sm:$0xff]
    %v2282 = vld [vmem:[%s43 + $0x28] sm:$0xff]
    %v2283 = vld [vmem:[%s43 + $0x30] sm:$0xff]
    %v2284 = vld [vmem:[%s43 + $0x38] sm:$0xff]
    %v2285 = vld [vmem:[%s43 + $0x40] sm:$0xff]
    %v2286 = vld [vmem:[%s43 + $0x48] sm:$0xff]
    %v2287 = vld [vmem:[%s43 + $0x50] sm:$0xff]
    %v2288 = vld [vmem:[%s43 + $0x58] sm:$0xff]
    %v2289 = vld [vmem:[%s43 + $0x60] sm:$0xff]
    %v2290 = vld [vmem:[%s43 + $0x68] sm:$0xff]
    %v2291 = vld [vmem:[%s43 + $0x70] sm:$0xff]
    %v2292 = vld [vmem:[%s43 + $0x78] sm:$0xff]
    %v2293 = vld [vmem:[%s45] sm:$0x3]
    %v2295 = vlaneseq
    %v2296 = vshrl.u32 %v2295, 7
    %v2297 = vsub.s32 0, %v2296
    %v2298 = vrot.slane %v2293, %v2297
    %v2299 = vlaneseq
    %v2300 = vshrl.u32 %v2299, 7
    %v2301 = vsub.s32 1, %v2300
    %v2302 = vrot.slane %v2293, %v2301
    %v2306 = vsel %vm1741, %v2276, 0
    %2308 = vmatprep.subr.mxu0 0.0
    %2309 = vmatpush1.msra.mxu0 0.0
    %2310 = vmatprep.subr.mxu0 0.0
    %2311 = vmatpush1.msra.mxu0 0.0
    %2312 = vmatprep.subr.mxu0 0.0
    %2313 = vmatpush1.msra.mxu0 0.0
    %2314 = vmatprep.subr.mxu0 0.0
    %2315 = vmatpush1.msra.mxu0 0.0
    %2316 = vmatprep.subr.mxu0 0.0
    %2317 = vmatpush1.msra.mxu0 0.0
    %2318 = vmatprep.subr.mxu0 0.0
    %2319 = vmatpush1.msra.mxu0 0.0
    %2320 = vmatprep.subr.mxu0 0.0
    %2321 = vmatpush1.msra.mxu0 0.0
    %2322 = vmatprep.subr.mxu0 0.0
    %2323 = vmatpush1.msra.mxu0 0.0
    %2324 = vmatprep.subr.mxu0 %v2292
    %2325 = vmatpush1.msra.mxu0 %v2291
    %2326 = vmatprep.subr.mxu0 %v2290
    %2327 = vmatpush1.msra.mxu0 %v2289
    %2328 = vmatprep.subr.mxu0 %v2288
    %2329 = vmatpush1.msra.mxu0 %v2287
    %2330 = vmatprep.subr.mxu0 %v2286
    %2331 = vmatpush1.msra.mxu0 %v2285
    %2332 = vmatprep.subr.mxu0 %v2284
    %2333 = vmatpush1.msra.mxu0 %v2283
    %2334 = vmatprep.subr.mxu0 %v2282
    %2335 = vmatpush1.msra.mxu0 %v2281
    %2336 = vmatprep.subr.mxu0 %v2280
    %2337 = vmatpush1.msra.mxu0 %v2279
    %2338 = vmatprep.subr.mxu0 %v2278
    %2339 = vmatpush1.msra.mxu0 %v2277
    %2340 = vmatprep.subr.mxu0 0.0
    %2341 = vmatpush2.msra.mxu0 0.0
    %2342 = vmatprep.subr.mxu0 0.0
    %2343 = vmatpush2.msra.mxu0 0.0
    %2344 = vmatprep.subr.mxu0 0.0
    %2345 = vmatpush2.msra.mxu0 0.0
    %2346 = vmatprep.subr.mxu0 0.0
    %2347 = vmatpush2.msra.mxu0 0.0
    %2348 = vmatprep.subr.mxu0 0.0
    %2349 = vmatpush2.msra.mxu0 0.0
    %2350 = vmatprep.subr.mxu0 0.0
    %2351 = vmatpush2.msra.mxu0 0.0
    %2352 = vmatprep.subr.mxu0 0.0
    %2353 = vmatpush2.msra.mxu0 0.0
    %2354 = vmatprep.subr.mxu0 0.0
    %2355 = vmatpush2.msra.mxu0 0.0
    %2356 = vmatprep.subr.mxu0 0.0
    %2357 = vmatpush2.msra.mxu0 0.0
    %2358 = vmatprep.subr.mxu0 0.0
    %2359 = vmatpush2.msra.mxu0 0.0
    %2360 = vmatprep.subr.mxu0 0.0
    %2361 = vmatpush2.msra.mxu0 0.0
    %2362 = vmatprep.subr.mxu0 0.0
    %2363 = vmatpush2.msra.mxu0 0.0
    %2364 = vmatprep.subr.mxu0 0.0
    %2365 = vmatpush2.msra.mxu0 0.0
    %2366 = vmatprep.subr.mxu0 0.0
    %2367 = vmatpush2.msra.mxu0 0.0
    %2368 = vmatprep.subr.mxu0 0.0
    %2369 = vmatpush2.msra.mxu0 0.0
    %2370 = vmatprep.subr.mxu0 0.0
    %2371 = vmatpush2.msra.mxu0 0.0
    %2372 = vmatprep.mubr.f32.mxu0 0.0
    %2373 = vmatmul.mubr.f32.gmra.mxu0 %v2306
    %v2374 = vpop.f32.mrf.mxu0
    %v2375 = vadd.f32 %v2298, %v2374
    %v2376 = vpop.f32.mrf.mxu0
    %v2377 = vadd.f32 %v2302, %v2376
    %2378 = vdwg.mxu0
    %2380 = vrot.lane.b32.xlu0 %v2375, 64
    %v2381 = vpop.permute.xlu0 %2380
    %v2383 = vmul.f32 %v2375, %v2381
    %v2384 = vsel %vm1821, %v2383, 0.0
    %2385 = vadd.xlane.f32.xlu0 %v2384
    %v2386 = vpop.xlane.xlu0 %2385
    %v2387 = vmul.f32 %v2386, 0.125
    %v2388 = vrot.slane %v2375, 2
    %2389 = vrot.lane.b32.xlu0 %v2388, 64
    %v2390 = vpop.permute.xlu0 %2389
    %v2392 = vmul.f32 %v2375, %v2390
    %v2393 = vsel %vm1821, %v2392, 0.0
    %2394 = vadd.xlane.f32.xlu0 %v2393
    %v2395 = vpop.xlane.xlu0 %2394
    %v2396 = vmul.f32 %v2395, 0.125
    %v2397 = vrot.slane %v2375, 4
    %2398 = vrot.lane.b32.xlu0 %v2397, 64
    %v2399 = vpop.permute.xlu0 %2398
    %v2401 = vmul.f32 %v2375, %v2399
    %v2402 = vsel %vm1821, %v2401, 0.0
    %2403 = vadd.xlane.f32.xlu0 %v2402
    %v2404 = vpop.xlane.xlu0 %2403
    %v2405 = vmul.f32 %v2404, 0.125
    %v2406 = vmax.f32 %v2387, %v2396
    %v2407 = vmax.f32 %v2406, %v2405
    %v2408 = vsub.f32 %v2387, %v2407
    %v2409 = vmul.f32 %v2408, 1.442695
    %v2410 = vpow.pop %v2409
    %v2411 = vsub.f32 %v2396, %v2407
    %v2412 = vmul.f32 %v2411, 1.442695
    %v2413 = vpow.pop %v2412
    %v2414 = vsub.f32 %v2405, %v2407
    %v2415 = vmul.f32 %v2414, 1.442695
    %v2416 = vpow.pop %v2415
    %v2417 = vadd.f32 %v2410, %v2413
    %v2418 = vadd.f32 %v2417, %v2416
    %v2419 = vrcp.pop %v2418
    %v2420 = vmul.f32 %v2410, %v2419
    %v2421 = vmul.f32 %v2420, %v2377
    %v2422 = vmul.f32 %v2413, %v2419
    %v2424 = vrot.slane %v2377, 2
    %v2426 = vmul.f32 %v2422, %v2424
    %v2427 = vadd.f32 %v2421, %v2426
    %v2428 = vmul.f32 %v2416, %v2419
    %v2429 = vrot.slane %v2377, 4
    %v2431 = vmul.f32 %v2428, %v2429
    %v2432 = vadd.f32 %v2427, %v2431
    %v2433 = vrot.slane %v2375, 6
    %2434 = vrot.lane.b32.xlu0 %v2433, 64
    %v2435 = vpop.permute.xlu0 %2434
    %v2437 = vmul.f32 %v2375, %v2435
    %v2438 = vsel %vm1876, %v2437, 0.0
    %2439 = vadd.xlane.f32.xlu0 %v2438
    %v2440 = vpop.xlane.xlu0 %2439
    %v2441 = vmul.f32 %v2440, 0.125
    %v2442 = vsel %vm1876, %v2383, 0.0
    %2443 = vadd.xlane.f32.xlu0 %v2442
    %v2444 = vpop.xlane.xlu0 %2443
    %v2445 = vmul.f32 %v2444, 0.125
    %v2446 = vsel %vm1876, %v2392, 0.0
    %2447 = vadd.xlane.f32.xlu0 %v2446
    %v2448 = vpop.xlane.xlu0 %2447
    %v2449 = vmul.f32 %v2448, 0.125
    %v2450 = vmax.f32 %v2441, %v2445
    %v2451 = vmax.f32 %v2450, %v2449
    %v2452 = vsub.f32 %v2441, %v2451
    %v2453 = vmul.f32 %v2452, 1.442695
    %v2454 = vpow.pop %v2453
    %v2455 = vsub.f32 %v2445, %v2451
    %v2456 = vmul.f32 %v2455, 1.442695
    %v2457 = vpow.pop %v2456
    %v2458 = vsub.f32 %v2449, %v2451
    %v2459 = vmul.f32 %v2458, 1.442695
    %v2460 = vpow.pop %v2459
    %v2461 = vadd.f32 %v2454, %v2457
    %v2462 = vadd.f32 %v2461, %v2460
    %v2463 = vrcp.pop %v2462
    %v2464 = vmul.f32 %v2454, %v2463
    %v2465 = vrot.slane %v2377, 6
    %v2467 = vmul.f32 %v2464, %v2465
    %v2468 = vmul.f32 %v2457, %v2463
    %v2469 = vmul.f32 %v2468, %v2377
    %v2470 = vadd.f32 %v2467, %v2469
    %v2471 = vmul.f32 %v2460, %v2463
    %v2472 = vmul.f32 %v2471, %v2424
    %v2473 = vadd.f32 %v2470, %v2472
    %v2474 = vsel %vm1913, %v2401, 0.0
    %2475 = vadd.xlane.f32.xlu0 %v2474
    %v2476 = vpop.xlane.xlu0 %2475
    %v2477 = vmul.f32 %v2476, 0.125
    %v2478 = vsel %vm1913, %v2437, 0.0
    %2479 = vadd.xlane.f32.xlu0 %v2478
    %v2480 = vpop.xlane.xlu0 %2479
    %v2481 = vmul.f32 %v2480, 0.125
    %v2482 = vsel %vm1913, %v2383, 0.0
    %2483 = vadd.xlane.f32.xlu0 %v2482
    %v2484 = vpop.xlane.xlu0 %2483
    %v2485 = vmul.f32 %v2484, 0.125
    %v2486 = vmax.f32 %v2477, %v2481
    %v2487 = vmax.f32 %v2486, %v2485
    %v2488 = vsub.f32 %v2477, %v2487
    %v2489 = vmul.f32 %v2488, 1.442695
    %v2490 = vpow.pop %v2489
    %v2491 = vsub.f32 %v2481, %v2487
    %v2492 = vmul.f32 %v2491, 1.442695
    %v2493 = vpow.pop %v2492
    %v2494 = vsub.f32 %v2485, %v2487
    %v2495 = vmul.f32 %v2494, 1.442695
    %v2496 = vpow.pop %v2495
    %v2497 = vadd.f32 %v2490, %v2493
    %v2498 = vadd.f32 %v2497, %v2496
    %v2499 = vrcp.pop %v2498
    %v2500 = vmul.f32 %v2490, %v2499
    %v2501 = vmul.f32 %v2500, %v2429
    %v2502 = vmul.f32 %v2493, %v2499
    %v2503 = vmul.f32 %v2502, %v2465
    %v2504 = vadd.f32 %v2501, %v2503
    %v2505 = vmul.f32 %v2496, %v2499
    %v2506 = vmul.f32 %v2505, %v2377
    %v2507 = vadd.f32 %v2504, %v2506
    %v2508 = vsel %vm1709, %v2432, %v2473
    %v2509 = vsel %vm1711, %v2508, %v2507
    %v2510 = vld [vmem:[%s47] sm:$0xff]
    %v2511 = vld [vmem:[%s47 + $0x8] sm:$0xff]
    %v2512 = vld [vmem:[%s47 + $0x10] sm:$0xff]
    %v2513 = vld [vmem:[%s47 + $0x18] sm:$0xff]
    %v2514 = vld [vmem:[%s47 + $0x20] sm:$0xff]
    %v2515 = vld [vmem:[%s47 + $0x28] sm:$0xff]
    %v2516 = vld [vmem:[%s47 + $0x30] sm:$0xff]
    %v2517 = vld [vmem:[%s47 + $0x38] sm:$0xff]
    %v2518 = vld [vmem:[%s49] sm:$0x1]
    %v2520 = vlaneseq
    %v2521 = vshrl.u32 %v2520, 7
    %v2522 = vsub.s32 0, %v2521
    %v2523 = vrot.slane %v2518, %v2522
    %v2526 = vsel %vm1741, %v2509, 0
    %2528 = vmatprep.subr.mxu0 0.0
    %2529 = vmatpush1.msra.mxu0 0.0
    %2530 = vmatprep.subr.mxu0 0.0
    %2531 = vmatpush1.msra.mxu0 0.0
    %2532 = vmatprep.subr.mxu0 0.0
    %2533 = vmatpush1.msra.mxu0 0.0
    %2534 = vmatprep.subr.mxu0 0.0
    %2535 = vmatpush1.msra.mxu0 0.0
    %2536 = vmatprep.subr.mxu0 0.0
    %2537 = vmatpush1.msra.mxu0 0.0
    %2538 = vmatprep.subr.mxu0 0.0
    %2539 = vmatpush1.msra.mxu0 0.0
    %2540 = vmatprep.subr.mxu0 0.0
    %2541 = vmatpush1.msra.mxu0 0.0
    %2542 = vmatprep.subr.mxu0 0.0
    %2543 = vmatpush1.msra.mxu0 0.0
    %2544 = vmatprep.subr.mxu0 0.0
    %2545 = vmatpush1.msra.mxu0 %v2517
    %2546 = vmatprep.subr.mxu0 0.0
    %2547 = vmatpush1.msra.mxu0 %v2516
    %2548 = vmatprep.subr.mxu0 0.0
    %2549 = vmatpush1.msra.mxu0 %v2515
    %2550 = vmatprep.subr.mxu0 0.0
    %2551 = vmatpush1.msra.mxu0 %v2514
    %2552 = vmatprep.subr.mxu0 0.0
    %2553 = vmatpush1.msra.mxu0 %v2513
    %2554 = vmatprep.subr.mxu0 0.0
    %2555 = vmatpush1.msra.mxu0 %v2512
    %2556 = vmatprep.subr.mxu0 0.0
    %2557 = vmatpush1.msra.mxu0 %v2511
    %2558 = vmatprep.subr.mxu0 0.0
    %2559 = vmatpush1.msra.mxu0 %v2510
    %2560 = vmatprep.subr.mxu0 0.0
    %2561 = vmatpush2.msra.mxu0 0.0
    %2562 = vmatprep.subr.mxu0 0.0
    %2563 = vmatpush2.msra.mxu0 0.0
    %2564 = vmatprep.subr.mxu0 0.0
    %2565 = vmatpush2.msra.mxu0 0.0
    %2566 = vmatprep.subr.mxu0 0.0
    %2567 = vmatpush2.msra.mxu0 0.0
    %2568 = vmatprep.subr.mxu0 0.0
    %2569 = vmatpush2.msra.mxu0 0.0
    %2570 = vmatprep.subr.mxu0 0.0
    %2571 = vmatpush2.msra.mxu0 0.0
    %2572 = vmatprep.subr.mxu0 0.0
    %2573 = vmatpush2.msra.mxu0 0.0
    %2574 = vmatprep.subr.mxu0 0.0
    %2575 = vmatpush2.msra.mxu0 0.0
    %2576 = vmatprep.subr.mxu0 0.0
    %2577 = vmatpush2.msra.mxu0 0.0
    %2578 = vmatprep.subr.mxu0 0.0
    %2579 = vmatpush2.msra.mxu0 0.0
    %2580 = vmatprep.subr.mxu0 0.0
    %2581 = vmatpush2.msra.mxu0 0.0
    %2582 = vmatprep.subr.mxu0 0.0
    %2583 = vmatpush2.msra.mxu0 0.0
    %2584 = vmatprep.subr.mxu0 0.0
    %2585 = vmatpush2.msra.mxu0 0.0
    %2586 = vmatprep.subr.mxu0 0.0
    %2587 = vmatpush2.msra.mxu0 0.0
    %2588 = vmatprep.subr.mxu0 0.0
    %2589 = vmatpush2.msra.mxu0 0.0
    %2590 = vmatprep.subr.mxu0 0.0
    %2591 = vmatpush2.msra.mxu0 0.0
    %2592 = vmatprep.mubr.f32.mxu0 0.0
    %2593 = vmatmul.mubr.f32.gmra.mxu0 %v2526
    %v2594 = vpop.f32.mrf.mxu0
    %v2595 = vadd.f32 %v2523, %v2594
    %v2596 = vpop.f32.mrf.mxu0
    %2597 = vdwg.mxu0
    %v2598 = vadd.f32 %v2276, %v2595
    %v2599 = vld [vmem:[%s51] sm:$0x1]
    %v2600 = vld [vmem:[%s53] sm:$0x1]
    %v2601 = vsel %vm2041, %v2598, 0.0
    %2602 = vadd.xlane.f32.xlu0 %v2601
    %v2603 = vpop.xlane.xlu0 %2602
    %v2604 = vmul.f32 %v2603, %v2045
    %v2605 = vsub.f32 %v2598, %v2604
    %v2606 = vmul.f32 %v2605, %v2605
    %v2607 = vsel %vm2041, %v2606, 0.0
    %2608 = vadd.xlane.f32.xlu0 %v2607
    %v2609 = vpop.xlane.xlu0 %2608
    %v2610 = vmul.f32 %v2609, %v2045
    %v2611 = vadd.f32 %v2610, 1e-05
    %v2612 = vrsqrt.pop %v2611
    %v2613 = vmul.f32 %v2605, %v2612
    %v2615 = vlaneseq
    %v2616 = vshrl.u32 %v2615, 7
    %v2617 = vsub.s32 0, %v2616
    %v2618 = vrot.slane %v2599, %v2617
    %v2620 = vmul.f32 %v2613, %v2618
    %v2622 = vlaneseq
    %v2623 = vshrl.u32 %v2622, 7
    %v2624 = vsub.s32 0, %v2623
    %v2625 = vrot.slane %v2600, %v2624
    %v2627 = vadd.f32 %v2620, %v2625
    %v2628 = vld [vmem:[%s55] sm:$0xff]
    %v2629 = vld [vmem:[%s55 + $0x8] sm:$0xff]
    %v2630 = vld [vmem:[%s55 + $0x10] sm:$0xff]
    %v2631 = vld [vmem:[%s55 + $0x18] sm:$0xff]
    %v2632 = vld [vmem:[%s55 + $0x20] sm:$0xff]
    %v2633 = vld [vmem:[%s55 + $0x28] sm:$0xff]
    %v2634 = vld [vmem:[%s55 + $0x30] sm:$0xff]
    %v2635 = vld [vmem:[%s55 + $0x38] sm:$0xff]
    %v2636 = vld [vmem:[%s57] sm:$0x1]
    %v2638 = vlaneseq
    %v2639 = vshrl.u32 %v2638, 7
    %v2640 = vsub.s32 0, %v2639
    %v2641 = vrot.slane %v2636, %v2640
    %v2644 = vsel %vm1741, %v2627, 0
    %2646 = vmatprep.subr.mxu0 0.0
    %2647 = vmatpush1.msra.mxu0 0.0
    %2648 = vmatprep.subr.mxu0 0.0
    %2649 = vmatpush1.msra.mxu0 0.0
    %2650 = vmatprep.subr.mxu0 0.0
    %2651 = vmatpush1.msra.mxu0 0.0
    %2652 = vmatprep.subr.mxu0 0.0
    %2653 = vmatpush1.msra.mxu0 0.0
    %2654 = vmatprep.subr.mxu0 0.0
    %2655 = vmatpush1.msra.mxu0 0.0
    %2656 = vmatprep.subr.mxu0 0.0
    %2657 = vmatpush1.msra.mxu0 0.0
    %2658 = vmatprep.subr.mxu0 0.0
    %2659 = vmatpush1.msra.mxu0 0.0
    %2660 = vmatprep.subr.mxu0 0.0
    %2661 = vmatpush1.msra.mxu0 0.0
    %2662 = vmatprep.subr.mxu0 0.0
    %2663 = vmatpush1.msra.mxu0 %v2635
    %2664 = vmatprep.subr.mxu0 0.0
    %2665 = vmatpush1.msra.mxu0 %v2634
    %2666 = vmatprep.subr.mxu0 0.0
    %2667 = vmatpush1.msra.mxu0 %v2633
    %2668 = vmatprep.subr.mxu0 0.0
    %2669 = vmatpush1.msra.mxu0 %v2632
    %2670 = vmatprep.subr.mxu0 0.0
    %2671 = vmatpush1.msra.mxu0 %v2631
    %2672 = vmatprep.subr.mxu0 0.0
    %2673 = vmatpush1.msra.mxu0 %v2630
    %2674 = vmatprep.subr.mxu0 0.0
    %2675 = vmatpush1.msra.mxu0 %v2629
    %2676 = vmatprep.subr.mxu0 0.0
    %2677 = vmatpush1.msra.mxu0 %v2628
    %2678 = vmatprep.subr.mxu0 0.0
    %2679 = vmatpush2.msra.mxu0 0.0
    %2680 = vmatprep.subr.mxu0 0.0
    %2681 = vmatpush2.msra.mxu0 0.0
    %2682 = vmatprep.subr.mxu0 0.0
    %2683 = vmatpush2.msra.mxu0 0.0
    %2684 = vmatprep.subr.mxu0 0.0
    %2685 = vmatpush2.msra.mxu0 0.0
    %2686 = vmatprep.subr.mxu0 0.0
    %2687 = vmatpush2.msra.mxu0 0.0
    %2688 = vmatprep.subr.mxu0 0.0
    %2689 = vmatpush2.msra.mxu0 0.0
    %2690 = vmatprep.subr.mxu0 0.0
    %2691 = vmatpush2.msra.mxu0 0.0
    %2692 = vmatprep.subr.mxu0 0.0
    %2693 = vmatpush2.msra.mxu0 0.0
    %2694 = vmatprep.subr.mxu0 0.0
    %2695 = vmatpush2.msra.mxu0 0.0
    %2696 = vmatprep.subr.mxu0 0.0
    %2697 = vmatpush2.msra.mxu0 0.0
    %2698 = vmatprep.subr.mxu0 0.0
    %2699 = vmatpush2.msra.mxu0 0.0
    %2700 = vmatprep.subr.mxu0 0.0
    %2701 = vmatpush2.msra.mxu0 0.0
    %2702 = vmatprep.subr.mxu0 0.0
    %2703 = vmatpush2.msra.mxu0 0.0
    %2704 = vmatprep.subr.mxu0 0.0
    %2705 = vmatpush2.msra.mxu0 0.0
    %2706 = vmatprep.subr.mxu0 0.0
    %2707 = vmatpush2.msra.mxu0 0.0
    %2708 = vmatprep.subr.mxu0 0.0
    %2709 = vmatpush2.msra.mxu0 0.0
    %2710 = vmatprep.mubr.f32.mxu0 0.0
    %2711 = vmatmul.mubr.f32.gmra.mxu0 %v2644
    %v2712 = vpop.f32.mrf.mxu0
    %v2713 = vadd.f32 %v2641, %v2712
    %v2714 = vpop.f32.mrf.mxu0
    %2715 = vdwg.mxu0
    %v2716 = vmax.f32 %v2713, 0.0
    %v2717 = vld [vmem:[%s59] sm:$0xff]
    %v2718 = vld [vmem:[%s59 + $0x8] sm:$0xff]
    %v2719 = vld [vmem:[%s59 + $0x10] sm:$0xff]
    %v2720 = vld [vmem:[%s59 + $0x18] sm:$0xff]
    %v2721 = vld [vmem:[%s59 + $0x20] sm:$0xff]
    %v2722 = vld [vmem:[%s59 + $0x28] sm:$0xff]
    %v2723 = vld [vmem:[%s59 + $0x30] sm:$0xff]
    %v2724 = vld [vmem:[%s59 + $0x38] sm:$0xff]
    %v2725 = vld [vmem:[%s61] sm:$0x1]
    %v2727 = vlaneseq
    %v2728 = vshrl.u32 %v2727, 7
    %v2729 = vsub.s32 0, %v2728
    %v2730 = vrot.slane %v2725, %v2729
    %v2733 = vsel %vm1741, %v2716, 0
    %2735 = vmatprep.subr.mxu0 0.0
    %2736 = vmatpush1.msra.mxu0 0.0
    %2737 = vmatprep.subr.mxu0 0.0
    %2738 = vmatpush1.msra.mxu0 0.0
    %2739 = vmatprep.subr.mxu0 0.0
    %2740 = vmatpush1.msra.mxu0 0.0
    %2741 = vmatprep.subr.mxu0 0.0
    %2742 = vmatpush1.msra.mxu0 0.0
    %2743 = vmatprep.subr.mxu0 0.0
    %2744 = vmatpush1.msra.mxu0 0.0
    %2745 = vmatprep.subr.mxu0 0.0
    %2746 = vmatpush1.msra.mxu0 0.0
    %2747 = vmatprep.subr.mxu0 0.0
    %2748 = vmatpush1.msra.mxu0 0.0
    %2749 = vmatprep.subr.mxu0 0.0
    %2750 = vmatpush1.msra.mxu0 0.0
    %2751 = vmatprep.subr.mxu0 0.0
    %2752 = vmatpush1.msra.mxu0 %v2724
    %2753 = vmatprep.subr.mxu0 0.0
    %2754 = vmatpush1.msra.mxu0 %v2723
    %2755 = vmatprep.subr.mxu0 0.0
    %2756 = vmatpush1.msra.mxu0 %v2722
    %2757 = vmatprep.subr.mxu0 0.0
    %2758 = vmatpush1.msra.mxu0 %v2721
    %2759 = vmatprep.subr.mxu0 0.0
    %2760 = vmatpush1.msra.mxu0 %v2720
    %2761 = vmatprep.subr.mxu0 0.0
    %2762 = vmatpush1.msra.mxu0 %v2719
    %2763 = vmatprep.subr.mxu0 0.0
    %2764 = vmatpush1.msra.mxu0 %v2718
    %2765 = vmatprep.subr.mxu0 0.0
    %2766 = vmatpush1.msra.mxu0 %v2717
    %2767 = vmatprep.subr.mxu0 0.0
    %2768 = vmatpush2.msra.mxu0 0.0
    %2769 = vmatprep.subr.mxu0 0.0
    %2770 = vmatpush2.msra.mxu0 0.0
    %2771 = vmatprep.subr.mxu0 0.0
    %2772 = vmatpush2.msra.mxu0 0.0
    %2773 = vmatprep.subr.mxu0 0.0
    %2774 = vmatpush2.msra.mxu0 0.0
    %2775 = vmatprep.subr.mxu0 0.0
    %2776 = vmatpush2.msra.mxu0 0.0
    %2777 = vmatprep.subr.mxu0 0.0
    %2778 = vmatpush2.msra.mxu0 0.0
    %2779 = vmatprep.subr.mxu0 0.0
    %2780 = vmatpush2.msra.mxu0 0.0
    %2781 = vmatprep.subr.mxu0 0.0
    %2782 = vmatpush2.msra.mxu0 0.0
    %2783 = vmatprep.subr.mxu0 0.0
    %2784 = vmatpush2.msra.mxu0 0.0
    %2785 = vmatprep.subr.mxu0 0.0
    %2786 = vmatpush2.msra.mxu0 0.0
    %2787 = vmatprep.subr.mxu0 0.0
    %2788 = vmatpush2.msra.mxu0 0.0
    %2789 = vmatprep.subr.mxu0 0.0
    %2790 = vmatpush2.msra.mxu0 0.0
    %2791 = vmatprep.subr.mxu0 0.0
    %2792 = vmatpush2.msra.mxu0 0.0
    %2793 = vmatprep.subr.mxu0 0.0
    %2794 = vmatpush2.msra.mxu0 0.0
    %2795 = vmatprep.subr.mxu0 0.0
    %2796 = vmatpush2.msra.mxu0 0.0
    %2797 = vmatprep.subr.mxu0 0.0
    %2798 = vmatpush2.msra.mxu0 0.0
    %2799 = vmatprep.mubr.f32.mxu0 0.0
    %2800 = vmatmul.mubr.f32.gmra.mxu0 %v2733
    %v2801 = vpop.f32.mrf.mxu0
    %v2802 = vadd.f32 %v2730, %v2801
    %v2803 = vpop.f32.mrf.mxu0
    %2804 = vdwg.mxu0
    %v2805 = vadd.f32 %v2627, %v2802
    %v2806 = vld [vmem:[%s63] sm:$0x1]
    %v2807 = vld [vmem:[%s65] sm:$0x1]
    %v2808 = vsel %vm2041, %v2805, 0.0
    %2809 = vadd.xlane.f32.xlu0 %v2808
    %v2810 = vpop.xlane.xlu0 %2809
    %v2811 = vmul.f32 %v2810, %v2045
    %v2812 = vsub.f32 %v2805, %v2811
    %v2813 = vmul.f32 %v2812, %v2812
    %v2814 = vsel %vm2041, %v2813, 0.0
    %2815 = vadd.xlane.f32.xlu0 %v2814
    %v2816 = vpop.xlane.xlu0 %2815
    %v2817 = vmul.f32 %v2816, %v2045
    %v2818 = vadd.f32 %v2817, 1e-05
    %v2819 = vrsqrt.pop %v2818
    %v2820 = vmul.f32 %v2812, %v2819
    %v2822 = vlaneseq
    %v2823 = vshrl.u32 %v2822, 7
    %v2824 = vsub.s32 0, %v2823
    %v2825 = vrot.slane %v2806, %v2824
    %v2827 = vmul.f32 %v2820, %v2825
    %v2829 = vlaneseq
    %v2830 = vshrl.u32 %v2829, 7
    %v2831 = vsub.s32 0, %v2830
    %v2832 = vrot.slane %v2807, %v2831
    %v2834 = vadd.f32 %v2827, %v2832
    %v2836 = vrot.slane %v2834, 2
    %2837 = vrot.lane.b32.xlu0 %v2836, 64
    %v2838 = vpop.permute.xlu0 %2837
    %v2840 = vrot.slane %v2834, 4
    %v2841 = vsel %vm1741, %v2834, %v2838
    %v2843 = vcombine.low %v2841, %v2840
    %v2845 = vunpack.c.l.s4 1983009808
    %v2846 = vunpack.c.0.s8 %v2845
    %v2847 = vlaneseq
    %v2848 = vshrl.u32 %v2847, 7
    %v2849 = vsub.s32 %v2846, %v2848
    %v2850 = vrot.slane %v2843, %v2849
    %vm2852 = vmor %vm1876, %vm1709
    %2853 = vst.msk [vmem:[#allocation2] sm:$0xf] %vm2852, %v2850
    // Predicated region
    $region134: #{nature_att_encoder_forward.7} parent=1 // pred_check
      _
    $region135: #{nature_att_encoder_forward.7} parent=1 // pred_check_branch
      %2855 = sbr.rel (0) target = $region137
    $region136: #{nature_att_encoder_forward.7} parent=1 // pred_region
      %s2857 = ssub.s32 64, 64
      %2858 = vsyncadd [#allocation3], %s2857
      %s2860 = sshll.u32 [#allocation2], 4
      %s2861 = int_to_ptr.vmem [resolvable:$true] %s2860
      %2863 = dma.vmem_to_hbm [thread:$0]  %s2861, 64, %s67, [#allocation3]
    $region137: #{nature_att_encoder_forward.7} parent=1 // pred_fallthru
      _
    // Predicated region
    $region138: #{nature_att_encoder_forward.7} parent=1 // pred_check
      _
    $region139: #{nature_att_encoder_forward.7} parent=1 // pred_check_branch
      %2865 = sbr.rel (0) target = $region141
    $region140: #{nature_att_encoder_forward.7} parent=1 // pred_region
      %2866 = dma.done [#allocation3], 64
    $region141: #{nature_att_encoder_forward.7} parent=1 // pred_fallthru
      _
    %2867 = vsyncpa [#allocation3], 1

</llo_original>
